<compile_context>
chip_gen: v5e
topology: v5e:2x2
jax: 0.10.0
libtpu: 0.0.40
codegen_flags: <defaults>
</compile_context>

<pallas_src>
import numpy as np

import jax
import jax.numpy as jnp
from jax.experimental import pallas as pl
from jax.experimental.pallas import tpu as pltpu

MOTION_SCALE = 0.01

# -----------------------------------------------------------------------------
# MotionNet config  (seq_len=3, 16x16 images, flow_mode='scene',
#                    input_mode='multi_frame', num_ext_channels=1,
#                    ext_type='pixelwise', pose_layers=3, dropout=0.0)
# -----------------------------------------------------------------------------
SEQ_LEN = 3
HEIGHT = 16
WIDTH = 16
FLOW_MODE = "scene"
INPUT_MODE = "multi_frame"
NUM_EXT_CHANNELS = 1
EXT_TYPE = "pixelwise"
OUT_CHANNELS = 2 if FLOW_MODE == "opt" else 3
NUM_INPUTS = SEQ_LEN                      # multi_frame
NUM_OUTPUTS = SEQ_LEN - 1                 # multi_frame
POSE_FMS = 256                            # PoseDecoder_v2 default num_fms
ENC_CHANNELS = (16, 32)                   # synthetic encoder pyramid (num_ch_skipt)
BOTTLENECK_DIM = ENC_CHANNELS[-1]
OF_OUT_C = (OUT_CHANNELS + NUM_EXT_CHANNELS) * NUM_OUTPUTS      # 8
FLOW_SCALE = MOTION_SCALE if FLOW_MODE == "scene" else (0.1 if FLOW_MODE == "opt" else 1.0)
POSE_OUT = 6 * NUM_OUTPUTS                # 12 pose params per sample
HEAD_LANES = 128                          # lane-dense packed head output width
FUSED_LANES = 384                         # 256 (pose conv1) + 8 (of2) + 2 (intr), padded to 3*128

# TODO(synk): the real backbone (MultiInputResNetEncoder) and of-decoder
# (CustomDecoder) are not defined in the provided source; a small synthetic
# pool+1x1-conv pyramid / per-level 1x1-conv decoder stands in for them.
# IntrinsicsDecoder_v2, PoseDecoder_v2 and the MotionNet flow post-processing
# are implemented faithfully.
# TODO(synk): if the first-iteration wp2 DMA (~1.2 MB bf16) ever shows up on the
# critical path (v6e), block it over the 9 taps with pl.Buffered pipelining.


def _softplus(y):
    # numerically-stable softplus (matches nn.Softplus up to ~1e-9); kept in f32
    return jnp.maximum(y, 0.0) + jnp.log1p(jnp.exp(-jnp.abs(y)))


def _dot(a, b):
    return jnp.dot(a, b, preferred_element_type=jnp.float32)


# -----------------------------------------------------------------------------
# Fused kernel: encoder + of-decoder + pose decoder + intrinsics, per batch block
# -----------------------------------------------------------------------------
def _motion_net_kernel(
    xw_ref,             # [n1, 4*Cin]  f32   window-im2col'd input (2x2 pool folded into we1)
    p2_ref,             # [n2, n1]     bf16  2x2 avg-pool matrix, level 2 (per batch block)
    g_ref,              # [nb, n2]     f32   per-sample global-mean matrix
    s_ref,              # [9*n2, n2]   bf16  3x3-conv tap shift matrices (zero padding)
    we1_ref, be1_ref,   # [4*Cin,16] bf16, [1,16] f32   level-1 pool+1x1-conv (fused)
    wo1_ref, bo1_ref,   # [16,8]  bf16, [1,8]  f32      of-dec level 1 (flow cols pre-scaled)
    we2_ref, be2_ref,   # [16,32] bf16, [1,32] f32      level-2 1x1 conv
    wf_ref,  bf_ref,    # [32,384] bf16, [1,384] f32    fused [pose conv1 | of-dec2 | intr 1x1]
    wp2_ref, bp2_ref,   # [9*256,256] bf16, [1,256] f32 pose 3x3-conv taps
    wh_ref,  bh_ref,    # [258,128] bf16, [1,128] f32   fused lane-dense head (pose*MS | intr)
    of1_ref,            # out: [n1, 8]  f32
    of2_ref,            # out: [n2, 8]  f32
    head_ref,           # out: [nb, 128] f32  cols 0:12 pose*MOTION_SCALE, 12:14 softplus(fx,fy)
    sh_ref,             # scratch: [9*n2, 256] f32
    acc_ref,            # scratch: [n2, 256]   f32
):
    # ---- encoder level 1: 2x2 avg-pool folded into the 1x1-conv weight (one matmul) ----
    f1 = jnp.maximum(_dot(xw_ref[...], we1_ref[...]) + be1_ref[...], 0.0)       # [n1, 16]

    # ---- of-decoder level 1 (flow scaling folded into weights/bias) ----
    of1_ref[...] = _dot(f1, wo1_ref[...]) + bo1_ref[...]                        # [n1, 8]

    # ---- encoder level 2 (bottleneck) ----
    xp2 = _dot(p2_ref[...], f1)                                                 # [n2, 16]
    f2 = jnp.maximum(_dot(xp2, we2_ref[...]) + be2_ref[...], 0.0)               # [n2, 32]

    # ---- fused consumers of f2: [pose conv1 | of-dec level 2 | intrinsics 1x1] ----
    fused = _dot(f2, wf_ref[...]) + bf_ref[...]                                 # [n2, 384]
    h1 = jnp.maximum(fused[:, :POSE_FMS], 0.0)                                  # [n2, 256]
    of2_ref[...] = fused[:, POSE_FMS:POSE_FMS + OF_OUT_C]                       # [n2, 8]
    intr_pre = fused[:, POSE_FMS + OF_OUT_C:POSE_FMS + OF_OUT_C + 2]            # [n2, 2]

    # ---- pose 3x3 conv: shift matmul hoisted out of the tap loop ----
    n2 = f2.shape[0]
    sh_ref[...] = _dot(s_ref[...], h1)                                          # [9*n2, 256]
    acc_ref[...] = jnp.zeros_like(acc_ref)

    def tap_body(t, carry):
        r0 = pl.multiple_of(t * n2, 16)
        c0 = pl.multiple_of(t * POSE_FMS, POSE_FMS)
        acc_ref[...] += _dot(sh_ref[pl.ds(r0, n2), :], wp2_ref[pl.ds(c0, POSE_FMS), :])
        return carry

    jax.lax.fori_loop(0, 9, tap_body, 0, unroll=True)
    h2 = jnp.maximum(acc_ref[...] + bp2_ref[...], 0.0)                          # [n2, 256]

    # ---- global mean pool (commutes with the final 1x1 convs) + fused lane-dense head ----
    pooled = _dot(g_ref[...], jnp.concatenate([h2, intr_pre], axis=1))          # [nb, 258]
    head = _dot(pooled, wh_ref[...]) + bh_ref[...]                              # [nb, 128]
    lane = jax.lax.broadcasted_iota(jnp.int32, (1, HEAD_LANES), 1)
    is_intr = (lane >= POSE_OUT) & (lane < POSE_OUT + 2)
    head_ref[...] = jnp.where(is_intr, _softplus(head), head)                   # single store


# -----------------------------------------------------------------------------
# Constant structural matrices (built once at trace time with numpy, per batch block)
# -----------------------------------------------------------------------------
def _pool_matrix(b, h, w):
    """Rows of [b*h*w, c] -> rows of [b*(h/2)*(w/2), c]: 2x2 average pooling."""
    hh, wh = h // 2, w // 2
    m = np.zeros((b * hh * wh, b * h * w), np.float32)
    for bi in range(b):
        for y in range(hh):
            for x in range(wh):
                ro = (bi * hh + y) * wh + x
                for dy in range(2):
                    for dx in range(2):
                        ri = (bi * h + 2 * y + dy) * w + 2 * x + dx
                        m[ro, ri] = 0.25
    return m


def _global_mean_matrix(b, n):
    """[b, b*n]: adaptive_avg_pool2d((1,1)) over the n spatial rows of each sample."""
    m = np.zeros((b, b * n), np.float32)
    for bi in range(b):
        m[bi, bi * n:(bi + 1) * n] = 1.0 / n
    return m


def _shift_matrices(b, h, w):
    """[9*b*h*w, b*h*w]: per-tap row-shift matrices for a 3x3 conv with zero padding=1."""
    n = b * h * w
    m = np.zeros((9, n, n), np.float32)
    taps = [(dy, dx) for dy in range(3) for dx in range(3)]
    for t, (dy, dx) in enumerate(taps):
        for bi in range(b):
            for y in range(h):
                for x in range(w):
                    sy, sx = y + dy - 1, x + dx - 1
                    if 0 <= sy < h and 0 <= sx < w:
                        ro = (bi * h + y) * w + x
                        ri = (bi * h + sy) * w + sx
                        m[t, ro, ri] = 1.0
    return m.reshape(9 * n, n)


# -----------------------------------------------------------------------------
# Plain-JAX glue: tiny per-matrix math (outside the kernel, as in the original)
# -----------------------------------------------------------------------------
def _axis_rotation(axis, angle):
    c, s = jnp.cos(angle), jnp.sin(angle)
    one, zero = jnp.ones_like(angle), jnp.zeros_like(angle)
    if axis == "X":
        flat = (one, zero, zero, zero, c, -s, zero, s, c)
    elif axis == "Y":
        flat = (c, zero, s, zero, one, zero, -s, zero, c)
    else:  # Z
        flat = (c, -s, zero, s, c, zero, zero, zero, one)
    return jnp.stack(flat, axis=-1).reshape(angle.shape + (3, 3))


def euler_angles_to_matrix_xyz(euler):
    """pytorch3d euler_angles_to_matrix, convention='XYZ' (Rx @ Ry @ Rz)."""
    Rx = _axis_rotation("X", euler[..., 0])
    Ry = _axis_rotation("Y", euler[..., 1])
    Rz = _axis_rotation("Z", euler[..., 2])
    return Rx @ Ry @ Rz


# -----------------------------------------------------------------------------
# MotionNet forward
# -----------------------------------------------------------------------------
def motion_net_forward(params, inputs_nchw):
    x = jnp.transpose(inputs_nchw, (0, 2, 3, 1)).astype(jnp.float32)   # NCHW -> NHWC
    B, H, W, Cin = x.shape
    assert H % 4 == 0 and W % 4 == 0
    H1, W1 = H // 2, W // 2
    H2, W2 = H1 // 2, W1 // 2

    # batch block: 8 samples/step when possible (level-2 rows = 128), else whole batch
    BBLK = 8 if B % 8 == 0 else B
    nsteps = B // BBLK
    n1, n2 = BBLK * H1 * W1, BBLK * H2 * W2

    f32, bf16 = jnp.float32, jnp.bfloat16

    # 2x2-window im2col of the input (pure layout) so level-1 pool+conv fuse into one matmul
    xw = (x.reshape(B, H1, 2, W1, 2, Cin)
            .transpose(0, 1, 3, 2, 4, 5)
            .reshape(B * H1 * W1, 4 * Cin))

    # per-batch-block structural constants (footprint independent of full B);
    # their entries (0.25, 1/16, 0/1) are exact in bf16
    p2 = jnp.asarray(_pool_matrix(BBLK, H1, W1), dtype=bf16)      # [n2, n1]
    g = jnp.asarray(_global_mean_matrix(BBLK, H2 * W2))           # [BBLK, n2]  f32, tiny
    s = jnp.asarray(_shift_matrices(BBLK, H2, W2), dtype=bf16)    # [9*n2, n2]

    (we1, be1), (we2, be2) = params["enc"]
    (wo1, bo1), (wo2, bo2) = params["of_dec"]     # flow columns pre-scaled (see init)
    pp, ip = params["pose"], params["intr"]

    def _row(v):
        return v.reshape(1, -1).astype(f32)

    # level-1: fold the 2x2 average pool into the conv weight (4 window taps)
    we1_win = (0.25 * jnp.concatenate([we1] * 4, axis=0)).astype(bf16)   # [4*Cin, 16]

    # fused f2-head weight: [pose conv1 | of-dec level2 | intrinsics 1x1], padded to 384 lanes
    wf = jnp.concatenate([pp["w1"], wo2, ip["w"]], axis=1)               # [32, 266]
    wf = jnp.pad(wf, ((0, 0), (0, FUSED_LANES - wf.shape[1]))).astype(bf16)
    bfused = jnp.concatenate([pp["b1"], bo2, jnp.zeros((2,), f32)])      # intr bias applied post-pool
    bfused = jnp.pad(bfused, (0, FUSED_LANES - bfused.shape[0])).reshape(1, -1).astype(f32)

    # fused lane-dense head: cols 0:12 pose final 1x1 (MOTION_SCALE folded),
    # cols 12:14 pass-through of pooled intrinsics pre-activation (+ bias, softplus in-kernel)
    wh = jnp.zeros((POSE_FMS + 2, HEAD_LANES), f32)
    wh = wh.at[:POSE_FMS, :POSE_OUT].set(pp["w3"] * MOTION_SCALE)
    wh = wh.at[POSE_FMS, POSE_OUT].set(1.0)
    wh = wh.at[POSE_FMS + 1, POSE_OUT + 1].set(1.0)
    wh = wh.astype(bf16)
    bh = jnp.zeros((HEAD_LANES,), f32)
    bh = bh.at[:POSE_OUT].set(pp["b3"] * MOTION_SCALE)
    bh = bh.at[POSE_OUT:POSE_OUT + 2].set(ip["b"])
    bh = bh.reshape(1, -1)

    kernel_args = (
        xw, p2, g, s,
        we1_win, _row(be1),
        wo1.astype(bf16), _row(bo1),
        we2.astype(bf16), _row(be2),
        wf, bfused,
        pp["w2"].astype(bf16), _row(pp["b2"]),
        wh, bh,
    )

    const = lambda i: (0, 0)          # constants: loaded once, stay VMEM-resident across steps
    in_specs = [
        pl.BlockSpec((n1, 4 * Cin), lambda i: (i, 0)),
        pl.BlockSpec(p2.shape, const),
        pl.BlockSpec(g.shape, const),
        pl.BlockSpec(s.shape, const),
    ] + [pl.BlockSpec(a.shape, const) for a in kernel_args[4:]]

    of1_flat, of2_flat, head = pl.pallas_call(
        _motion_net_kernel,
        grid=(nsteps,),
        out_shape=(
            jax.ShapeDtypeStruct((B * H1 * W1, OF_OUT_C), f32),
            jax.ShapeDtypeStruct((B * H2 * W2, OF_OUT_C), f32),
            jax.ShapeDtypeStruct((B, HEAD_LANES), f32),
        ),
        in_specs=in_specs,
        out_specs=(
            pl.BlockSpec((n1, OF_OUT_C), lambda i: (i, 0)),
            pl.BlockSpec((n2, OF_OUT_C), lambda i: (i, 0)),
            pl.BlockSpec((BBLK, HEAD_LANES), lambda i: (i, 0)),
        ),
        scratch_shapes=[
            pltpu.VMEM((9 * n2, POSE_FMS), f32),   # hoisted tap-shift products
            pltpu.VMEM((n2, POSE_FMS), f32),       # pose 3x3-conv accumulator
        ],
        compiler_params=pltpu.CompilerParams(
            dimension_semantics=("parallel",),      # batch blocks split across TCs on v7x
            # footprint ~5 MB at BBLK=8 (bf16 weights, double-buffered blocks); 32 MiB is
            # safe on v5e/v6e/v7x -- re-derive if block sizes / pipelining change.
            vmem_limit_bytes=32 * 1024 * 1024,
        ),
    )(*kernel_args)

    # --- of-decoder outputs -> per-scale flow / uncertainty pyramids (NCHW) ---
    ofs_pyr, exts_pyr = [], []
    for o_flat, (h, w) in ((of1_flat, (H1, W1)), (of2_flat, (H2, W2))):
        o = o_flat.reshape(B, h, w, OF_OUT_C)
        o_nchw = jnp.transpose(o, (0, 3, 1, 2))                         # [b, C, h, w]
        o_r = o_nchw.reshape(B * (NUM_INPUTS - 1),
                             OUT_CHANNELS + NUM_EXT_CHANNELS, h, w)
        ofs_pyr.append(o_r[:, :OUT_CHANNELS])   # flow scaling folded into weights
        exts_pyr.append(o_r[:, OUT_CHANNELS:])  # ext_type == 'pixelwise'

    # --- pose head -> T [B*num_src, 4, 4] ---
    pose_vec = head[:, :POSE_OUT]                                       # [B, 12] (* MOTION_SCALE)
    outs = pose_vec.reshape(B * NUM_OUTPUTS, 6)
    R = euler_angles_to_matrix_xyz(outs[:, :3])
    t = outs[:, 3:].reshape(-1, 3, 1)
    T34 = jnp.concatenate([R, t], axis=2)
    last_row = jnp.zeros((B * NUM_OUTPUTS, 1, 4), jnp.float32).at[:, 0, 3].set(1.0)
    T = jnp.concatenate([T34, last_row], axis=1)

    # --- intrinsics head -> K [B, 4, 4] ---
    intr = head[:, POSE_OUT:POSE_OUT + 2]                               # softplus(fx, fy)
    fx, fy = intr[:, 0], intr[:, 1]
    K = jnp.zeros((B, 4, 4), jnp.float32)
    K = K.at[:, 0, 0].set(fx * WIDTH)
    K = K.at[:, 0, 2].set(0.49 * WIDTH)
    K = K.at[:, 1, 1].set(fy * HEIGHT)
    K = K.at[:, 1, 2].set(0.49 * HEIGHT)
    K = K.at[:, 2, 2].set(1.0)
    K = K.at[:, 3, 3].set(1.0)

    if NUM_EXT_CHANNELS:
        return ofs_pyr, exts_pyr, T, K
    return ofs_pyr, None, T, K


# -----------------------------------------------------------------------------
# Deterministic parameter init (synthetic; shapes follow the module __init__)
# -----------------------------------------------------------------------------
def _fold_flow_scale(w, b):
    """Fold MotionNet's `flows = flows * MOTION_SCALE` into the of-decoder 1x1 conv.

    Output channel layout is frame-major [(flow_x, flow_y, flow_z, ext) * num_outputs];
    only the flow columns are scaled, the uncertainty columns are left untouched.
    """
    col_scale = np.ones((OF_OUT_C,), np.float32)
    grp = OUT_CHANNELS + NUM_EXT_CHANNELS
    for gi in range(NUM_OUTPUTS):
        col_scale[gi * grp:gi * grp + OUT_CHANNELS] = FLOW_SCALE
    cs = jnp.asarray(col_scale)
    return w * cs[None, :], b * cs


def init_params(key):
    ks = iter(jax.random.split(key, 32))

    def w(shape, sd=0.05):
        return sd * jax.random.normal(next(ks), shape, jnp.float32)

    in_ch = 3 * SEQ_LEN
    enc = []
    prev = in_ch
    for c in ENC_CHANNELS:
        enc.append((w((prev, c)), w((c,))))
        prev = c

    of_dec = []
    for c in ENC_CHANNELS:
        of_dec.append(_fold_flow_scale(w((c, OF_OUT_C)), w((OF_OUT_C,))))

    pose = {
        "w1": w((BOTTLENECK_DIM, POSE_FMS)), "b1": w((POSE_FMS,)),
        "w2": w((9 * POSE_FMS, POSE_FMS), 0.01), "b2": w((POSE_FMS,)),
        "w3": w((POSE_FMS, POSE_OUT), 0.01), "b3": w((POSE_OUT,)),
    }
    intr = {"w": w((BOTTLENECK_DIM, 2)), "b": w((2,))}
    return {"enc": enc, "of_dec": of_dec, "pose": pose, "intr": intr}


# -----------------------------------------------------------------------------
if __name__ == "__main__":
    key = jax.random.PRNGKey(0)
    k_x, k_p = jax.random.split(key)
    batch = 2
    x = jax.random.normal(k_x, (batch, 3 * SEQ_LEN, HEIGHT, WIDTH), jnp.float32)
    params = init_params(k_p)

    fwd = jax.jit(motion_net_forward)
    ofs_pyr, exts_pyr, T, K = jax.block_until_ready(fwd(params, x))

    # basic shape / sanity checks
    assert T.shape == (batch * NUM_OUTPUTS, 4, 4)
    assert K.shape == (batch, 4, 4)
    assert ofs_pyr[0].shape == (batch * NUM_OUTPUTS, OUT_CHANNELS, HEIGHT // 2, WIDTH // 2)
    assert ofs_pyr[1].shape == (batch * NUM_OUTPUTS, OUT_CHANNELS, HEIGHT // 4, WIDTH // 4)
    assert exts_pyr[0].shape == (batch * NUM_OUTPUTS, NUM_EXT_CHANNELS, HEIGHT // 2, WIDTH // 2)
    assert bool(jnp.all(jnp.isfinite(T))) and bool(jnp.all(jnp.isfinite(K)))
    print("KERNEL_OK")
</pallas_src>

<mosaic_0001>
module attributes {stable_mosaic.version = 11 : i64} {
  func.func @_motion_net_kernel(%arg0: i32, %arg1: memref<128x36xf32, #tpu.memory_space<vmem>>, %arg2: memref<32x128xbf16, #tpu.memory_space<vmem>>, %arg3: memref<2x32xf32, #tpu.memory_space<vmem>>, %arg4: memref<288x32xbf16, #tpu.memory_space<vmem>>, %arg5: memref<36x16xbf16, #tpu.memory_space<vmem>>, %arg6: memref<1x16xf32, #tpu.memory_space<vmem>>, %arg7: memref<16x8xbf16, #tpu.memory_space<vmem>>, %arg8: memref<1x8xf32, #tpu.memory_space<vmem>>, %arg9: memref<16x32xbf16, #tpu.memory_space<vmem>>, %arg10: memref<1x32xf32, #tpu.memory_space<vmem>>, %arg11: memref<32x384xbf16, #tpu.memory_space<vmem>>, %arg12: memref<1x384xf32, #tpu.memory_space<vmem>>, %arg13: memref<2304x256xbf16, #tpu.memory_space<vmem>>, %arg14: memref<1x256xf32, #tpu.memory_space<vmem>>, %arg15: memref<258x128xbf16, #tpu.memory_space<vmem>>, %arg16: memref<1x128xf32, #tpu.memory_space<vmem>>, %arg17: memref<128x8xf32, #tpu.memory_space<vmem>>, %arg18: memref<32x8xf32, #tpu.memory_space<vmem>>, %arg19: memref<2x128xf32, #tpu.memory_space<vmem>>, %arg20: memref<288x256xf32, #tpu.memory_space<vmem>>, %arg21: memref<32x256xf32, #tpu.memory_space<vmem>>) attributes {dimension_semantics = [#tpu.dimension_semantics<parallel>], iteration_bounds = array<i64: 1>, scalar_prefetch = 0 : i64, scratch_operands = 2 : i64, tpu.core_type = #tpu.core_type<tc>, window_params = [{transform_indices = @transform_0, window_bounds = array<i64: 128, 36>}, {pipeline_mode = #tpu.pipeline_mode<synchronous>, transform_indices = @transform_1, window_bounds = array<i64: 32, 128>}, {pipeline_mode = #tpu.pipeline_mode<synchronous>, transform_indices = @transform_2, window_bounds = array<i64: 2, 32>}, {pipeline_mode = #tpu.pipeline_mode<synchronous>, transform_indices = @transform_3, window_bounds = array<i64: 288, 32>}, {pipeline_mode = #tpu.pipeline_mode<synchronous>, transform_indices = @transform_4, window_bounds = array<i64: 36, 16>}, {pipeline_mode = #tpu.pipeline_mode<synchronous>, transform_indices = @transform_5, window_bounds = array<i64: 1, 16>}, {pipeline_mode = #tpu.pipeline_mode<synchronous>, transform_indices = @transform_6, window_bounds = array<i64: 16, 8>}, {pipeline_mode = #tpu.pipeline_mode<synchronous>, transform_indices = @transform_7, window_bounds = array<i64: 1, 8>}, {pipeline_mode = #tpu.pipeline_mode<synchronous>, transform_indices = @transform_8, window_bounds = array<i64: 16, 32>}, {pipeline_mode = #tpu.pipeline_mode<synchronous>, transform_indices = @transform_9, window_bounds = array<i64: 1, 32>}, {pipeline_mode = #tpu.pipeline_mode<synchronous>, transform_indices = @transform_10, window_bounds = array<i64: 32, 384>}, {pipeline_mode = #tpu.pipeline_mode<synchronous>, transform_indices = @transform_11, window_bounds = array<i64: 1, 384>}, {pipeline_mode = #tpu.pipeline_mode<synchronous>, transform_indices = @transform_12, window_bounds = array<i64: 2304, 256>}, {pipeline_mode = #tpu.pipeline_mode<synchronous>, transform_indices = @transform_13, window_bounds = array<i64: 1, 256>}, {pipeline_mode = #tpu.pipeline_mode<synchronous>, transform_indices = @transform_14, window_bounds = array<i64: 258, 128>}, {pipeline_mode = #tpu.pipeline_mode<synchronous>, transform_indices = @transform_15, window_bounds = array<i64: 1, 128>}, {transform_indices = @transform_16, window_bounds = array<i64: 128, 8>}, {transform_indices = @transform_17, window_bounds = array<i64: 32, 8>}, {transform_indices = @transform_18, window_bounds = array<i64: 2, 128>}]} {
    %c0 = arith.constant 0 : index
    %c0_0 = arith.constant 0 : index
    %0 = vector.load %arg1[%c0, %c0_0] : memref<128x36xf32, #tpu.memory_space<vmem>>, vector<128x36xf32>
    %c0_1 = arith.constant 0 : index
    %c0_2 = arith.constant 0 : index
    %1 = vector.load %arg5[%c0_1, %c0_2] : memref<36x16xbf16, #tpu.memory_space<vmem>>, vector<36x16xbf16>
    %cst = arith.constant dense<0.000000e+00> : vector<128x16xf32>
    %2 = tpu.matmul %0, %1, %cst {dimension_numbers = #tpu.dot_dimension_numbers<[1], [0], [0], [1], [0, 0, 1, 1], [], []>} : vector<128x36xf32>, vector<36x16xbf16>, vector<128x16xf32> -> vector<128x16xf32>
    %c0_3 = arith.constant 0 : index
    %c0_4 = arith.constant 0 : index
    %3 = vector.load %arg6[%c0_3, %c0_4] : memref<1x16xf32, #tpu.memory_space<vmem>>, vector<1x16xf32>
    %4 = vector.broadcast %3 : vector<1x16xf32> to vector<128x16xf32>
    %5 = arith.addf %2, %4 : vector<128x16xf32>
    %cst_5 = arith.constant 0.000000e+00 : f32
    %6 = vector.broadcast %cst_5 : f32 to vector<128x16xf32>
    %7 = arith.maximumf %5, %6 : vector<128x16xf32>
    %c0_6 = arith.constant 0 : index
    %c0_7 = arith.constant 0 : index
    %8 = vector.load %arg7[%c0_6, %c0_7] : memref<16x8xbf16, #tpu.memory_space<vmem>>, vector<16x8xbf16>
    %cst_8 = arith.constant dense<0.000000e+00> : vector<128x8xf32>
    %9 = tpu.matmul %7, %8, %cst_8 {dimension_numbers = #tpu.dot_dimension_numbers<[1], [0], [0], [1], [0, 0, 1, 1], [], []>} : vector<128x16xf32>, vector<16x8xbf16>, vector<128x8xf32> -> vector<128x8xf32>
    %c0_9 = arith.constant 0 : index
    %c0_10 = arith.constant 0 : index
    %10 = vector.load %arg8[%c0_9, %c0_10] : memref<1x8xf32, #tpu.memory_space<vmem>>, vector<1x8xf32>
    %11 = vector.broadcast %10 : vector<1x8xf32> to vector<128x8xf32>
    %12 = arith.addf %9, %11 : vector<128x8xf32>
    %c0_11 = arith.constant 0 : index
    %c0_12 = arith.constant 0 : index
    %13 = vector.load %arg17[%c0_11, %c0_12] : memref<128x8xf32, #tpu.memory_space<vmem>>, vector<128x8xf32>
    tpu.vector_store %arg17[%c0_11, %c0_12], %12 {strides = array<i32>} : memref<128x8xf32, #tpu.memory_space<vmem>>, vector<128x8xf32>,
    %c0_13 = arith.constant 0 : index
    %c0_14 = arith.constant 0 : index
    %14 = vector.load %arg2[%c0_13, %c0_14] : memref<32x128xbf16, #tpu.memory_space<vmem>>, vector<32x128xbf16>
    %cst_15 = arith.constant dense<0.000000e+00> : vector<32x16xf32>
    %15 = tpu.matmul %14, %7, %cst_15 {dimension_numbers = #tpu.dot_dimension_numbers<[1], [0], [0], [1], [0, 0, 1, 1], [], []>} : vector<32x128xbf16>, vector<128x16xf32>, vector<32x16xf32> -> vector<32x16xf32>
    %c0_16 = arith.constant 0 : index
    %c0_17 = arith.constant 0 : index
    %16 = vector.load %arg9[%c0_16, %c0_17] : memref<16x32xbf16, #tpu.memory_space<vmem>>, vector<16x32xbf16>
    %cst_18 = arith.constant dense<0.000000e+00> : vector<32x32xf32>
    %17 = tpu.matmul %15, %16, %cst_18 {dimension_numbers = #tpu.dot_dimension_numbers<[1], [0], [0], [1], [0, 0, 1, 1], [], []>} : vector<32x16xf32>, vector<16x32xbf16>, vector<32x32xf32> -> vector<32x32xf32>
    %c0_19 = arith.constant 0 : index
    %c0_20 = arith.constant 0 : index
    %18 = vector.load %arg10[%c0_19, %c0_20] : memref<1x32xf32, #tpu.memory_space<vmem>>, vector<1x32xf32>
    %19 = vector.broadcast %18 : vector<1x32xf32> to vector<32x32xf32>
    %20 = arith.addf %17, %19 : vector<32x32xf32>
    %cst_21 = arith.constant 0.000000e+00 : f32
    %21 = vector.broadcast %cst_21 : f32 to vector<32x32xf32>
    %22 = arith.maximumf %20, %21 : vector<32x32xf32>
    %c0_22 = arith.constant 0 : index
    %c0_23 = arith.constant 0 : index
    %23 = vector.load %arg11[%c0_22, %c0_23] : memref<32x384xbf16, #tpu.memory_space<vmem>>, vector<32x384xbf16>
    %cst_24 = arith.constant dense<0.000000e+00> : vector<32x384xf32>
    %24 = tpu.matmul %22, %23, %cst_24 {dimension_numbers = #tpu.dot_dimension_numbers<[1], [0], [0], [1], [0, 0, 1, 1], [], []>} : vector<32x32xf32>, vector<32x384xbf16>, vector<32x384xf32> -> vector<32x384xf32>
    %c0_25 = arith.constant 0 : index
    %c0_26 = arith.constant 0 : index
    %25 = vector.load %arg12[%c0_25, %c0_26] : memref<1x384xf32, #tpu.memory_space<vmem>>, vector<1x384xf32>
    %26 = vector.broadcast %25 : vector<1x384xf32> to vector<32x384xf32>
    %27 = arith.addf %24, %26 : vector<32x384xf32>
    %28 = vector.extract_strided_slice %27 {offsets = [0, 0], sizes = [32, 256], strides = [1, 1]} : vector<32x384xf32> to vector<32x256xf32>
    %cst_27 = arith.constant 0.000000e+00 : f32
    %29 = vector.broadcast %cst_27 : f32 to vector<32x256xf32>
    %30 = arith.maximumf %28, %29 : vector<32x256xf32>
    %31 = vector.extract_strided_slice %27 {offsets = [0, 256], sizes = [32, 8], strides = [1, 1]} : vector<32x384xf32> to vector<32x8xf32>
    %c0_28 = arith.constant 0 : index
    %c0_29 = arith.constant 0 : index
    %32 = vector.load %arg18[%c0_28, %c0_29] : memref<32x8xf32, #tpu.memory_space<vmem>>, vector<32x8xf32>
    tpu.vector_store %arg18[%c0_28, %c0_29], %31 {strides = array<i32>} : memref<32x8xf32, #tpu.memory_space<vmem>>, vector<32x8xf32>,
    %33 = vector.extract_strided_slice %27 {offsets = [0, 264], sizes = [32, 2], strides = [1, 1]} : vector<32x384xf32> to vector<32x2xf32>
    %c0_30 = arith.constant 0 : index
    %c0_31 = arith.constant 0 : index
    %34 = vector.load %arg4[%c0_30, %c0_31] : memref<288x32xbf16, #tpu.memory_space<vmem>>, vector<288x32xbf16>
    %cst_32 = arith.constant dense<0.000000e+00> : vector<288x256xf32>
    %35 = tpu.matmul %34, %30, %cst_32 {dimension_numbers = #tpu.dot_dimension_numbers<[1], [0], [0], [1], [0, 0, 1, 1], [], []>} : vector<288x32xbf16>, vector<32x256xf32>, vector<288x256xf32> -> vector<288x256xf32>
    %c0_33 = arith.constant 0 : index
    %c0_34 = arith.constant 0 : index
    %36 = vector.load %arg20[%c0_33, %c0_34] : memref<288x256xf32, #tpu.memory_space<vmem>>, vector<288x256xf32>
    tpu.vector_store %arg20[%c0_33, %c0_34], %35 {strides = array<i32>} : memref<288x256xf32, #tpu.memory_space<vmem>>, vector<288x256xf32>,
    %cst_35 = arith.constant 0.000000e+00 : f32
    %37 = vector.broadcast %cst_35 : f32 to vector<32x256xf32>
    %c0_36 = arith.constant 0 : index
    %c0_37 = arith.constant 0 : index
    %38 = vector.load %arg21[%c0_36, %c0_37] : memref<32x256xf32, #tpu.memory_space<vmem>>, vector<32x256xf32>
    tpu.vector_store %arg21[%c0_36, %c0_37], %37 {strides = array<i32>} : memref<32x256xf32, #tpu.memory_space<vmem>>, vector<32x256xf32>,
    %c0_i32 = arith.constant 0 : i32
    %c32_i32 = arith.constant 32 : i32
    %39 = arith.muli %c0_i32, %c32_i32 : i32
    %40 = tpu.assume_multiple %39, 16 : i32
    %c256_i32 = arith.constant 256 : i32
    %41 = arith.muli %c0_i32, %c256_i32 : i32
    %42 = tpu.assume_multiple %41, 256 : i32
    %c0_38 = arith.constant 0 : index
    %c0_39 = arith.constant 0 : index
    %43 = vector.load %arg21[%c0_38, %c0_39] : memref<32x256xf32, #tpu.memory_space<vmem>>, vector<32x256xf32>
    %44 = arith.index_cast %40 : i32 to index
    %c0_40 = arith.constant 0 : index
    %45 = vector.load %arg20[%44, %c0_40] : memref<288x256xf32, #tpu.memory_space<vmem>>, vector<32x256xf32>
    %46 = arith.index_cast %42 : i32 to index
    %c0_41 = arith.constant 0 : index
    %47 = vector.load %arg13[%46, %c0_41] : memref<2304x256xbf16, #tpu.memory_space<vmem>>, vector<256x256xbf16>
    %cst_42 = arith.constant dense<0.000000e+00> : vector<32x256xf32>
    %48 = tpu.matmul %45, %47, %cst_42 {dimension_numbers = #tpu.dot_dimension_numbers<[1], [0], [0], [1], [0, 0, 1, 1], [], []>} : vector<32x256xf32>, vector<256x256xbf16>, vector<32x256xf32> -> vector<32x256xf32>
    %49 = arith.addf %43, %48 : vector<32x256xf32>
    %c0_43 = arith.constant 0 : index
    %c0_44 = arith.constant 0 : index
    %50 = vector.load %arg21[%c0_43, %c0_44] : memref<32x256xf32, #tpu.memory_space<vmem>>, vector<32x256xf32>
    tpu.vector_store %arg21[%c0_43, %c0_44], %49 {strides = array<i32>} : memref<32x256xf32, #tpu.memory_space<vmem>>, vector<32x256xf32>,
    %c1_i32 = arith.constant 1 : i32
    %c32_i32_45 = arith.constant 32 : i32
    %51 = arith.muli %c1_i32, %c32_i32_45 : i32
    %52 = tpu.assume_multiple %51, 16 : i32
    %c256_i32_46 = arith.constant 256 : i32
    %53 = arith.muli %c1_i32, %c256_i32_46 : i32
    %54 = tpu.assume_multiple %53, 256 : i32
    %c0_47 = arith.constant 0 : index
    %c0_48 = arith.constant 0 : index
    %55 = vector.load %arg21[%c0_47, %c0_48] : memref<32x256xf32, #tpu.memory_space<vmem>>, vector<32x256xf32>
    %56 = arith.index_cast %52 : i32 to index
    %c0_49 = arith.constant 0 : index
    %57 = vector.load %arg20[%56, %c0_49] : memref<288x256xf32, #tpu.memory_space<vmem>>, vector<32x256xf32>
    %58 = arith.index_cast %54 : i32 to index
    %c0_50 = arith.constant 0 : index
    %59 = vector.load %arg13[%58, %c0_50] : memref<2304x256xbf16, #tpu.memory_space<vmem>>, vector<256x256xbf16>
    %cst_51 = arith.constant dense<0.000000e+00> : vector<32x256xf32>
    %60 = tpu.matmul %57, %59, %cst_51 {dimension_numbers = #tpu.dot_dimension_numbers<[1], [0], [0], [1], [0, 0, 1, 1], [], []>} : vector<32x256xf32>, vector<256x256xbf16>, vector<32x256xf32> -> vector<32x256xf32>
    %61 = arith.addf %55, %60 : vector<32x256xf32>
    %c0_52 = arith.constant 0 : index
    %c0_53 = arith.constant 0 : index
    %62 = vector.load %arg21[%c0_52, %c0_53] : memref<32x256xf32, #tpu.memory_space<vmem>>, vector<32x256xf32>
    tpu.vector_store %arg21[%c0_52, %c0_53], %61 {strides = array<i32>} : memref<32x256xf32, #tpu.memory_space<vmem>>, vector<32x256xf32>,
    %c2_i32 = arith.constant 2 : i32
    %c32_i32_54 = arith.constant 32 : i32
    %63 = arith.muli %c2_i32, %c32_i32_54 : i32
    %64 = tpu.assume_multiple %63, 16 : i32
    %c256_i32_55 = arith.constant 256 : i32
    %65 = arith.muli %c2_i32, %c256_i32_55 : i32
    %66 = tpu.assume_multiple %65, 256 : i32
    %c0_56 = arith.constant 0 : index
    %c0_57 = arith.constant 0 : index
    %67 = vector.load %arg21[%c0_56, %c0_57] : memref<32x256xf32, #tpu.memory_space<vmem>>, vector<32x256xf32>
    %68 = arith.index_cast %64 : i32 to index
    %c0_58 = arith.constant 0 : index
    %69 = vector.load %arg20[%68, %c0_58] : memref<288x256xf32, #tpu.memory_space<vmem>>, vector<32x256xf32>
    %70 = arith.index_cast %66 : i32 to index
    %c0_59 = arith.constant 0 : index
    %71 = vector.load %arg13[%70, %c0_59] : memref<2304x256xbf16, #tpu.memory_space<vmem>>, vector<256x256xbf16>
    %cst_60 = arith.constant dense<0.000000e+00> : vector<32x256xf32>
    %72 = tpu.matmul %69, %71, %cst_60 {dimension_numbers = #tpu.dot_dimension_numbers<[1], [0], [0], [1], [0, 0, 1, 1], [], []>} : vector<32x256xf32>, vector<256x256xbf16>, vector<32x256xf32> -> vector<32x256xf32>
    %73 = arith.addf %67, %72 : vector<32x256xf32>
    %c0_61 = arith.constant 0 : index
    %c0_62 = arith.constant 0 : index
    %74 = vector.load %arg21[%c0_61, %c0_62] : memref<32x256xf32, #tpu.memory_space<vmem>>, vector<32x256xf32>
    tpu.vector_store %arg21[%c0_61, %c0_62], %73 {strides = array<i32>} : memref<32x256xf32, #tpu.memory_space<vmem>>, vector<32x256xf32>,
    %c3_i32 = arith.constant 3 : i32
    %c32_i32_63 = arith.constant 32 : i32
    %75 = arith.muli %c3_i32, %c32_i32_63 : i32
    %76 = tpu.assume_multiple %75, 16 : i32
    %c256_i32_64 = arith.constant 256 : i32
    %77 = arith.muli %c3_i32, %c256_i32_64 : i32
    %78 = tpu.assume_multiple %77, 256 : i32
    %c0_65 = arith.constant 0 : index
    %c0_66 = arith.constant 0 : index
    %79 = vector.load %arg21[%c0_65, %c0_66] : memref<32x256xf32, #tpu.memory_space<vmem>>, vector<32x256xf32>
    %80 = arith.index_cast %76 : i32 to index
    %c0_67 = arith.constant 0 : index
    %81 = vector.load %arg20[%80, %c0_67] : memref<288x256xf32, #tpu.memory_space<vmem>>, vector<32x256xf32>
    %82 = arith.index_cast %78 : i32 to index
    %c0_68 = arith.constant 0 : index
    %83 = vector.load %arg13[%82, %c0_68] : memref<2304x256xbf16, #tpu.memory_space<vmem>>, vector<256x256xbf16>
    %cst_69 = arith.constant dense<0.000000e+00> : vector<32x256xf32>
    %84 = tpu.matmul %81, %83, %cst_69 {dimension_numbers = #tpu.dot_dimension_numbers<[1], [0], [0], [1], [0, 0, 1, 1], [], []>} : vector<32x256xf32>, vector<256x256xbf16>, vector<32x256xf32> -> vector<32x256xf32>
    %85 = arith.addf %79, %84 : vector<32x256xf32>
    %c0_70 = arith.constant 0 : index
    %c0_71 = arith.constant 0 : index
    %86 = vector.load %arg21[%c0_70, %c0_71] : memref<32x256xf32, #tpu.memory_space<vmem>>, vector<32x256xf32>
    tpu.vector_store %arg21[%c0_70, %c0_71], %85 {strides = array<i32>} : memref<32x256xf32, #tpu.memory_space<vmem>>, vector<32x256xf32>,
    %c4_i32 = arith.constant 4 : i32
    %c32_i32_72 = arith.constant 32 : i32
    %87 = arith.muli %c4_i32, %c32_i32_72 : i32
    %88 = tpu.assume_multiple %87, 16 : i32
    %c256_i32_73 = arith.constant 256 : i32
    %89 = arith.muli %c4_i32, %c256_i32_73 : i32
    %90 = tpu.assume_multiple %89, 256 : i32
    %c0_74 = arith.constant 0 : index
    %c0_75 = arith.constant 0 : index
    %91 = vector.load %arg21[%c0_74, %c0_75] : memref<32x256xf32, #tpu.memory_space<vmem>>, vector<32x256xf32>
    %92 = arith.index_cast %88 : i32 to index
    %c0_76 = arith.constant 0 : index
    %93 = vector.load %arg20[%92, %c0_76] : memref<288x256xf32, #tpu.memory_space<vmem>>, vector<32x256xf32>
    %94 = arith.index_cast %90 : i32 to index
    %c0_77 = arith.constant 0 : index
    %95 = vector.load %arg13[%94, %c0_77] : memref<2304x256xbf16, #tpu.memory_space<vmem>>, vector<256x256xbf16>
    %cst_78 = arith.constant dense<0.000000e+00> : vector<32x256xf32>
    %96 = tpu.matmul %93, %95, %cst_78 {dimension_numbers = #tpu.dot_dimension_numbers<[1], [0], [0], [1], [0, 0, 1, 1], [], []>} : vector<32x256xf32>, vector<256x256xbf16>, vector<32x256xf32> -> vector<32x256xf32>
    %97 = arith.addf %91, %96 : vector<32x256xf32>
    %c0_79 = arith.constant 0 : index
    %c0_80 = arith.constant 0 : index
    %98 = vector.load %arg21[%c0_79, %c0_80] : memref<32x256xf32, #tpu.memory_space<vmem>>, vector<32x256xf32>
    tpu.vector_store %arg21[%c0_79, %c0_80], %97 {strides = array<i32>} : memref<32x256xf32, #tpu.memory_space<vmem>>, vector<32x256xf32>,
    %c5_i32 = arith.constant 5 : i32
    %c32_i32_81 = arith.constant 32 : i32
    %99 = arith.muli %c5_i32, %c32_i32_81 : i32
    %100 = tpu.assume_multiple %99, 16 : i32
    %c256_i32_82 = arith.constant 256 : i32
    %101 = arith.muli %c5_i32, %c256_i32_82 : i32
    %102 = tpu.assume_multiple %101, 256 : i32
    %c0_83 = arith.constant 0 : index
    %c0_84 = arith.constant 0 : index
    %103 = vector.load %arg21[%c0_83, %c0_84] : memref<32x256xf32, #tpu.memory_space<vmem>>, vector<32x256xf32>
    %104 = arith.index_cast %100 : i32 to index
    %c0_85 = arith.constant 0 : index
    %105 = vector.load %arg20[%104, %c0_85] : memref<288x256xf32, #tpu.memory_space<vmem>>, vector<32x256xf32>
    %106 = arith.index_cast %102 : i32 to index
    %c0_86 = arith.constant 0 : index
    %107 = vector.load %arg13[%106, %c0_86] : memref<2304x256xbf16, #tpu.memory_space<vmem>>, vector<256x256xbf16>
    %cst_87 = arith.constant dense<0.000000e+00> : vector<32x256xf32>
    %108 = tpu.matmul %105, %107, %cst_87 {dimension_numbers = #tpu.dot_dimension_numbers<[1], [0], [0], [1], [0, 0, 1, 1], [], []>} : vector<32x256xf32>, vector<256x256xbf16>, vector<32x256xf32> -> vector<32x256xf32>
    %109 = arith.addf %103, %108 : vector<32x256xf32>
    %c0_88 = arith.constant 0 : index
    %c0_89 = arith.constant 0 : index
    %110 = vector.load %arg21[%c0_88, %c0_89] : memref<32x256xf32, #tpu.memory_space<vmem>>, vector<32x256xf32>
    tpu.vector_store %arg21[%c0_88, %c0_89], %109 {strides = array<i32>} : memref<32x256xf32, #tpu.memory_space<vmem>>, vector<32x256xf32>,
    %c6_i32 = arith.constant 6 : i32
    %c32_i32_90 = arith.constant 32 : i32
    %111 = arith.muli %c6_i32, %c32_i32_90 : i32
    %112 = tpu.assume_multiple %111, 16 : i32
    %c256_i32_91 = arith.constant 256 : i32
    %113 = arith.muli %c6_i32, %c256_i32_91 : i32
    %114 = tpu.assume_multiple %113, 256 : i32
    %c0_92 = arith.constant 0 : index
    %c0_93 = arith.constant 0 : index
    %115 = vector.load %arg21[%c0_92, %c0_93] : memref<32x256xf32, #tpu.memory_space<vmem>>, vector<32x256xf32>
    %116 = arith.index_cast %112 : i32 to index
    %c0_94 = arith.constant 0 : index
    %117 = vector.load %arg20[%116, %c0_94] : memref<288x256xf32, #tpu.memory_space<vmem>>, vector<32x256xf32>
    %118 = arith.index_cast %114 : i32 to index
    %c0_95 = arith.constant 0 : index
    %119 = vector.load %arg13[%118, %c0_95] : memref<2304x256xbf16, #tpu.memory_space<vmem>>, vector<256x256xbf16>
    %cst_96 = arith.constant dense<0.000000e+00> : vector<32x256xf32>
    %120 = tpu.matmul %117, %119, %cst_96 {dimension_numbers = #tpu.dot_dimension_numbers<[1], [0], [0], [1], [0, 0, 1, 1], [], []>} : vector<32x256xf32>, vector<256x256xbf16>, vector<32x256xf32> -> vector<32x256xf32>
    %121 = arith.addf %115, %120 : vector<32x256xf32>
    %c0_97 = arith.constant 0 : index
    %c0_98 = arith.constant 0 : index
    %122 = vector.load %arg21[%c0_97, %c0_98] : memref<32x256xf32, #tpu.memory_space<vmem>>, vector<32x256xf32>
    tpu.vector_store %arg21[%c0_97, %c0_98], %121 {strides = array<i32>} : memref<32x256xf32, #tpu.memory_space<vmem>>, vector<32x256xf32>,
    %c7_i32 = arith.constant 7 : i32
    %c32_i32_99 = arith.constant 32 : i32
    %123 = arith.muli %c7_i32, %c32_i32_99 : i32
    %124 = tpu.assume_multiple %123, 16 : i32
    %c256_i32_100 = arith.constant 256 : i32
    %125 = arith.muli %c7_i32, %c256_i32_100 : i32
    %126 = tpu.assume_multiple %125, 256 : i32
    %c0_101 = arith.constant 0 : index
    %c0_102 = arith.constant 0 : index
    %127 = vector.load %arg21[%c0_101, %c0_102] : memref<32x256xf32, #tpu.memory_space<vmem>>, vector<32x256xf32>
    %128 = arith.index_cast %124 : i32 to index
    %c0_103 = arith.constant 0 : index
    %129 = vector.load %arg20[%128, %c0_103] : memref<288x256xf32, #tpu.memory_space<vmem>>, vector<32x256xf32>
    %130 = arith.index_cast %126 : i32 to index
    %c0_104 = arith.constant 0 : index
    %131 = vector.load %arg13[%130, %c0_104] : memref<2304x256xbf16, #tpu.memory_space<vmem>>, vector<256x256xbf16>
    %cst_105 = arith.constant dense<0.000000e+00> : vector<32x256xf32>
    %132 = tpu.matmul %129, %131, %cst_105 {dimension_numbers = #tpu.dot_dimension_numbers<[1], [0], [0], [1], [0, 0, 1, 1], [], []>} : vector<32x256xf32>, vector<256x256xbf16>, vector<32x256xf32> -> vector<32x256xf32>
    %133 = arith.addf %127, %132 : vector<32x256xf32>
    %c0_106 = arith.constant 0 : index
    %c0_107 = arith.constant 0 : index
    %134 = vector.load %arg21[%c0_106, %c0_107] : memref<32x256xf32, #tpu.memory_space<vmem>>, vector<32x256xf32>
    tpu.vector_store %arg21[%c0_106, %c0_107], %133 {strides = array<i32>} : memref<32x256xf32, #tpu.memory_space<vmem>>, vector<32x256xf32>,
    %c8_i32 = arith.constant 8 : i32
    %c32_i32_108 = arith.constant 32 : i32
    %135 = arith.muli %c8_i32, %c32_i32_108 : i32
    %136 = tpu.assume_multiple %135, 16 : i32
    %c256_i32_109 = arith.constant 256 : i32
    %137 = arith.muli %c8_i32, %c256_i32_109 : i32
    %138 = tpu.assume_multiple %137, 256 : i32
    %c0_110 = arith.constant 0 : index
    %c0_111 = arith.constant 0 : index
    %139 = vector.load %arg21[%c0_110, %c0_111] : memref<32x256xf32, #tpu.memory_space<vmem>>, vector<32x256xf32>
    %140 = arith.index_cast %136 : i32 to index
    %c0_112 = arith.constant 0 : index
    %141 = vector.load %arg20[%140, %c0_112] : memref<288x256xf32, #tpu.memory_space<vmem>>, vector<32x256xf32>
    %142 = arith.index_cast %138 : i32 to index
    %c0_113 = arith.constant 0 : index
    %143 = vector.load %arg13[%142, %c0_113] : memref<2304x256xbf16, #tpu.memory_space<vmem>>, vector<256x256xbf16>
    %cst_114 = arith.constant dense<0.000000e+00> : vector<32x256xf32>
    %144 = tpu.matmul %141, %143, %cst_114 {dimension_numbers = #tpu.dot_dimension_numbers<[1], [0], [0], [1], [0, 0, 1, 1], [], []>} : vector<32x256xf32>, vector<256x256xbf16>, vector<32x256xf32> -> vector<32x256xf32>
    %145 = arith.addf %139, %144 : vector<32x256xf32>
    %c0_115 = arith.constant 0 : index
    %c0_116 = arith.constant 0 : index
    %146 = vector.load %arg21[%c0_115, %c0_116] : memref<32x256xf32, #tpu.memory_space<vmem>>, vector<32x256xf32>
    tpu.vector_store %arg21[%c0_115, %c0_116], %145 {strides = array<i32>} : memref<32x256xf32, #tpu.memory_space<vmem>>, vector<32x256xf32>,
    %c9_i32 = arith.constant 9 : i32
    %c0_117 = arith.constant 0 : index
    %c0_118 = arith.constant 0 : index
    %147 = vector.load %arg21[%c0_117, %c0_118] : memref<32x256xf32, #tpu.memory_space<vmem>>, vector<32x256xf32>
    %c0_119 = arith.constant 0 : index
    %c0_120 = arith.constant 0 : index
    %148 = vector.load %arg14[%c0_119, %c0_120] : memref<1x256xf32, #tpu.memory_space<vmem>>, vector<1x256xf32>
    %149 = vector.broadcast %148 : vector<1x256xf32> to vector<32x256xf32>
    %150 = arith.addf %147, %149 : vector<32x256xf32>
    %cst_121 = arith.constant 0.000000e+00 : f32
    %151 = vector.broadcast %cst_121 : f32 to vector<32x256xf32>
    %152 = arith.maximumf %150, %151 : vector<32x256xf32>
    %c0_122 = arith.constant 0 : index
    %c0_123 = arith.constant 0 : index
    %153 = vector.load %arg3[%c0_122, %c0_123] : memref<2x32xf32, #tpu.memory_space<vmem>>, vector<2x32xf32>
    %154 = tpu.concatenate %152, %33 in 1 : vector<32x256xf32>, vector<32x2xf32> -> vector<32x258xf32>
    %cst_124 = arith.constant dense<0.000000e+00> : vector<2x258xf32>
    %155 = tpu.matmul %153, %154, %cst_124 {dimension_numbers = #tpu.dot_dimension_numbers<[1], [0], [0], [1], [0, 0, 1, 1], [], []>} : vector<2x32xf32>, vector<32x258xf32>, vector<2x258xf32> -> vector<2x258xf32>
    %c0_125 = arith.constant 0 : index
    %c0_126 = arith.constant 0 : index
    %156 = vector.load %arg15[%c0_125, %c0_126] : memref<258x128xbf16, #tpu.memory_space<vmem>>, vector<258x128xbf16>
    %cst_127 = arith.constant dense<0.000000e+00> : vector<2x128xf32>
    %157 = tpu.matmul %155, %156, %cst_127 {dimension_numbers = #tpu.dot_dimension_numbers<[1], [0], [0], [1], [0, 0, 1, 1], [], []>} : vector<2x258xf32>, vector<258x128xbf16>, vector<2x128xf32> -> vector<2x128xf32>
    %c0_128 = arith.constant 0 : index
    %c0_129 = arith.constant 0 : index
    %158 = vector.load %arg16[%c0_128, %c0_129] : memref<1x128xf32, #tpu.memory_space<vmem>>, vector<1x128xf32>
    %159 = vector.broadcast %158 : vector<1x128xf32> to vector<2x128xf32>
    %160 = arith.addf %157, %159 : vector<2x128xf32>
    %161 = tpu.iota {dimensions = array<i32: 1>} : vector<1x128xi32>
    %c12_i32 = arith.constant 12 : i32
    %162 = vector.broadcast %c12_i32 : i32 to vector<1x128xi32>
    %163 = arith.cmpi sge, %161, %162 : vector<1x128xi32>
    %c14_i32 = arith.constant 14 : i32
    %164 = vector.broadcast %c14_i32 : i32 to vector<1x128xi32>
    %165 = arith.cmpi slt, %161, %164 : vector<1x128xi32>
    %166 = arith.andi %163, %165 : vector<1x128xi1>
    %cst_130 = arith.constant 0.000000e+00 : f32
    %167 = vector.broadcast %cst_130 : f32 to vector<2x128xf32>
    %168 = arith.maximumf %160, %167 : vector<2x128xf32>
    %169 = math.absf %160 : vector<2x128xf32>
    %cst_131 = arith.constant 0.000000e+00 : f32
    %170 = vector.broadcast %cst_131 : f32 to vector<2x128xf32>
    %171 = arith.subf %170, %169 : vector<2x128xf32>
    %172 = math.exp %171 : vector<2x128xf32>
    %173 = math.log1p %172 : vector<2x128xf32>
    %174 = arith.addf %168, %173 : vector<2x128xf32>
    %175 = vector.shape_cast %166 : vector<1x128xi1> to vector<1x128xi1>
    %176 = vector.broadcast %175 : vector<1x128xi1> to vector<2x128xi1>
    %177 = arith.select %176, %174, %160 : vector<2x128xi1>, vector<2x128xf32>
    %c0_132 = arith.constant 0 : index
    %c0_133 = arith.constant 0 : index
    %178 = vector.load %arg19[%c0_132, %c0_133] : memref<2x128xf32, #tpu.memory_space<vmem>>, vector<2x128xf32>
    tpu.vector_store %arg19[%c0_132, %c0_133], %177 {strides = array<i32>} : memref<2x128xf32, #tpu.memory_space<vmem>>, vector<2x128xf32>,
    return
  }
  func.func @transform_0(%arg0: i32) -> (i32, i32) {
    %c0_i32 = arith.constant 0 : i32
    %c0_i32_0 = arith.constant 0 : i32
    return %arg0, %c0_i32 : i32, i32
  }
  func.func @transform_1(%arg0: i32) -> (i32, i32) {
    %c0_i32 = arith.constant 0 : i32
    %c0_i32_0 = arith.constant 0 : i32
    %c0_i32_1 = arith.constant 0 : i32
    return %c0_i32, %c0_i32_0 : i32, i32
  }
  func.func @transform_2(%arg0: i32) -> (i32, i32) {
    %c0_i32 = arith.constant 0 : i32
    %c0_i32_0 = arith.constant 0 : i32
    %c0_i32_1 = arith.constant 0 : i32
    return %c0_i32, %c0_i32_0 : i32, i32
  }
  func.func @transform_3(%arg0: i32) -> (i32, i32) {
    %c0_i32 = arith.constant 0 : i32
    %c0_i32_0 = arith.constant 0 : i32
    %c0_i32_1 = arith.constant 0 : i32
    return %c0_i32, %c0_i32_0 : i32, i32
  }
  func.func @transform_4(%arg0: i32) -> (i32, i32) {
    %c0_i32 = arith.constant 0 : i32
    %c0_i32_0 = arith.constant 0 : i32
    %c0_i32_1 = arith.constant 0 : i32
    return %c0_i32, %c0_i32_0 : i32, i32
  }
  func.func @transform_5(%arg0: i32) -> (i32, i32) {
    %c0_i32 = arith.constant 0 : i32
    %c0_i32_0 = arith.constant 0 : i32
    %c0_i32_1 = arith.constant 0 : i32
    return %c0_i32, %c0_i32_0 : i32, i32
  }
  func.func @transform_6(%arg0: i32) -> (i32, i32) {
    %c0_i32 = arith.constant 0 : i32
    %c0_i32_0 = arith.constant 0 : i32
    %c0_i32_1 = arith.constant 0 : i32
    return %c0_i32, %c0_i32_0 : i32, i32
  }
  func.func @transform_7(%arg0: i32) -> (i32, i32) {
    %c0_i32 = arith.constant 0 : i32
    %c0_i32_0 = arith.constant 0 : i32
    %c0_i32_1 = arith.constant 0 : i32
    return %c0_i32, %c0_i32_0 : i32, i32
  }
  func.func @transform_8(%arg0: i32) -> (i32, i32) {
    %c0_i32 = arith.constant 0 : i32
    %c0_i32_0 = arith.constant 0 : i32
    %c0_i32_1 = arith.constant 0 : i32
    return %c0_i32, %c0_i32_0 : i32, i32
  }
  func.func @transform_9(%arg0: i32) -> (i32, i32) {
    %c0_i32 = arith.constant 0 : i32
    %c0_i32_0 = arith.constant 0 : i32
    %c0_i32_1 = arith.constant 0 : i32
    return %c0_i32, %c0_i32_0 : i32, i32
  }
  func.func @transform_10(%arg0: i32) -> (i32, i32) {
    %c0_i32 = arith.constant 0 : i32
    %c0_i32_0 = arith.constant 0 : i32
    %c0_i32_1 = arith.constant 0 : i32
    return %c0_i32, %c0_i32_0 : i32, i32
  }
  func.func @transform_11(%arg0: i32) -> (i32, i32) {
    %c0_i32 = arith.constant 0 : i32
    %c0_i32_0 = arith.constant 0 : i32
    %c0_i32_1 = arith.constant 0 : i32
    return %c0_i32, %c0_i32_0 : i32, i32
  }
  func.func @transform_12(%arg0: i32) -> (i32, i32) {
    %c0_i32 = arith.constant 0 : i32
    %c0_i32_0 = arith.constant 0 : i32
    %c0_i32_1 = arith.constant 0 : i32
    return %c0_i32, %c0_i32_0 : i32, i32
  }
  func.func @transform_13(%arg0: i32) -> (i32, i32) {
    %c0_i32 = arith.constant 0 : i32
    %c0_i32_0 = arith.constant 0 : i32
    %c0_i32_1 = arith.constant 0 : i32
    return %c0_i32, %c0_i32_0 : i32, i32
  }
  func.func @transform_14(%arg0: i32) -> (i32, i32) {
    %c0_i32 = arith.constant 0 : i32
    %c0_i32_0 = arith.constant 0 : i32
    %c0_i32_1 = arith.constant 0 : i32
    return %c0_i32, %c0_i32_0 : i32, i32
  }
  func.func @transform_15(%arg0: i32) -> (i32, i32) {
    %c0_i32 = arith.constant 0 : i32
    %c0_i32_0 = arith.constant 0 : i32
    %c0_i32_1 = arith.constant 0 : i32
    return %c0_i32, %c0_i32_0 : i32, i32
  }
  func.func @transform_16(%arg0: i32) -> (i32, i32) {
    %c0_i32 = arith.constant 0 : i32
    %c0_i32_0 = arith.constant 0 : i32
    return %arg0, %c0_i32 : i32, i32
  }
  func.func @transform_17(%arg0: i32) -> (i32, i32) {
    %c0_i32 = arith.constant 0 : i32
    %c0_i32_0 = arith.constant 0 : i32
    return %arg0, %c0_i32 : i32, i32
  }
  func.func @transform_18(%arg0: i32) -> (i32, i32) {
    %c0_i32 = arith.constant 0 : i32
    %c0_i32_0 = arith.constant 0 : i32
    return %arg0, %c0_i32 : i32, i32
  }
}

</mosaic_0001>

<llo_original>
// kernel: motion_net_forward.1
$region0: #{motion_net_forward.1}
  #allocation0 [shape = 'u32[]', space=smem, size = 0x4, offset = 0x4, fixed_abs, tag = 'smem constant byte address 0x4 - core index']
  #allocation1 [shape = 'u32[72,128]{1,0:T(1,128)}', space=vmem, size = 0x9000, scoped, tag = 'internal scratch']
  #allocation2 [shape = 'f32[288,256]{1,0:T(8,128)}', space=vmem, size = 0x48000, scoped, tag = 'scratch operand']
  #allocation3 [shape = 'f32[32,256]{1,0:T(8,128)}', space=vmem, size = 0x8000, scoped, tag = 'scratch operand']
  %s0 = inlined_call_operand.vmem [shape: f32[128,36], index: 0, kind: input, shape index: {}]
  %s1 = inlined_call_operand.vmem [shape: bf16[32,128], index: 1, kind: input, shape index: {}]
  %s2 = inlined_call_operand.vmem [shape: f32[2,32], index: 2, kind: input, shape index: {}]
  %s3 = inlined_call_operand.vmem [shape: bf16[288,32], index: 3, kind: input, shape index: {}]
  %s4 = inlined_call_operand.vmem [shape: bf16[36,16], index: 4, kind: input, shape index: {}]
  %s5 = inlined_call_operand.vmem [shape: f32[1,16], index: 5, kind: input, shape index: {}]
  %s6 = inlined_call_operand.vmem [shape: bf16[16,8], index: 6, kind: input, shape index: {}]
  %s7 = inlined_call_operand.vmem [shape: f32[1,8], index: 7, kind: input, shape index: {}]
  %s8 = inlined_call_operand.vmem [shape: bf16[16,32], index: 8, kind: input, shape index: {}]
  %s9 = inlined_call_operand.vmem [shape: f32[1,32], index: 9, kind: input, shape index: {}]
  %s10 = inlined_call_operand.vmem [shape: bf16[32,384], index: 10, kind: input, shape index: {}]
  %s11 = inlined_call_operand.vmem [shape: f32[1,384], index: 11, kind: input, shape index: {}]
  %s12 = inlined_call_operand.vmem [shape: bf16[2304,256], index: 12, kind: input, shape index: {}]
  %s13 = inlined_call_operand.vmem [shape: f32[1,256], index: 13, kind: input, shape index: {}]
  %s14 = inlined_call_operand.vmem [shape: bf16[258,128], index: 14, kind: input, shape index: {}]
  %s15 = inlined_call_operand.vmem [shape: f32[1,128], index: 15, kind: input, shape index: {}]
  %s16 = inlined_call_operand.vmem [shape: f32[128,8], index: 16, kind: output, shape index: {0}]
  %s17 = inlined_call_operand.vmem [shape: f32[32,8], index: 17, kind: output, shape index: {1}]
  %s18 = inlined_call_operand.vmem [shape: f32[2,128], index: 18, kind: output, shape index: {2}]
  %19 = xla_tuple %s16, %s17, %s18
  %s20 = sld [smem:[#allocation0]]
  $region90: #{motion_net_forward.1} parent=0
    _
  %s22 = ssub.s32 1, %s20
  %s23 = scalar_select 0, %s22, %s20
  // Predicated region
  $region2: #{motion_net_forward.1} parent=0 // pred_check
    _
  $region3: #{motion_net_forward.1} parent=0 // pred_check_branch
    %25 = sbr.rel (0) target = $region5
  $region4: #{motion_net_forward.1} parent=0 // pred_region
    _
  $region5: #{motion_net_forward.1} parent=0 // pred_fallthru
    _
  // Predicated region
  $region6: #{motion_net_forward.1} parent=0 // pred_check
    _
  $region7: #{motion_net_forward.1} parent=0 // pred_check_branch
    %27 = sbr.rel (0) target = $region9
  $region8: #{motion_net_forward.1} parent=0 // pred_region
    _
  $region9: #{motion_net_forward.1} parent=0 // pred_fallthru
    _
  // Predicated region
  $region10: #{motion_net_forward.1} parent=0 // pred_check
    _
  $region11: #{motion_net_forward.1} parent=0 // pred_check_branch
    %29 = sbr.rel (0) target = $region13
  $region12: #{motion_net_forward.1} parent=0 // pred_region
    _
  $region13: #{motion_net_forward.1} parent=0 // pred_fallthru
    _
  // Predicated region
  $region14: #{motion_net_forward.1} parent=0 // pred_check
    _
  $region15: #{motion_net_forward.1} parent=0 // pred_check_branch
    %31 = sbr.rel (0) target = $region17
  $region16: #{motion_net_forward.1} parent=0 // pred_region
    _
  $region17: #{motion_net_forward.1} parent=0 // pred_fallthru
    _
  // Predicated region
  $region18: #{motion_net_forward.1} parent=0 // pred_check
    _
  $region19: #{motion_net_forward.1} parent=0 // pred_check_branch
    %33 = sbr.rel (0) target = $region21
  $region20: #{motion_net_forward.1} parent=0 // pred_region
    _
  $region21: #{motion_net_forward.1} parent=0 // pred_fallthru
    _
  // Predicated region
  $region22: #{motion_net_forward.1} parent=0 // pred_check
    _
  $region23: #{motion_net_forward.1} parent=0 // pred_check_branch
    %35 = sbr.rel (0) target = $region25
  $region24: #{motion_net_forward.1} parent=0 // pred_region
    _
  $region25: #{motion_net_forward.1} parent=0 // pred_fallthru
    _
  // Predicated region
  $region26: #{motion_net_forward.1} parent=0 // pred_check
    _
  $region27: #{motion_net_forward.1} parent=0 // pred_check_branch
    %37 = sbr.rel (0) target = $region29
  $region28: #{motion_net_forward.1} parent=0 // pred_region
    _
  $region29: #{motion_net_forward.1} parent=0 // pred_fallthru
    _
  // Predicated region
  $region30: #{motion_net_forward.1} parent=0 // pred_check
    _
  $region31: #{motion_net_forward.1} parent=0 // pred_check_branch
    %39 = sbr.rel (0) target = $region33
  $region32: #{motion_net_forward.1} parent=0 // pred_region
    _
  $region33: #{motion_net_forward.1} parent=0 // pred_fallthru
    _
  // Predicated region
  $region34: #{motion_net_forward.1} parent=0 // pred_check
    _
  $region35: #{motion_net_forward.1} parent=0 // pred_check_branch
    %41 = sbr.rel (0) target = $region37
  $region36: #{motion_net_forward.1} parent=0 // pred_region
    _
  $region37: #{motion_net_forward.1} parent=0 // pred_fallthru
    _
  // Predicated region
  $region38: #{motion_net_forward.1} parent=0 // pred_check
    _
  $region39: #{motion_net_forward.1} parent=0 // pred_check_branch
    %43 = sbr.rel (0) target = $region41
  $region40: #{motion_net_forward.1} parent=0 // pred_region
    _
  $region41: #{motion_net_forward.1} parent=0 // pred_fallthru
    _
  // Predicated region
  $region42: #{motion_net_forward.1} parent=0 // pred_check
    _
  $region43: #{motion_net_forward.1} parent=0 // pred_check_branch
    %45 = sbr.rel (0) target = $region45
  $region44: #{motion_net_forward.1} parent=0 // pred_region
    _
  $region45: #{motion_net_forward.1} parent=0 // pred_fallthru
    _
  // Predicated region
  $region46: #{motion_net_forward.1} parent=0 // pred_check
    _
  $region47: #{motion_net_forward.1} parent=0 // pred_check_branch
    %47 = sbr.rel (0) target = $region49
  $region48: #{motion_net_forward.1} parent=0 // pred_region
    _
  $region49: #{motion_net_forward.1} parent=0 // pred_fallthru
    _
  // Predicated region
  $region50: #{motion_net_forward.1} parent=0 // pred_check
    _
  $region51: #{motion_net_forward.1} parent=0 // pred_check_branch
    %49 = sbr.rel (0) target = $region53
  $region52: #{motion_net_forward.1} parent=0 // pred_region
    _
  $region53: #{motion_net_forward.1} parent=0 // pred_fallthru
    _
  // Predicated region
  $region54: #{motion_net_forward.1} parent=0 // pred_check
    _
  $region55: #{motion_net_forward.1} parent=0 // pred_check_branch
    %51 = sbr.rel (0) target = $region57
  $region56: #{motion_net_forward.1} parent=0 // pred_region
    _
  $region57: #{motion_net_forward.1} parent=0 // pred_fallthru
    _
  // Predicated region
  $region58: #{motion_net_forward.1} parent=0 // pred_check
    _
  $region59: #{motion_net_forward.1} parent=0 // pred_check_branch
    %53 = sbr.rel (0) target = $region61
  $region60: #{motion_net_forward.1} parent=0 // pred_region
    _
  $region61: #{motion_net_forward.1} parent=0 // pred_fallthru
    _
  // Predicated region
  $region62: #{motion_net_forward.1} parent=0 // pred_check
    _
  $region63: #{motion_net_forward.1} parent=0 // pred_check_branch
    %55 = sbr.rel (0) target = $region65
  $region64: #{motion_net_forward.1} parent=0 // pred_region
    _
  $region65: #{motion_net_forward.1} parent=0 // pred_fallthru
    _
  %v57 = vld [vmem:[%s0] sm:$0xff]
  %v58 = vld [vmem:[%s0 + $0x8] sm:$0xff]
  %v59 = vld [vmem:[%s0 + $0x10] sm:$0xff]
  %v60 = vld [vmem:[%s0 + $0x18] sm:$0xff]
  %v61 = vld [vmem:[%s0 + $0x20] sm:$0xff]
  %v62 = vld [vmem:[%s0 + $0x28] sm:$0xff]
  %v63 = vld [vmem:[%s0 + $0x30] sm:$0xff]
  %v64 = vld [vmem:[%s0 + $0x38] sm:$0xff]
  %v65 = vld [vmem:[%s0 + $0x40] sm:$0xff]
  %v66 = vld [vmem:[%s0 + $0x48] sm:$0xff]
  %v67 = vld [vmem:[%s0 + $0x50] sm:$0xff]
  %v68 = vld [vmem:[%s0 + $0x58] sm:$0xff]
  %v69 = vld [vmem:[%s0 + $0x60] sm:$0xff]
  %v70 = vld [vmem:[%s0 + $0x68] sm:$0xff]
  %v71 = vld [vmem:[%s0 + $0x70] sm:$0xff]
  %v72 = vld [vmem:[%s0 + $0x78] sm:$0xff]
  %v73 = vld [vmem:[%s4] sm:$0xf]
  %v74 = vld [vmem:[%s4 + $0x4] sm:$0xf]
  %v75 = vld [vmem:[%s4 + $0x8] sm:$0xf]
  %v76 = vld [vmem:[%s4 + $0xc] sm:$0xf]
  %v77 = vld [vmem:[%s4 + $0x10] sm:$0x3]
  %v78 = vld [vmem:[%s5] sm:$0x1]
  %v80 = vperm.slane %v78, 0
  %v87 = vunpack.c.l.b16 %v73
  %v88 = vunpack.c.l.b16 %v74
  %v89 = vunpack.c.l.b16 %v75
  %v90 = vunpack.c.l.b16 %v76
  %v91 = vunpack.c.l.b16 %v77
  %v92 = vpack.c.b16 %v88, %v87
  %v93 = vpack.c.b16 %v90, %v89
  %v94 = vpack.c.b16 %v91, %v91
  %vm97 = vcmask 293888
  %v99 = vsel %vm97, %v57, 0
  %v102 = vsel %vm97, %v58, 0
  %v105 = vsel %vm97, %v59, 0
  %v108 = vsel %vm97, %v60, 0
  %v111 = vsel %vm97, %v61, 0
  %v114 = vsel %vm97, %v62, 0
  %v117 = vsel %vm97, %v63, 0
  %v120 = vsel %vm97, %v64, 0
  %v123 = vsel %vm97, %v65, 0
  %v126 = vsel %vm97, %v66, 0
  %v129 = vsel %vm97, %v67, 0
  %v132 = vsel %vm97, %v68, 0
  %v135 = vsel %vm97, %v69, 0
  %v138 = vsel %vm97, %v70, 0
  %v141 = vsel %vm97, %v71, 0
  %v144 = vsel %vm97, %v72, 0
  %vm146 = vcmask 1041408
  %v148 = vsel %vm146, %v94, 0
  %150 = vmatpush.bf16.msra.mxu0 0
  %151 = vmatpush.bf16.msra.mxu0 0
  %152 = vmatpush.bf16.msra.mxu0 0
  %153 = vmatpush.bf16.msra.mxu0 0
  %154 = vmatpush.bf16.msra.mxu0 0
  %155 = vmatpush.bf16.msra.mxu0 %v148
  %156 = vmatpush.bf16.msra.mxu0 %v93
  %157 = vmatpush.bf16.msra.mxu0 %v92
  %158 = vmatmul.f32.gmra.mxu0 %v99
  %v159 = vpop.f32.mrf.mxu0
  %v160 = vadd.f32 %v80, %v159
  %161 = vmatmul.f32.gmra.mxu0 %v102
  %v162 = vpop.f32.mrf.mxu0
  %v163 = vadd.f32 %v80, %v162
  %164 = vmatmul.f32.gmra.mxu0 %v105
  %v165 = vpop.f32.mrf.mxu0
  %v166 = vadd.f32 %v80, %v165
  %167 = vmatmul.f32.gmra.mxu0 %v108
  %v168 = vpop.f32.mrf.mxu0
  %v169 = vadd.f32 %v80, %v168
  %170 = vmatmul.f32.gmra.mxu0 %v111
  %v171 = vpop.f32.mrf.mxu0
  %v172 = vadd.f32 %v80, %v171
  %173 = vmatmul.f32.gmra.mxu0 %v114
  %v174 = vpop.f32.mrf.mxu0
  %v175 = vadd.f32 %v80, %v174
  %176 = vmatmul.f32.gmra.mxu0 %v117
  %v177 = vpop.f32.mrf.mxu0
  %v178 = vadd.f32 %v80, %v177
  %179 = vmatmul.f32.gmra.mxu0 %v120
  %v180 = vpop.f32.mrf.mxu0
  %v181 = vadd.f32 %v80, %v180
  %182 = vmatmul.f32.gmra.mxu0 %v123
  %v183 = vpop.f32.mrf.mxu0
  %v184 = vadd.f32 %v80, %v183
  %185 = vmatmul.f32.gmra.mxu0 %v126
  %v186 = vpop.f32.mrf.mxu0
  %v187 = vadd.f32 %v80, %v186
  %188 = vmatmul.f32.gmra.mxu0 %v129
  %v189 = vpop.f32.mrf.mxu0
  %v190 = vadd.f32 %v80, %v189
  %191 = vmatmul.f32.gmra.mxu0 %v132
  %v192 = vpop.f32.mrf.mxu0
  %v193 = vadd.f32 %v80, %v192
  %194 = vmatmul.f32.gmra.mxu0 %v135
  %v195 = vpop.f32.mrf.mxu0
  %v196 = vadd.f32 %v80, %v195
  %197 = vmatmul.f32.gmra.mxu0 %v138
  %v198 = vpop.f32.mrf.mxu0
  %v199 = vadd.f32 %v80, %v198
  %200 = vmatmul.f32.gmra.mxu0 %v141
  %v201 = vpop.f32.mrf.mxu0
  %v202 = vadd.f32 %v80, %v201
  %203 = vmatmul.f32.gmra.mxu0 %v144
  %v204 = vpop.f32.mrf.mxu0
  %v205 = vadd.f32 %v80, %v204
  %206 = vdwg.mxu0
  %v207 = vmax.f32 %v160, 0.0
  %v208 = vmax.f32 %v163, 0.0
  %v209 = vmax.f32 %v166, 0.0
  %v210 = vmax.f32 %v169, 0.0
  %v211 = vmax.f32 %v172, 0.0
  %v212 = vmax.f32 %v175, 0.0
  %v213 = vmax.f32 %v178, 0.0
  %v214 = vmax.f32 %v181, 0.0
  %v215 = vmax.f32 %v184, 0.0
  %v216 = vmax.f32 %v187, 0.0
  %v217 = vmax.f32 %v190, 0.0
  %v218 = vmax.f32 %v193, 0.0
  %v219 = vmax.f32 %v196, 0.0
  %v220 = vmax.f32 %v199, 0.0
  %v221 = vmax.f32 %v202, 0.0
  %v222 = vmax.f32 %v205, 0.0
  %v223 = vld [vmem:[%s6] sm:$0xf]
  %v224 = vld [vmem:[%s6 + $0x4] sm:$0xf]
  %v225 = vld [vmem:[%s7] sm:$0x1]
  %v227 = vperm.slane %v225, 0
  %v231 = vunpack.c.l.b16 %v223
  %v232 = vunpack.c.l.b16 %v224
  %v233 = vpack.c.b16 %v232, %v231
  %vm235 = vcmask 130048
  %v237 = vsel %vm235, %v207, 0
  %v240 = vsel %vm235, %v208, 0
  %v243 = vsel %vm235, %v209, 0
  %v246 = vsel %vm235, %v210, 0
  %v249 = vsel %vm235, %v211, 0
  %v252 = vsel %vm235, %v212, 0
  %v255 = vsel %vm235, %v213, 0
  %v258 = vsel %vm235, %v214, 0
  %v261 = vsel %vm235, %v215, 0
  %v264 = vsel %vm235, %v216, 0
  %v267 = vsel %vm235, %v217, 0
  %v270 = vsel %vm235, %v218, 0
  %v273 = vsel %vm235, %v219, 0
  %v276 = vsel %vm235, %v220, 0
  %v279 = vsel %vm235, %v221, 0
  %v282 = vsel %vm235, %v222, 0
  %284 = vmatpush.bf16.msra.mxu0 0
  %285 = vmatpush.bf16.msra.mxu0 0
  %286 = vmatpush.bf16.msra.mxu0 0
  %287 = vmatpush.bf16.msra.mxu0 0
  %288 = vmatpush.bf16.msra.mxu0 0
  %289 = vmatpush.bf16.msra.mxu0 0
  %290 = vmatpush.bf16.msra.mxu0 0
  %291 = vmatpush.bf16.msra.mxu0 %v233
  %292 = vmatmul.f32.gmra.mxu0 %v237
  %v293 = vpop.f32.mrf.mxu0
  %v294 = vadd.f32 %v227, %v293
  %295 = vmatmul.f32.gmra.mxu0 %v240
  %v296 = vpop.f32.mrf.mxu0
  %v297 = vadd.f32 %v227, %v296
  %298 = vmatmul.f32.gmra.mxu0 %v243
  %v299 = vpop.f32.mrf.mxu0
  %v300 = vadd.f32 %v227, %v299
  %301 = vmatmul.f32.gmra.mxu0 %v246
  %v302 = vpop.f32.mrf.mxu0
  %v303 = vadd.f32 %v227, %v302
  %304 = vmatmul.f32.gmra.mxu0 %v249
  %v305 = vpop.f32.mrf.mxu0
  %v306 = vadd.f32 %v227, %v305
  %307 = vmatmul.f32.gmra.mxu0 %v252
  %v308 = vpop.f32.mrf.mxu0
  %v309 = vadd.f32 %v227, %v308
  %310 = vmatmul.f32.gmra.mxu0 %v255
  %v311 = vpop.f32.mrf.mxu0
  %v312 = vadd.f32 %v227, %v311
  %313 = vmatmul.f32.gmra.mxu0 %v258
  %v314 = vpop.f32.mrf.mxu0
  %v315 = vadd.f32 %v227, %v314
  %316 = vmatmul.f32.gmra.mxu0 %v261
  %v317 = vpop.f32.mrf.mxu0
  %v318 = vadd.f32 %v227, %v317
  %319 = vmatmul.f32.gmra.mxu0 %v264
  %v320 = vpop.f32.mrf.mxu0
  %v321 = vadd.f32 %v227, %v320
  %322 = vmatmul.f32.gmra.mxu0 %v267
  %v323 = vpop.f32.mrf.mxu0
  %v324 = vadd.f32 %v227, %v323
  %325 = vmatmul.f32.gmra.mxu0 %v270
  %v326 = vpop.f32.mrf.mxu0
  %v327 = vadd.f32 %v227, %v326
  %328 = vmatmul.f32.gmra.mxu0 %v273
  %v329 = vpop.f32.mrf.mxu0
  %v330 = vadd.f32 %v227, %v329
  %331 = vmatmul.f32.gmra.mxu0 %v276
  %v332 = vpop.f32.mrf.mxu0
  %v333 = vadd.f32 %v227, %v332
  %334 = vmatmul.f32.gmra.mxu0 %v279
  %v335 = vpop.f32.mrf.mxu0
  %v336 = vadd.f32 %v227, %v335
  %337 = vmatmul.f32.gmra.mxu0 %v282
  %v338 = vpop.f32.mrf.mxu0
  %v339 = vadd.f32 %v227, %v338
  %340 = vdwg.mxu0
  %vm341 = vcmask 64512
  %342 = vst.msk [vmem:[%s16] sm:$0xff] %vm341, %v294
  %343 = vst.msk [vmem:[%s16 + $0x8] sm:$0xff] %vm341, %v297
  %344 = vst.msk [vmem:[%s16 + $0x10] sm:$0xff] %vm341, %v300
  %345 = vst.msk [vmem:[%s16 + $0x18] sm:$0xff] %vm341, %v303
  %346 = vst.msk [vmem:[%s16 + $0x20] sm:$0xff] %vm341, %v306
  %347 = vst.msk [vmem:[%s16 + $0x28] sm:$0xff] %vm341, %v309
  %348 = vst.msk [vmem:[%s16 + $0x30] sm:$0xff] %vm341, %v312
  %349 = vst.msk [vmem:[%s16 + $0x38] sm:$0xff] %vm341, %v315
  %350 = vst.msk [vmem:[%s16 + $0x40] sm:$0xff] %vm341, %v318
  %351 = vst.msk [vmem:[%s16 + $0x48] sm:$0xff] %vm341, %v321
  %352 = vst.msk [vmem:[%s16 + $0x50] sm:$0xff] %vm341, %v324
  %353 = vst.msk [vmem:[%s16 + $0x58] sm:$0xff] %vm341, %v327
  %354 = vst.msk [vmem:[%s16 + $0x60] sm:$0xff] %vm341, %v330
  %355 = vst.msk [vmem:[%s16 + $0x68] sm:$0xff] %vm341, %v333
  %356 = vst.msk [vmem:[%s16 + $0x70] sm:$0xff] %vm341, %v336
  %357 = vst.msk [vmem:[%s16 + $0x78] sm:$0xff] %vm341, %v339
  %v358 = vld [vmem:[%s1] sm:$0xf]
  %v359 = vld [vmem:[%s1 + $0x4] sm:$0xf]
  %v360 = vld [vmem:[%s1 + $0x8] sm:$0xf]
  %v361 = vld [vmem:[%s1 + $0xc] sm:$0xf]
  %v366 = vunpack.c.l.b16 %v358
  %v367 = vunpack.c.l.b16 %v359
  %v368 = vunpack.c.l.b16 %v360
  %v369 = vunpack.c.l.b16 %v361
  %v370 = vpack.c.b16 %v367, %v366
  %v371 = vpack.c.b16 %v369, %v368
  %374 = vmatpush.msra.mxu0 %v222
  %375 = vmatpush.msra.mxu0 %v221
  %376 = vmatpush.msra.mxu0 %v220
  %377 = vmatpush.msra.mxu0 %v219
  %378 = vmatpush.msra.mxu0 %v218
  %379 = vmatpush.msra.mxu0 %v217
  %380 = vmatpush.msra.mxu0 %v216
  %381 = vmatpush.msra.mxu0 %v215
  %382 = vmatpush.msra.mxu0 %v214
  %383 = vmatpush.msra.mxu0 %v213
  %384 = vmatpush.msra.mxu0 %v212
  %385 = vmatpush.msra.mxu0 %v211
  %386 = vmatpush.msra.mxu0 %v210
  %387 = vmatpush.msra.mxu0 %v209
  %388 = vmatpush.msra.mxu0 %v208
  %389 = vmatpush.msra.mxu0 %v207
  %390 = vmatmul.bf16.gmra.mxu0 %v370
  %v391 = vpop.f32.mrf.mxu0
  %v392 = vadd.f32 0.0, %v391
  %v393 = vpop.f32.mrf.mxu0
  %v394 = vadd.f32 0.0, %v393
  %395 = vmatmul.bf16.gmra.mxu0 %v371
  %v396 = vpop.f32.mrf.mxu0
  %v397 = vadd.f32 0.0, %v396
  %v398 = vpop.f32.mrf.mxu0
  %v399 = vadd.f32 0.0, %v398
  %400 = vdwg.mxu0
  %v401 = vld [vmem:[%s8] sm:$0xf]
  %v402 = vld [vmem:[%s8 + $0x4] sm:$0xf]
  %v403 = vld [vmem:[%s9] sm:$0x1]
  %v405 = vperm.slane %v403, 0
  %v409 = vunpack.c.l.b16 %v401
  %v410 = vunpack.c.l.b16 %v402
  %v411 = vpack.c.b16 %v410, %v409
  %v414 = vsel %vm235, %v392, 0
  %v417 = vsel %vm235, %v394, 0
  %v420 = vsel %vm235, %v397, 0
  %v423 = vsel %vm235, %v399, 0
  %425 = vmatpush.bf16.msra.mxu0 0
  %426 = vmatpush.bf16.msra.mxu0 0
  %427 = vmatpush.bf16.msra.mxu0 0
  %428 = vmatpush.bf16.msra.mxu0 0
  %429 = vmatpush.bf16.msra.mxu0 0
  %430 = vmatpush.bf16.msra.mxu0 0
  %431 = vmatpush.bf16.msra.mxu0 0
  %432 = vmatpush.bf16.msra.mxu0 %v411
  %433 = vmatmul.f32.gmra.mxu0 %v414
  %v434 = vpop.f32.mrf.mxu0
  %v435 = vadd.f32 %v405, %v434
  %436 = vmatmul.f32.gmra.mxu0 %v417
  %v437 = vpop.f32.mrf.mxu0
  %v438 = vadd.f32 %v405, %v437
  %439 = vmatmul.f32.gmra.mxu0 %v420
  %v440 = vpop.f32.mrf.mxu0
  %v441 = vadd.f32 %v405, %v440
  %442 = vmatmul.f32.gmra.mxu0 %v423
  %v443 = vpop.f32.mrf.mxu0
  %v444 = vadd.f32 %v405, %v443
  %445 = vdwg.mxu0
  %v446 = vmax.f32 %v435, 0.0
  %v447 = vmax.f32 %v438, 0.0
  %v448 = vmax.f32 %v441, 0.0
  %v449 = vmax.f32 %v444, 0.0
  %v450 = vld [vmem:[%s10] sm:$0xff]
  %v451 = vld [vmem:[%s10 + $0x8] sm:$0xf]
  %v452 = vld [vmem:[%s10 + $0xc] sm:$0xff]
  %v453 = vld [vmem:[%s10 + $0x14] sm:$0xf]
  %v454 = vld [vmem:[%s10 + $0x18] sm:$0xff]
  %v455 = vld [vmem:[%s10 + $0x20] sm:$0xf]
  %v456 = vld [vmem:[%s10 + $0x24] sm:$0xff]
  %v457 = vld [vmem:[%s10 + $0x2c] sm:$0xf]
  %v458 = vld [vmem:[%s11] sm:$0x7]
  %v460 = vperm.slane %v458, 0
  %v461 = vperm.slane %v458, 1
  %v462 = vperm.slane %v458, 2
  %v474 = vunpack.c.l.b16 %v450
  %v475 = vunpack.c.h.b16 %v450
  %v476 = vunpack.c.l.b16 %v451
  %v477 = vunpack.c.l.b16 %v452
  %v478 = vunpack.c.h.b16 %v452
  %v479 = vunpack.c.l.b16 %v453
  %v480 = vunpack.c.l.b16 %v454
  %v481 = vunpack.c.h.b16 %v454
  %v482 = vunpack.c.l.b16 %v455
  %v483 = vunpack.c.l.b16 %v456
  %v484 = vunpack.c.h.b16 %v456
  %v485 = vunpack.c.l.b16 %v457
  %v486 = vpack.c.b16 %v477, %v474
  %v487 = vpack.c.b16 %v478, %v475
  %v488 = vpack.c.b16 %v479, %v476
  %v489 = vpack.c.b16 %v483, %v480
  %v490 = vpack.c.b16 %v484, %v481
  %v491 = vpack.c.b16 %v485, %v482
  %vm498 = vcmask 261120
  %v500 = vsel %vm498, %v446, 0
  %v503 = vsel %vm498, %v447, 0
  %v506 = vsel %vm498, %v448, 0
  %v509 = vsel %vm498, %v449, 0
  %511 = vmatpush.bf16.msra.mxu0 0
  %512 = vmatpush.bf16.msra.mxu0 0
  %513 = vmatpush.bf16.msra.mxu0 0
  %514 = vmatpush.bf16.msra.mxu0 0
  %515 = vmatpush.bf16.msra.mxu0 0
  %516 = vmatpush.bf16.msra.mxu0 0
  %517 = vmatpush.bf16.msra.mxu0 %v489
  %518 = vmatpush.bf16.msra.mxu0 %v486
  %519 = vmatmul.f32.gmra.mxu0 %v500
  %v520 = vpop.f32.mrf.mxu0
  %v521 = vadd.f32 %v460, %v520
  %522 = vmatmul.f32.gmra.mxu0 %v503
  %v523 = vpop.f32.mrf.mxu0
  %v524 = vadd.f32 %v460, %v523
  %525 = vmatmul.f32.gmra.mxu0 %v506
  %v526 = vpop.f32.mrf.mxu0
  %v527 = vadd.f32 %v460, %v526
  %528 = vmatmul.f32.gmra.mxu0 %v509
  %v529 = vpop.f32.mrf.mxu0
  %v530 = vadd.f32 %v460, %v529
  %531 = vdwg.mxu0
  %532 = vmatpush.bf16.msra.mxu0 0
  %533 = vmatpush.bf16.msra.mxu0 0
  %534 = vmatpush.bf16.msra.mxu0 0
  %535 = vmatpush.bf16.msra.mxu0 0
  %536 = vmatpush.bf16.msra.mxu0 0
  %537 = vmatpush.bf16.msra.mxu0 0
  %538 = vmatpush.bf16.msra.mxu0 %v490
  %539 = vmatpush.bf16.msra.mxu0 %v487
  %540 = vmatmul.f32.gmra.mxu0 %v500
  %v541 = vpop.f32.mrf.mxu0
  %v542 = vadd.f32 %v461, %v541
  %543 = vmatmul.f32.gmra.mxu0 %v503
  %v544 = vpop.f32.mrf.mxu0
  %v545 = vadd.f32 %v461, %v544
  %546 = vmatmul.f32.gmra.mxu0 %v506
  %v547 = vpop.f32.mrf.mxu0
  %v548 = vadd.f32 %v461, %v547
  %549 = vmatmul.f32.gmra.mxu0 %v509
  %v550 = vpop.f32.mrf.mxu0
  %v551 = vadd.f32 %v461, %v550
  %552 = vdwg.mxu0
  %553 = vmatpush.bf16.msra.mxu0 0
  %554 = vmatpush.bf16.msra.mxu0 0
  %555 = vmatpush.bf16.msra.mxu0 0
  %556 = vmatpush.bf16.msra.mxu0 0
  %557 = vmatpush.bf16.msra.mxu0 0
  %558 = vmatpush.bf16.msra.mxu0 0
  %559 = vmatpush.bf16.msra.mxu0 %v491
  %560 = vmatpush.bf16.msra.mxu0 %v488
  %561 = vmatmul.f32.gmra.mxu0 %v500
  %v562 = vpop.f32.mrf.mxu0
  %v563 = vadd.f32 %v462, %v562
  %564 = vmatmul.f32.gmra.mxu0 %v503
  %v565 = vpop.f32.mrf.mxu0
  %v566 = vadd.f32 %v462, %v565
  %567 = vmatmul.f32.gmra.mxu0 %v506
  %v568 = vpop.f32.mrf.mxu0
  %v569 = vadd.f32 %v462, %v568
  %570 = vmatmul.f32.gmra.mxu0 %v509
  %v571 = vpop.f32.mrf.mxu0
  %v572 = vadd.f32 %v462, %v571
  %573 = vdwg.mxu0
  %v574 = vmax.f32 %v521, 0.0
  %v575 = vmax.f32 %v542, 0.0
  %v576 = vmax.f32 %v524, 0.0
  %v577 = vmax.f32 %v545, 0.0
  %v578 = vmax.f32 %v527, 0.0
  %v579 = vmax.f32 %v548, 0.0
  %v580 = vmax.f32 %v530, 0.0
  %v581 = vmax.f32 %v551, 0.0
  %582 = vst.msk [vmem:[%s17] sm:$0xff] %vm341, %v563
  %583 = vst.msk [vmem:[%s17 + $0x8] sm:$0xff] %vm341, %v566
  %584 = vst.msk [vmem:[%s17 + $0x10] sm:$0xff] %vm341, %v569
  %585 = vst.msk [vmem:[%s17 + $0x18] sm:$0xff] %vm341, %v572
  %v586 = vld [vmem:[%s3] sm:$0xf]
  %v587 = vld [vmem:[%s3 + $0x4] sm:$0xf]
  %v588 = vld [vmem:[%s3 + $0x8] sm:$0xf]
  %v589 = vld [vmem:[%s3 + $0xc] sm:$0xf]
  %v590 = vld [vmem:[%s3 + $0x10] sm:$0xf]
  %v591 = vld [vmem:[%s3 + $0x14] sm:$0xf]
  %v592 = vld [vmem:[%s3 + $0x18] sm:$0xf]
  %v593 = vld [vmem:[%s3 + $0x1c] sm:$0xf]
  %v594 = vld [vmem:[%s3 + $0x20] sm:$0xf]
  %v595 = vld [vmem:[%s3 + $0x24] sm:$0xf]
  %v596 = vld [vmem:[%s3 + $0x28] sm:$0xf]
  %v597 = vld [vmem:[%s3 + $0x2c] sm:$0xf]
  %v598 = vld [vmem:[%s3 + $0x30] sm:$0xf]
  %v599 = vld [vmem:[%s3 + $0x34] sm:$0xf]
  %v600 = vld [vmem:[%s3 + $0x38] sm:$0xf]
  %v601 = vld [vmem:[%s3 + $0x3c] sm:$0xf]
  %v602 = vld [vmem:[%s3 + $0x40] sm:$0xf]
  %v603 = vld [vmem:[%s3 + $0x44] sm:$0xf]
  %v604 = vld [vmem:[%s3 + $0x48] sm:$0xf]
  %v605 = vld [vmem:[%s3 + $0x4c] sm:$0xf]
  %v606 = vld [vmem:[%s3 + $0x50] sm:$0xf]
  %v607 = vld [vmem:[%s3 + $0x54] sm:$0xf]
  %v608 = vld [vmem:[%s3 + $0x58] sm:$0xf]
  %v609 = vld [vmem:[%s3 + $0x5c] sm:$0xf]
  %v610 = vld [vmem:[%s3 + $0x60] sm:$0xf]
  %v611 = vld [vmem:[%s3 + $0x64] sm:$0xf]
  %v612 = vld [vmem:[%s3 + $0x68] sm:$0xf]
  %v613 = vld [vmem:[%s3 + $0x6c] sm:$0xf]
  %v614 = vld [vmem:[%s3 + $0x70] sm:$0xf]
  %v615 = vld [vmem:[%s3 + $0x74] sm:$0xf]
  %v616 = vld [vmem:[%s3 + $0x78] sm:$0xf]
  %v617 = vld [vmem:[%s3 + $0x7c] sm:$0xf]
  %v618 = vld [vmem:[%s3 + $0x80] sm:$0xf]
  %v619 = vld [vmem:[%s3 + $0x84] sm:$0xf]
  %v620 = vld [vmem:[%s3 + $0x88] sm:$0xf]
  %v621 = vld [vmem:[%s3 + $0x8c] sm:$0xf]
  %v658 = vunpack.c.l.b16 %v586
  %v659 = vunpack.c.l.b16 %v587
  %v660 = vunpack.c.l.b16 %v588
  %v661 = vunpack.c.l.b16 %v589
  %v662 = vunpack.c.l.b16 %v590
  %v663 = vunpack.c.l.b16 %v591
  %v664 = vunpack.c.l.b16 %v592
  %v665 = vunpack.c.l.b16 %v593
  %v666 = vunpack.c.l.b16 %v594
  %v667 = vunpack.c.l.b16 %v595
  %v668 = vunpack.c.l.b16 %v596
  %v669 = vunpack.c.l.b16 %v597
  %v670 = vunpack.c.l.b16 %v598
  %v671 = vunpack.c.l.b16 %v599
  %v672 = vunpack.c.l.b16 %v600
  %v673 = vunpack.c.l.b16 %v601
  %v674 = vunpack.c.l.b16 %v602
  %v675 = vunpack.c.l.b16 %v603
  %v676 = vunpack.c.l.b16 %v604
  %v677 = vunpack.c.l.b16 %v605
  %v678 = vunpack.c.l.b16 %v606
  %v679 = vunpack.c.l.b16 %v607
  %v680 = vunpack.c.l.b16 %v608
  %v681 = vunpack.c.l.b16 %v609
  %v682 = vunpack.c.l.b16 %v610
  %v683 = vunpack.c.l.b16 %v611
  %v684 = vunpack.c.l.b16 %v612
  %v685 = vunpack.c.l.b16 %v613
  %v686 = vunpack.c.l.b16 %v614
  %v687 = vunpack.c.l.b16 %v615
  %v688 = vunpack.c.l.b16 %v616
  %v689 = vunpack.c.l.b16 %v617
  %v690 = vunpack.c.l.b16 %v618
  %v691 = vunpack.c.l.b16 %v619
  %v692 = vunpack.c.l.b16 %v620
  %v693 = vunpack.c.l.b16 %v621
  %v694 = vpack.c.b16 %v659, %v658
  %v695 = vpack.c.b16 %v661, %v660
  %v696 = vpack.c.b16 %v663, %v662
  %v697 = vpack.c.b16 %v665, %v664
  %v698 = vpack.c.b16 %v667, %v666
  %v699 = vpack.c.b16 %v669, %v668
  %v700 = vpack.c.b16 %v671, %v670
  %v701 = vpack.c.b16 %v673, %v672
  %v702 = vpack.c.b16 %v675, %v674
  %v703 = vpack.c.b16 %v677, %v676
  %v704 = vpack.c.b16 %v679, %v678
  %v705 = vpack.c.b16 %v681, %v680
  %v706 = vpack.c.b16 %v683, %v682
  %v707 = vpack.c.b16 %v685, %v684
  %v708 = vpack.c.b16 %v687, %v686
  %v709 = vpack.c.b16 %v689, %v688
  %v710 = vpack.c.b16 %v691, %v690
  %v711 = vpack.c.b16 %v693, %v692
  %v713 = vsel %vm498, %v694, 0
  %v716 = vsel %vm498, %v695, 0
  %v719 = vsel %vm498, %v696, 0
  %v722 = vsel %vm498, %v697, 0
  %v725 = vsel %vm498, %v698, 0
  %v728 = vsel %vm498, %v699, 0
  %v731 = vsel %vm498, %v700, 0
  %v734 = vsel %vm498, %v701, 0
  %v737 = vsel %vm498, %v702, 0
  %v740 = vsel %vm498, %v703, 0
  %v743 = vsel %vm498, %v704, 0
  %v746 = vsel %vm498, %v705, 0
  %v749 = vsel %vm498, %v706, 0
  %v752 = vsel %vm498, %v707, 0
  %v755 = vsel %vm498, %v708, 0
  %v758 = vsel %vm498, %v709, 0
  %v761 = vsel %vm498, %v710, 0
  %v764 = vsel %vm498, %v711, 0
  %766 = vmatpush.msra.mxu0 0.0
  %767 = vmatpush.msra.mxu0 0.0
  %768 = vmatpush.msra.mxu0 0.0
  %769 = vmatpush.msra.mxu0 0.0
  %770 = vmatpush.msra.mxu0 0.0
  %771 = vmatpush.msra.mxu0 0.0
  %772 = vmatpush.msra.mxu0 0.0
  %773 = vmatpush.msra.mxu0 0.0
  %774 = vmatpush.msra.mxu0 0.0
  %775 = vmatpush.msra.mxu0 0.0
  %776 = vmatpush.msra.mxu0 0.0
  %777 = vmatpush.msra.mxu0 0.0
  %778 = vmatpush.msra.mxu0 %v580
  %779 = vmatpush.msra.mxu0 %v578
  %780 = vmatpush.msra.mxu0 %v576
  %781 = vmatpush.msra.mxu0 %v574
  %782 = vmatmul.bf16.gmra.mxu0 %v713
  %v783 = vpop.f32.mrf.mxu0
  %v784 = vadd.f32 0.0, %v783
  %v785 = vpop.f32.mrf.mxu0
  %v786 = vadd.f32 0.0, %v785
  %787 = vmatmul.bf16.gmra.mxu0 %v716
  %v788 = vpop.f32.mrf.mxu0
  %v789 = vadd.f32 0.0, %v788
  %v790 = vpop.f32.mrf.mxu0
  %v791 = vadd.f32 0.0, %v790
  %792 = vmatmul.bf16.gmra.mxu0 %v719
  %v793 = vpop.f32.mrf.mxu0
  %v794 = vadd.f32 0.0, %v793
  %v795 = vpop.f32.mrf.mxu0
  %v796 = vadd.f32 0.0, %v795
  %797 = vmatmul.bf16.gmra.mxu0 %v722
  %v798 = vpop.f32.mrf.mxu0
  %v799 = vadd.f32 0.0, %v798
  %v800 = vpop.f32.mrf.mxu0
  %v801 = vadd.f32 0.0, %v800
  %802 = vmatmul.bf16.gmra.mxu0 %v725
  %v803 = vpop.f32.mrf.mxu0
  %v804 = vadd.f32 0.0, %v803
  %v805 = vpop.f32.mrf.mxu0
  %v806 = vadd.f32 0.0, %v805
  %807 = vmatmul.bf16.gmra.mxu0 %v728
  %v808 = vpop.f32.mrf.mxu0
  %v809 = vadd.f32 0.0, %v808
  %v810 = vpop.f32.mrf.mxu0
  %v811 = vadd.f32 0.0, %v810
  %812 = vmatmul.bf16.gmra.mxu0 %v731
  %v813 = vpop.f32.mrf.mxu0
  %v814 = vadd.f32 0.0, %v813
  %v815 = vpop.f32.mrf.mxu0
  %v816 = vadd.f32 0.0, %v815
  %817 = vmatmul.bf16.gmra.mxu0 %v734
  %v818 = vpop.f32.mrf.mxu0
  %v819 = vadd.f32 0.0, %v818
  %v820 = vpop.f32.mrf.mxu0
  %v821 = vadd.f32 0.0, %v820
  %822 = vmatmul.bf16.gmra.mxu0 %v737
  %v823 = vpop.f32.mrf.mxu0
  %v824 = vadd.f32 0.0, %v823
  %v825 = vpop.f32.mrf.mxu0
  %v826 = vadd.f32 0.0, %v825
  %827 = vmatmul.bf16.gmra.mxu0 %v740
  %v828 = vpop.f32.mrf.mxu0
  %v829 = vadd.f32 0.0, %v828
  %v830 = vpop.f32.mrf.mxu0
  %v831 = vadd.f32 0.0, %v830
  %832 = vmatmul.bf16.gmra.mxu0 %v743
  %v833 = vpop.f32.mrf.mxu0
  %v834 = vadd.f32 0.0, %v833
  %v835 = vpop.f32.mrf.mxu0
  %v836 = vadd.f32 0.0, %v835
  %837 = vmatmul.bf16.gmra.mxu0 %v746
  %v838 = vpop.f32.mrf.mxu0
  %v839 = vadd.f32 0.0, %v838
  %v840 = vpop.f32.mrf.mxu0
  %v841 = vadd.f32 0.0, %v840
  %842 = vmatmul.bf16.gmra.mxu0 %v749
  %v843 = vpop.f32.mrf.mxu0
  %v844 = vadd.f32 0.0, %v843
  %v845 = vpop.f32.mrf.mxu0
  %v846 = vadd.f32 0.0, %v845
  %847 = vmatmul.bf16.gmra.mxu0 %v752
  %v848 = vpop.f32.mrf.mxu0
  %v849 = vadd.f32 0.0, %v848
  %v850 = vpop.f32.mrf.mxu0
  %v851 = vadd.f32 0.0, %v850
  %852 = vmatmul.bf16.gmra.mxu0 %v755
  %v853 = vpop.f32.mrf.mxu0
  %v854 = vadd.f32 0.0, %v853
  %v855 = vpop.f32.mrf.mxu0
  %v856 = vadd.f32 0.0, %v855
  %857 = vmatmul.bf16.gmra.mxu0 %v758
  %v858 = vpop.f32.mrf.mxu0
  %v859 = vadd.f32 0.0, %v858
  %v860 = vpop.f32.mrf.mxu0
  %v861 = vadd.f32 0.0, %v860
  %862 = vmatmul.bf16.gmra.mxu0 %v761
  %v863 = vpop.f32.mrf.mxu0
  %v864 = vadd.f32 0.0, %v863
  %v865 = vpop.f32.mrf.mxu0
  %v866 = vadd.f32 0.0, %v865
  %867 = vmatmul.bf16.gmra.mxu0 %v764
  %v868 = vpop.f32.mrf.mxu0
  %v869 = vadd.f32 0.0, %v868
  %v870 = vpop.f32.mrf.mxu0
  %v871 = vadd.f32 0.0, %v870
  %872 = vdwg.mxu0
  %873 = vmatpush.msra.mxu0 0.0
  %874 = vmatpush.msra.mxu0 0.0
  %875 = vmatpush.msra.mxu0 0.0
  %876 = vmatpush.msra.mxu0 0.0
  %877 = vmatpush.msra.mxu0 0.0
  %878 = vmatpush.msra.mxu0 0.0
  %879 = vmatpush.msra.mxu0 0.0
  %880 = vmatpush.msra.mxu0 0.0
  %881 = vmatpush.msra.mxu0 0.0
  %882 = vmatpush.msra.mxu0 0.0
  %883 = vmatpush.msra.mxu0 0.0
  %884 = vmatpush.msra.mxu0 0.0
  %885 = vmatpush.msra.mxu0 %v581
  %886 = vmatpush.msra.mxu0 %v579
  %887 = vmatpush.msra.mxu0 %v577
  %888 = vmatpush.msra.mxu0 %v575
  %889 = vmatmul.bf16.gmra.mxu0 %v713
  %v890 = vpop.f32.mrf.mxu0
  %v891 = vadd.f32 0.0, %v890
  %v892 = vpop.f32.mrf.mxu0
  %v893 = vadd.f32 0.0, %v892
  %894 = vmatmul.bf16.gmra.mxu0 %v716
  %v895 = vpop.f32.mrf.mxu0
  %v896 = vadd.f32 0.0, %v895
  %v897 = vpop.f32.mrf.mxu0
  %v898 = vadd.f32 0.0, %v897
  %899 = vmatmul.bf16.gmra.mxu0 %v719
  %v900 = vpop.f32.mrf.mxu0
  %v901 = vadd.f32 0.0, %v900
  %v902 = vpop.f32.mrf.mxu0
  %v903 = vadd.f32 0.0, %v902
  %904 = vmatmul.bf16.gmra.mxu0 %v722
  %v905 = vpop.f32.mrf.mxu0
  %v906 = vadd.f32 0.0, %v905
  %v907 = vpop.f32.mrf.mxu0
  %v908 = vadd.f32 0.0, %v907
  %909 = vmatmul.bf16.gmra.mxu0 %v725
  %v910 = vpop.f32.mrf.mxu0
  %v911 = vadd.f32 0.0, %v910
  %v912 = vpop.f32.mrf.mxu0
  %v913 = vadd.f32 0.0, %v912
  %914 = vmatmul.bf16.gmra.mxu0 %v728
  %v915 = vpop.f32.mrf.mxu0
  %v916 = vadd.f32 0.0, %v915
  %v917 = vpop.f32.mrf.mxu0
  %v918 = vadd.f32 0.0, %v917
  %919 = vmatmul.bf16.gmra.mxu0 %v731
  %v920 = vpop.f32.mrf.mxu0
  %v921 = vadd.f32 0.0, %v920
  %v922 = vpop.f32.mrf.mxu0
  %v923 = vadd.f32 0.0, %v922
  %924 = vmatmul.bf16.gmra.mxu0 %v734
  %v925 = vpop.f32.mrf.mxu0
  %v926 = vadd.f32 0.0, %v925
  %v927 = vpop.f32.mrf.mxu0
  %v928 = vadd.f32 0.0, %v927
  %929 = vmatmul.bf16.gmra.mxu0 %v737
  %v930 = vpop.f32.mrf.mxu0
  %v931 = vadd.f32 0.0, %v930
  %v932 = vpop.f32.mrf.mxu0
  %v933 = vadd.f32 0.0, %v932
  %934 = vmatmul.bf16.gmra.mxu0 %v740
  %v935 = vpop.f32.mrf.mxu0
  %v936 = vadd.f32 0.0, %v935
  %v937 = vpop.f32.mrf.mxu0
  %v938 = vadd.f32 0.0, %v937
  %939 = vmatmul.bf16.gmra.mxu0 %v743
  %v940 = vpop.f32.mrf.mxu0
  %v941 = vadd.f32 0.0, %v940
  %v942 = vpop.f32.mrf.mxu0
  %v943 = vadd.f32 0.0, %v942
  %944 = vmatmul.bf16.gmra.mxu0 %v746
  %v945 = vpop.f32.mrf.mxu0
  %v946 = vadd.f32 0.0, %v945
  %v947 = vpop.f32.mrf.mxu0
  %v948 = vadd.f32 0.0, %v947
  %949 = vmatmul.bf16.gmra.mxu0 %v749
  %v950 = vpop.f32.mrf.mxu0
  %v951 = vadd.f32 0.0, %v950
  %v952 = vpop.f32.mrf.mxu0
  %v953 = vadd.f32 0.0, %v952
  %954 = vmatmul.bf16.gmra.mxu0 %v752
  %v955 = vpop.f32.mrf.mxu0
  %v956 = vadd.f32 0.0, %v955
  %v957 = vpop.f32.mrf.mxu0
  %v958 = vadd.f32 0.0, %v957
  %959 = vmatmul.bf16.gmra.mxu0 %v755
  %v960 = vpop.f32.mrf.mxu0
  %v961 = vadd.f32 0.0, %v960
  %v962 = vpop.f32.mrf.mxu0
  %v963 = vadd.f32 0.0, %v962
  %964 = vmatmul.bf16.gmra.mxu0 %v758
  %v965 = vpop.f32.mrf.mxu0
  %v966 = vadd.f32 0.0, %v965
  %v967 = vpop.f32.mrf.mxu0
  %v968 = vadd.f32 0.0, %v967
  %969 = vmatmul.bf16.gmra.mxu0 %v761
  %v970 = vpop.f32.mrf.mxu0
  %v971 = vadd.f32 0.0, %v970
  %v972 = vpop.f32.mrf.mxu0
  %v973 = vadd.f32 0.0, %v972
  %974 = vmatmul.bf16.gmra.mxu0 %v764
  %v975 = vpop.f32.mrf.mxu0
  %v976 = vadd.f32 0.0, %v975
  %v977 = vpop.f32.mrf.mxu0
  %v978 = vadd.f32 0.0, %v977
  %979 = vdwg.mxu0
  %980 = vst [vmem:[#allocation2] sm:$0xff] %v784
  %981 = vst [vmem:[#allocation2 + $0x8] sm:$0xff] %v891
  %982 = vst [vmem:[#allocation2 + $0x10] sm:$0xff] %v786
  %983 = vst [vmem:[#allocation2 + $0x18] sm:$0xff] %v893
  %984 = vst [vmem:[#allocation2 + $0x20] sm:$0xff] %v789
  %985 = vst [vmem:[#allocation2 + $0x28] sm:$0xff] %v896
  %986 = vst [vmem:[#allocation2 + $0x30] sm:$0xff] %v791
  %987 = vst [vmem:[#allocation2 + $0x38] sm:$0xff] %v898
  %988 = vst [vmem:[#allocation2 + $0x40] sm:$0xff] %v794
  %989 = vst [vmem:[#allocation2 + $0x48] sm:$0xff] %v901
  %990 = vst [vmem:[#allocation2 + $0x50] sm:$0xff] %v796
  %991 = vst [vmem:[#allocation2 + $0x58] sm:$0xff] %v903
  %992 = vst [vmem:[#allocation2 + $0x60] sm:$0xff] %v799
  %993 = vst [vmem:[#allocation2 + $0x68] sm:$0xff] %v906
  %994 = vst [vmem:[#allocation2 + $0x70] sm:$0xff] %v801
  %995 = vst [vmem:[#allocation2 + $0x78] sm:$0xff] %v908
  %996 = vst [vmem:[#allocation2 + $0x80] sm:$0xff] %v804
  %997 = vst [vmem:[#allocation2 + $0x88] sm:$0xff] %v911
  %998 = vst [vmem:[#allocation2 + $0x90] sm:$0xff] %v806
  %999 = vst [vmem:[#allocation2 + $0x98] sm:$0xff] %v913
  %1000 = vst [vmem:[#allocation2 + $0xa0] sm:$0xff] %v809
  %1001 = vst [vmem:[#allocation2 + $0xa8] sm:$0xff] %v916
  %1002 = vst [vmem:[#allocation2 + $0xb0] sm:$0xff] %v811
  %1003 = vst [vmem:[#allocation2 + $0xb8] sm:$0xff] %v918
  %1004 = vst [vmem:[#allocation2 + $0xc0] sm:$0xff] %v814
  %1005 = vst [vmem:[#allocation2 + $0xc8] sm:$0xff] %v921
  %1006 = vst [vmem:[#allocation2 + $0xd0] sm:$0xff] %v816
  %1007 = vst [vmem:[#allocation2 + $0xd8] sm:$0xff] %v923
  %1008 = vst [vmem:[#allocation2 + $0xe0] sm:$0xff] %v819
  %1009 = vst [vmem:[#allocation2 + $0xe8] sm:$0xff] %v926
  %1010 = vst [vmem:[#allocation2 + $0xf0] sm:$0xff] %v821
  %1011 = vst [vmem:[#allocation2 + $0xf8] sm:$0xff] %v928
  %1012 = vst [vmem:[#allocation2 + $0x100] sm:$0xff] %v824
  %1013 = vst [vmem:[#allocation2 + $0x108] sm:$0xff] %v931
  %1014 = vst [vmem:[#allocation2 + $0x110] sm:$0xff] %v826
  %1015 = vst [vmem:[#allocation2 + $0x118] sm:$0xff] %v933
  %1016 = vst [vmem:[#allocation2 + $0x120] sm:$0xff] %v829
  %1017 = vst [vmem:[#allocation2 + $0x128] sm:$0xff] %v936
  %1018 = vst [vmem:[#allocation2 + $0x130] sm:$0xff] %v831
  %1019 = vst [vmem:[#allocation2 + $0x138] sm:$0xff] %v938
  %1020 = vst [vmem:[#allocation2 + $0x140] sm:$0xff] %v834
  %1021 = vst [vmem:[#allocation2 + $0x148] sm:$0xff] %v941
  %1022 = vst [vmem:[#allocation2 + $0x150] sm:$0xff] %v836
  %1023 = vst [vmem:[#allocation2 + $0x158] sm:$0xff] %v943
  %1024 = vst [vmem:[#allocation2 + $0x160] sm:$0xff] %v839
  %1025 = vst [vmem:[#allocation2 + $0x168] sm:$0xff] %v946
  %1026 = vst [vmem:[#allocation2 + $0x170] sm:$0xff] %v841
  %1027 = vst [vmem:[#allocation2 + $0x178] sm:$0xff] %v948
  %1028 = vst [vmem:[#allocation2 + $0x180] sm:$0xff] %v844
  %1029 = vst [vmem:[#allocation2 + $0x188] sm:$0xff] %v951
  %1030 = vst [vmem:[#allocation2 + $0x190] sm:$0xff] %v846
  %1031 = vst [vmem:[#allocation2 + $0x198] sm:$0xff] %v953
  %1032 = vst [vmem:[#allocation2 + $0x1a0] sm:$0xff] %v849
  %1033 = vst [vmem:[#allocation2 + $0x1a8] sm:$0xff] %v956
  %1034 = vst [vmem:[#allocation2 + $0x1b0] sm:$0xff] %v851
  %1035 = vst [vmem:[#allocation2 + $0x1b8] sm:$0xff] %v958
  %1036 = vst [vmem:[#allocation2 + $0x1c0] sm:$0xff] %v854
  %1037 = vst [vmem:[#allocation2 + $0x1c8] sm:$0xff] %v961
  %1038 = vst [vmem:[#allocation2 + $0x1d0] sm:$0xff] %v856
  %1039 = vst [vmem:[#allocation2 + $0x1d8] sm:$0xff] %v963
  %1040 = vst [vmem:[#allocation2 + $0x1e0] sm:$0xff] %v859
  %1041 = vst [vmem:[#allocation2 + $0x1e8] sm:$0xff] %v966
  %1042 = vst [vmem:[#allocation2 + $0x1f0] sm:$0xff] %v861
  %1043 = vst [vmem:[#allocation2 + $0x1f8] sm:$0xff] %v968
  %1044 = vst [vmem:[#allocation2 + $0x200] sm:$0xff] %v864
  %1045 = vst [vmem:[#allocation2 + $0x208] sm:$0xff] %v971
  %1046 = vst [vmem:[#allocation2 + $0x210] sm:$0xff] %v866
  %1047 = vst [vmem:[#allocation2 + $0x218] sm:$0xff] %v973
  %1048 = vst [vmem:[#allocation2 + $0x220] sm:$0xff] %v869
  %1049 = vst [vmem:[#allocation2 + $0x228] sm:$0xff] %v976
  %1050 = vst [vmem:[#allocation2 + $0x230] sm:$0xff] %v871
  %1051 = vst [vmem:[#allocation2 + $0x238] sm:$0xff] %v978
  %1052 = vst [vmem:[#allocation3] sm:$0xff] 0.0
  %1053 = vst [vmem:[#allocation3 + $0x8] sm:$0xff] 0.0
  %1054 = vst [vmem:[#allocation3 + $0x10] sm:$0xff] 0.0
  %1055 = vst [vmem:[#allocation3 + $0x18] sm:$0xff] 0.0
  %1056 = vst [vmem:[#allocation3 + $0x20] sm:$0xff] 0.0
  %1057 = vst [vmem:[#allocation3 + $0x28] sm:$0xff] 0.0
  %1058 = vst [vmem:[#allocation3 + $0x30] sm:$0xff] 0.0
  %1059 = vst [vmem:[#allocation3 + $0x38] sm:$0xff] 0.0
  %v1060 = vld [vmem:[#allocation3] sm:$0xff]
  %v1061 = vld [vmem:[#allocation3 + $0x8] sm:$0xff]
  %v1062 = vld [vmem:[#allocation3 + $0x10] sm:$0xff]
  %v1063 = vld [vmem:[#allocation3 + $0x18] sm:$0xff]
  %v1064 = vld [vmem:[#allocation3 + $0x20] sm:$0xff]
  %v1065 = vld [vmem:[#allocation3 + $0x28] sm:$0xff]
  %v1066 = vld [vmem:[#allocation3 + $0x30] sm:$0xff]
  %v1067 = vld [vmem:[#allocation3 + $0x38] sm:$0xff]
  %s1068 = smul.u32 0, 2
  %s1069 = smul.addr %s1068, 8
  %s1070 = scalar_lea.vmem [#allocation2], %s1069
  %v1071 = vld [vmem:[%s1070] sm:$0xff]
  %v1072 = vld [vmem:[%s1070 + $0x8] sm:$0xff]
  %v1073 = vld [vmem:[%s1070 + $0x10] sm:$0xff]
  %v1074 = vld [vmem:[%s1070 + $0x18] sm:$0xff]
  %v1075 = vld [vmem:[%s1070 + $0x20] sm:$0xff]
  %v1076 = vld [vmem:[%s1070 + $0x28] sm:$0xff]
  %v1077 = vld [vmem:[%s1070 + $0x30] sm:$0xff]
  %v1078 = vld [vmem:[%s1070 + $0x38] sm:$0xff]
  %s1079 = smul.u32 0, 2
  %s1080 = smul.addr %s1079, 4
  %s1081 = scalar_lea.vmem %s12, %s1080
  %v1082 = vld [vmem:[%s1081] sm:$0xff]
  %v1083 = vld [vmem:[%s1081 + $0x8] sm:$0xff]
  %v1084 = vld [vmem:[%s1081 + $0x10] sm:$0xff]
  %v1085 = vld [vmem:[%s1081 + $0x18] sm:$0xff]
  %v1086 = vld [vmem:[%s1081 + $0x20] sm:$0xff]
  %v1087 = vld [vmem:[%s1081 + $0x28] sm:$0xff]
  %v1088 = vld [vmem:[%s1081 + $0x30] sm:$0xff]
  %v1089 = vld [vmem:[%s1081 + $0x38] sm:$0xff]
  %v1090 = vld [vmem:[%s1081 + $0x40] sm:$0xff]
  %v1091 = vld [vmem:[%s1081 + $0x48] sm:$0xff]
  %v1092 = vld [vmem:[%s1081 + $0x50] sm:$0xff]
  %v1093 = vld [vmem:[%s1081 + $0x58] sm:$0xff]
  %v1094 = vld [vmem:[%s1081 + $0x60] sm:$0xff]
  %v1095 = vld [vmem:[%s1081 + $0x68] sm:$0xff]
  %v1096 = vld [vmem:[%s1081 + $0x70] sm:$0xff]
  %v1097 = vld [vmem:[%s1081 + $0x78] sm:$0xff]
  %v1098 = vld [vmem:[%s1081 + $0x80] sm:$0xff]
  %v1099 = vld [vmem:[%s1081 + $0x88] sm:$0xff]
  %v1100 = vld [vmem:[%s1081 + $0x90] sm:$0xff]
  %v1101 = vld [vmem:[%s1081 + $0x98] sm:$0xff]
  %v1102 = vld [vmem:[%s1081 + $0xa0] sm:$0xff]
  %v1103 = vld [vmem:[%s1081 + $0xa8] sm:$0xff]
  %v1104 = vld [vmem:[%s1081 + $0xb0] sm:$0xff]
  %v1105 = vld [vmem:[%s1081 + $0xb8] sm:$0xff]
  %v1106 = vld [vmem:[%s1081 + $0xc0] sm:$0xff]
  %v1107 = vld [vmem:[%s1081 + $0xc8] sm:$0xff]
  %v1108 = vld [vmem:[%s1081 + $0xd0] sm:$0xff]
  %v1109 = vld [vmem:[%s1081 + $0xd8] sm:$0xff]
  %v1110 = vld [vmem:[%s1081 + $0xe0] sm:$0xff]
  %v1111 = vld [vmem:[%s1081 + $0xe8] sm:$0xff]
  %v1112 = vld [vmem:[%s1081 + $0xf0] sm:$0xff]
  %v1113 = vld [vmem:[%s1081 + $0xf8] sm:$0xff]
  %v1146 = vunpack.c.l.b16 %v1082
  %v1147 = vunpack.c.h.b16 %v1082
  %v1148 = vunpack.c.l.b16 %v1083
  %v1149 = vunpack.c.h.b16 %v1083
  %v1150 = vunpack.c.l.b16 %v1084
  %v1151 = vunpack.c.h.b16 %v1084
  %v1152 = vunpack.c.l.b16 %v1085
  %v1153 = vunpack.c.h.b16 %v1085
  %v1154 = vunpack.c.l.b16 %v1086
  %v1155 = vunpack.c.h.b16 %v1086
  %v1156 = vunpack.c.l.b16 %v1087
  %v1157 = vunpack.c.h.b16 %v1087
  %v1158 = vunpack.c.l.b16 %v1088
  %v1159 = vunpack.c.h.b16 %v1088
  %v1160 = vunpack.c.l.b16 %v1089
  %v1161 = vunpack.c.h.b16 %v1089
  %v1162 = vunpack.c.l.b16 %v1090
  %v1163 = vunpack.c.h.b16 %v1090
  %v1164 = vunpack.c.l.b16 %v1091
  %v1165 = vunpack.c.h.b16 %v1091
  %v1166 = vunpack.c.l.b16 %v1092
  %v1167 = vunpack.c.h.b16 %v1092
  %v1168 = vunpack.c.l.b16 %v1093
  %v1169 = vunpack.c.h.b16 %v1093
  %v1170 = vunpack.c.l.b16 %v1094
  %v1171 = vunpack.c.h.b16 %v1094
  %v1172 = vunpack.c.l.b16 %v1095
  %v1173 = vunpack.c.h.b16 %v1095
  %v1174 = vunpack.c.l.b16 %v1096
  %v1175 = vunpack.c.h.b16 %v1096
  %v1176 = vunpack.c.l.b16 %v1097
  %v1177 = vunpack.c.h.b16 %v1097
  %v1178 = vunpack.c.l.b16 %v1098
  %v1179 = vunpack.c.h.b16 %v1098
  %v1180 = vunpack.c.l.b16 %v1099
  %v1181 = vunpack.c.h.b16 %v1099
  %v1182 = vunpack.c.l.b16 %v1100
  %v1183 = vunpack.c.h.b16 %v1100
  %v1184 = vunpack.c.l.b16 %v1101
  %v1185 = vunpack.c.h.b16 %v1101
  %v1186 = vunpack.c.l.b16 %v1102
  %v1187 = vunpack.c.h.b16 %v1102
  %v1188 = vunpack.c.l.b16 %v1103
  %v1189 = vunpack.c.h.b16 %v1103
  %v1190 = vunpack.c.l.b16 %v1104
  %v1191 = vunpack.c.h.b16 %v1104
  %v1192 = vunpack.c.l.b16 %v1105
  %v1193 = vunpack.c.h.b16 %v1105
  %v1194 = vunpack.c.l.b16 %v1106
  %v1195 = vunpack.c.h.b16 %v1106
  %v1196 = vunpack.c.l.b16 %v1107
  %v1197 = vunpack.c.h.b16 %v1107
  %v1198 = vunpack.c.l.b16 %v1108
  %v1199 = vunpack.c.h.b16 %v1108
  %v1200 = vunpack.c.l.b16 %v1109
  %v1201 = vunpack.c.h.b16 %v1109
  %v1202 = vunpack.c.l.b16 %v1110
  %v1203 = vunpack.c.h.b16 %v1110
  %v1204 = vunpack.c.l.b16 %v1111
  %v1205 = vunpack.c.h.b16 %v1111
  %v1206 = vunpack.c.l.b16 %v1112
  %v1207 = vunpack.c.h.b16 %v1112
  %v1208 = vunpack.c.l.b16 %v1113
  %v1209 = vunpack.c.h.b16 %v1113
  %v1210 = vpack.c.b16 %v1148, %v1146
  %v1211 = vpack.c.b16 %v1149, %v1147
  %v1212 = vpack.c.b16 %v1152, %v1150
  %v1213 = vpack.c.b16 %v1153, %v1151
  %v1214 = vpack.c.b16 %v1156, %v1154
  %v1215 = vpack.c.b16 %v1157, %v1155
  %v1216 = vpack.c.b16 %v1160, %v1158
  %v1217 = vpack.c.b16 %v1161, %v1159
  %v1218 = vpack.c.b16 %v1164, %v1162
  %v1219 = vpack.c.b16 %v1165, %v1163
  %v1220 = vpack.c.b16 %v1168, %v1166
  %v1221 = vpack.c.b16 %v1169, %v1167
  %v1222 = vpack.c.b16 %v1172, %v1170
  %v1223 = vpack.c.b16 %v1173, %v1171
  %v1224 = vpack.c.b16 %v1176, %v1174
  %v1225 = vpack.c.b16 %v1177, %v1175
  %v1226 = vpack.c.b16 %v1180, %v1178
  %v1227 = vpack.c.b16 %v1181, %v1179
  %v1228 = vpack.c.b16 %v1184, %v1182
  %v1229 = vpack.c.b16 %v1185, %v1183
  %v1230 = vpack.c.b16 %v1188, %v1186
  %v1231 = vpack.c.b16 %v1189, %v1187
  %v1232 = vpack.c.b16 %v1192, %v1190
  %v1233 = vpack.c.b16 %v1193, %v1191
  %v1234 = vpack.c.b16 %v1196, %v1194
  %v1235 = vpack.c.b16 %v1197, %v1195
  %v1236 = vpack.c.b16 %v1200, %v1198
  %v1237 = vpack.c.b16 %v1201, %v1199
  %v1238 = vpack.c.b16 %v1204, %v1202
  %v1239 = vpack.c.b16 %v1205, %v1203
  %v1240 = vpack.c.b16 %v1208, %v1206
  %v1241 = vpack.c.b16 %v1209, %v1207
  %1274 = vmatpush.bf16.msra.mxu0 %v1224
  %1275 = vmatpush.bf16.msra.mxu0 %v1222
  %1276 = vmatpush.bf16.msra.mxu0 %v1220
  %1277 = vmatpush.bf16.msra.mxu0 %v1218
  %1278 = vmatpush.bf16.msra.mxu0 %v1216
  %1279 = vmatpush.bf16.msra.mxu0 %v1214
  %1280 = vmatpush.bf16.msra.mxu0 %v1212
  %1281 = vmatpush.bf16.msra.mxu0 %v1210
  %1282 = vmatmul.f32.gmra.mxu0 %v1071
  %v1283 = vpop.f32.mrf.mxu0
  %v1284 = vadd.f32 0.0, %v1283
  %1285 = vmatmul.f32.gmra.mxu0 %v1073
  %v1286 = vpop.f32.mrf.mxu0
  %v1287 = vadd.f32 0.0, %v1286
  %1288 = vmatmul.f32.gmra.mxu0 %v1075
  %v1289 = vpop.f32.mrf.mxu0
  %v1290 = vadd.f32 0.0, %v1289
  %1291 = vmatmul.f32.gmra.mxu0 %v1077
  %v1292 = vpop.f32.mrf.mxu0
  %v1293 = vadd.f32 0.0, %v1292
  %1294 = vdwg.mxu0
  %1295 = vmatpush.bf16.msra.mxu0 %v1240
  %1296 = vmatpush.bf16.msra.mxu0 %v1238
  %1297 = vmatpush.bf16.msra.mxu0 %v1236
  %1298 = vmatpush.bf16.msra.mxu0 %v1234
  %1299 = vmatpush.bf16.msra.mxu0 %v1232
  %1300 = vmatpush.bf16.msra.mxu0 %v1230
  %1301 = vmatpush.bf16.msra.mxu0 %v1228
  %1302 = vmatpush.bf16.msra.mxu0 %v1226
  %1303 = vmatmul.f32.gmra.mxu0 %v1072
  %v1304 = vpop.f32.mrf.mxu0
  %v1305 = vadd.f32 %v1284, %v1304
  %1306 = vmatmul.f32.gmra.mxu0 %v1074
  %v1307 = vpop.f32.mrf.mxu0
  %v1308 = vadd.f32 %v1287, %v1307
  %1309 = vmatmul.f32.gmra.mxu0 %v1076
  %v1310 = vpop.f32.mrf.mxu0
  %v1311 = vadd.f32 %v1290, %v1310
  %1312 = vmatmul.f32.gmra.mxu0 %v1078
  %v1313 = vpop.f32.mrf.mxu0
  %v1314 = vadd.f32 %v1293, %v1313
  %1315 = vdwg.mxu0
  %1316 = vmatpush.bf16.msra.mxu0 %v1225
  %1317 = vmatpush.bf16.msra.mxu0 %v1223
  %1318 = vmatpush.bf16.msra.mxu0 %v1221
  %1319 = vmatpush.bf16.msra.mxu0 %v1219
  %1320 = vmatpush.bf16.msra.mxu0 %v1217
  %1321 = vmatpush.bf16.msra.mxu0 %v1215
  %1322 = vmatpush.bf16.msra.mxu0 %v1213
  %1323 = vmatpush.bf16.msra.mxu0 %v1211
  %1324 = vmatmul.f32.gmra.mxu0 %v1071
  %v1325 = vpop.f32.mrf.mxu0
  %v1326 = vadd.f32 0.0, %v1325
  %1327 = vmatmul.f32.gmra.mxu0 %v1073
  %v1328 = vpop.f32.mrf.mxu0
  %v1329 = vadd.f32 0.0, %v1328
  %1330 = vmatmul.f32.gmra.mxu0 %v1075
  %v1331 = vpop.f32.mrf.mxu0
  %v1332 = vadd.f32 0.0, %v1331
  %1333 = vmatmul.f32.gmra.mxu0 %v1077
  %v1334 = vpop.f32.mrf.mxu0
  %v1335 = vadd.f32 0.0, %v1334
  %1336 = vdwg.mxu0
  %1337 = vmatpush.bf16.msra.mxu0 %v1241
  %1338 = vmatpush.bf16.msra.mxu0 %v1239
  %1339 = vmatpush.bf16.msra.mxu0 %v1237
  %1340 = vmatpush.bf16.msra.mxu0 %v1235
  %1341 = vmatpush.bf16.msra.mxu0 %v1233
  %1342 = vmatpush.bf16.msra.mxu0 %v1231
  %1343 = vmatpush.bf16.msra.mxu0 %v1229
  %1344 = vmatpush.bf16.msra.mxu0 %v1227
  %1345 = vmatmul.f32.gmra.mxu0 %v1072
  %v1346 = vpop.f32.mrf.mxu0
  %v1347 = vadd.f32 %v1326, %v1346
  %1348 = vmatmul.f32.gmra.mxu0 %v1074
  %v1349 = vpop.f32.mrf.mxu0
  %v1350 = vadd.f32 %v1329, %v1349
  %1351 = vmatmul.f32.gmra.mxu0 %v1076
  %v1352 = vpop.f32.mrf.mxu0
  %v1353 = vadd.f32 %v1332, %v1352
  %1354 = vmatmul.f32.gmra.mxu0 %v1078
  %v1355 = vpop.f32.mrf.mxu0
  %v1356 = vadd.f32 %v1335, %v1355
  %1357 = vdwg.mxu0
  %v1358 = vadd.f32 %v1060, %v1305
  %v1359 = vadd.f32 %v1061, %v1347
  %v1360 = vadd.f32 %v1062, %v1308
  %v1361 = vadd.f32 %v1063, %v1350
  %v1362 = vadd.f32 %v1064, %v1311
  %v1363 = vadd.f32 %v1065, %v1353
  %v1364 = vadd.f32 %v1066, %v1314
  %v1365 = vadd.f32 %v1067, %v1356
  %1366 = vst [vmem:[#allocation3] sm:$0xff] %v1358
  %1367 = vst [vmem:[#allocation3 + $0x8] sm:$0xff] %v1359
  %1368 = vst [vmem:[#allocation3 + $0x10] sm:$0xff] %v1360
  %1369 = vst [vmem:[#allocation3 + $0x18] sm:$0xff] %v1361
  %1370 = vst [vmem:[#allocation3 + $0x20] sm:$0xff] %v1362
  %1371 = vst [vmem:[#allocation3 + $0x28] sm:$0xff] %v1363
  %1372 = vst [vmem:[#allocation3 + $0x30] sm:$0xff] %v1364
  %1373 = vst [vmem:[#allocation3 + $0x38] sm:$0xff] %v1365
  %v1374 = vld [vmem:[#allocation3] sm:$0xff]
  %v1375 = vld [vmem:[#allocation3 + $0x8] sm:$0xff]
  %v1376 = vld [vmem:[#allocation3 + $0x10] sm:$0xff]
  %v1377 = vld [vmem:[#allocation3 + $0x18] sm:$0xff]
  %v1378 = vld [vmem:[#allocation3 + $0x20] sm:$0xff]
  %v1379 = vld [vmem:[#allocation3 + $0x28] sm:$0xff]
  %v1380 = vld [vmem:[#allocation3 + $0x30] sm:$0xff]
  %v1381 = vld [vmem:[#allocation3 + $0x38] sm:$0xff]
  %s1382 = smul.u32 4, 2
  %s1383 = smul.addr %s1382, 8
  %s1384 = scalar_lea.vmem [#allocation2], %s1383
  %v1385 = vld [vmem:[%s1384] sm:$0xff]
  %v1386 = vld [vmem:[%s1384 + $0x8] sm:$0xff]
  %v1387 = vld [vmem:[%s1384 + $0x10] sm:$0xff]
  %v1388 = vld [vmem:[%s1384 + $0x18] sm:$0xff]
  %v1389 = vld [vmem:[%s1384 + $0x20] sm:$0xff]
  %v1390 = vld [vmem:[%s1384 + $0x28] sm:$0xff]
  %v1391 = vld [vmem:[%s1384 + $0x30] sm:$0xff]
  %v1392 = vld [vmem:[%s1384 + $0x38] sm:$0xff]
  %s1393 = smul.u32 32, 2
  %s1394 = smul.addr %s1393, 4
  %s1395 = scalar_lea.vmem %s12, %s1394
  %v1396 = vld [vmem:[%s1395] sm:$0xff]
  %v1397 = vld [vmem:[%s1395 + $0x8] sm:$0xff]
  %v1398 = vld [vmem:[%s1395 + $0x10] sm:$0xff]
  %v1399 = vld [vmem:[%s1395 + $0x18] sm:$0xff]
  %v1400 = vld [vmem:[%s1395 + $0x20] sm:$0xff]
  %v1401 = vld [vmem:[%s1395 + $0x28] sm:$0xff]
  %v1402 = vld [vmem:[%s1395 + $0x30] sm:$0xff]
  %v1403 = vld [vmem:[%s1395 + $0x38] sm:$0xff]
  %v1404 = vld [vmem:[%s1395 + $0x40] sm:$0xff]
  %v1405 = vld [vmem:[%s1395 + $0x48] sm:$0xff]
  %v1406 = vld [vmem:[%s1395 + $0x50] sm:$0xff]
  %v1407 = vld [vmem:[%s1395 + $0x58] sm:$0xff]
  %v1408 = vld [vmem:[%s1395 + $0x60] sm:$0xff]
  %v1409 = vld [vmem:[%s1395 + $0x68] sm:$0xff]
  %v1410 = vld [vmem:[%s1395 + $0x70] sm:$0xff]
  %v1411 = vld [vmem:[%s1395 + $0x78] sm:$0xff]
  %v1412 = vld [vmem:[%s1395 + $0x80] sm:$0xff]
  %v1413 = vld [vmem:[%s1395 + $0x88] sm:$0xff]
  %v1414 = vld [vmem:[%s1395 + $0x90] sm:$0xff]
  %v1415 = vld [vmem:[%s1395 + $0x98] sm:$0xff]
  %v1416 = vld [vmem:[%s1395 + $0xa0] sm:$0xff]
  %v1417 = vld [vmem:[%s1395 + $0xa8] sm:$0xff]
  %v1418 = vld [vmem:[%s1395 + $0xb0] sm:$0xff]
  %v1419 = vld [vmem:[%s1395 + $0xb8] sm:$0xff]
  %v1420 = vld [vmem:[%s1395 + $0xc0] sm:$0xff]
  %v1421 = vld [vmem:[%s1395 + $0xc8] sm:$0xff]
  %v1422 = vld [vmem:[%s1395 + $0xd0] sm:$0xff]
  %v1423 = vld [vmem:[%s1395 + $0xd8] sm:$0xff]
  %v1424 = vld [vmem:[%s1395 + $0xe0] sm:$0xff]
  %v1425 = vld [vmem:[%s1395 + $0xe8] sm:$0xff]
  %v1426 = vld [vmem:[%s1395 + $0xf0] sm:$0xff]
  %v1427 = vld [vmem:[%s1395 + $0xf8] sm:$0xff]
  %v1460 = vunpack.c.l.b16 %v1396
  %v1461 = vunpack.c.h.b16 %v1396
  %v1462 = vunpack.c.l.b16 %v1397
  %v1463 = vunpack.c.h.b16 %v1397
  %v1464 = vunpack.c.l.b16 %v1398
  %v1465 = vunpack.c.h.b16 %v1398
  %v1466 = vunpack.c.l.b16 %v1399
  %v1467 = vunpack.c.h.b16 %v1399
  %v1468 = vunpack.c.l.b16 %v1400
  %v1469 = vunpack.c.h.b16 %v1400
  %v1470 = vunpack.c.l.b16 %v1401
  %v1471 = vunpack.c.h.b16 %v1401
  %v1472 = vunpack.c.l.b16 %v1402
  %v1473 = vunpack.c.h.b16 %v1402
  %v1474 = vunpack.c.l.b16 %v1403
  %v1475 = vunpack.c.h.b16 %v1403
  %v1476 = vunpack.c.l.b16 %v1404
  %v1477 = vunpack.c.h.b16 %v1404
  %v1478 = vunpack.c.l.b16 %v1405
  %v1479 = vunpack.c.h.b16 %v1405
  %v1480 = vunpack.c.l.b16 %v1406
  %v1481 = vunpack.c.h.b16 %v1406
  %v1482 = vunpack.c.l.b16 %v1407
  %v1483 = vunpack.c.h.b16 %v1407
  %v1484 = vunpack.c.l.b16 %v1408
  %v1485 = vunpack.c.h.b16 %v1408
  %v1486 = vunpack.c.l.b16 %v1409
  %v1487 = vunpack.c.h.b16 %v1409
  %v1488 = vunpack.c.l.b16 %v1410
  %v1489 = vunpack.c.h.b16 %v1410
  %v1490 = vunpack.c.l.b16 %v1411
  %v1491 = vunpack.c.h.b16 %v1411
  %v1492 = vunpack.c.l.b16 %v1412
  %v1493 = vunpack.c.h.b16 %v1412
  %v1494 = vunpack.c.l.b16 %v1413
  %v1495 = vunpack.c.h.b16 %v1413
  %v1496 = vunpack.c.l.b16 %v1414
  %v1497 = vunpack.c.h.b16 %v1414
  %v1498 = vunpack.c.l.b16 %v1415
  %v1499 = vunpack.c.h.b16 %v1415
  %v1500 = vunpack.c.l.b16 %v1416
  %v1501 = vunpack.c.h.b16 %v1416
  %v1502 = vunpack.c.l.b16 %v1417
  %v1503 = vunpack.c.h.b16 %v1417
  %v1504 = vunpack.c.l.b16 %v1418
  %v1505 = vunpack.c.h.b16 %v1418
  %v1506 = vunpack.c.l.b16 %v1419
  %v1507 = vunpack.c.h.b16 %v1419
  %v1508 = vunpack.c.l.b16 %v1420
  %v1509 = vunpack.c.h.b16 %v1420
  %v1510 = vunpack.c.l.b16 %v1421
  %v1511 = vunpack.c.h.b16 %v1421
  %v1512 = vunpack.c.l.b16 %v1422
  %v1513 = vunpack.c.h.b16 %v1422
  %v1514 = vunpack.c.l.b16 %v1423
  %v1515 = vunpack.c.h.b16 %v1423
  %v1516 = vunpack.c.l.b16 %v1424
  %v1517 = vunpack.c.h.b16 %v1424
  %v1518 = vunpack.c.l.b16 %v1425
  %v1519 = vunpack.c.h.b16 %v1425
  %v1520 = vunpack.c.l.b16 %v1426
  %v1521 = vunpack.c.h.b16 %v1426
  %v1522 = vunpack.c.l.b16 %v1427
  %v1523 = vunpack.c.h.b16 %v1427
  %v1524 = vpack.c.b16 %v1462, %v1460
  %v1525 = vpack.c.b16 %v1463, %v1461
  %v1526 = vpack.c.b16 %v1466, %v1464
  %v1527 = vpack.c.b16 %v1467, %v1465
  %v1528 = vpack.c.b16 %v1470, %v1468
  %v1529 = vpack.c.b16 %v1471, %v1469
  %v1530 = vpack.c.b16 %v1474, %v1472
  %v1531 = vpack.c.b16 %v1475, %v1473
  %v1532 = vpack.c.b16 %v1478, %v1476
  %v1533 = vpack.c.b16 %v1479, %v1477
  %v1534 = vpack.c.b16 %v1482, %v1480
  %v1535 = vpack.c.b16 %v1483, %v1481
  %v1536 = vpack.c.b16 %v1486, %v1484
  %v1537 = vpack.c.b16 %v1487, %v1485
  %v1538 = vpack.c.b16 %v1490, %v1488
  %v1539 = vpack.c.b16 %v1491, %v1489
  %v1540 = vpack.c.b16 %v1494, %v1492
  %v1541 = vpack.c.b16 %v1495, %v1493
  %v1542 = vpack.c.b16 %v1498, %v1496
  %v1543 = vpack.c.b16 %v1499, %v1497
  %v1544 = vpack.c.b16 %v1502, %v1500
  %v1545 = vpack.c.b16 %v1503, %v1501
  %v1546 = vpack.c.b16 %v1506, %v1504
  %v1547 = vpack.c.b16 %v1507, %v1505
  %v1548 = vpack.c.b16 %v1510, %v1508
  %v1549 = vpack.c.b16 %v1511, %v1509
  %v1550 = vpack.c.b16 %v1514, %v1512
  %v1551 = vpack.c.b16 %v1515, %v1513
  %v1552 = vpack.c.b16 %v1518, %v1516
  %v1553 = vpack.c.b16 %v1519, %v1517
  %v1554 = vpack.c.b16 %v1522, %v1520
  %v1555 = vpack.c.b16 %v1523, %v1521
  %1588 = vmatpush.bf16.msra.mxu0 %v1538
  %1589 = vmatpush.bf16.msra.mxu0 %v1536
  %1590 = vmatpush.bf16.msra.mxu0 %v1534
  %1591 = vmatpush.bf16.msra.mxu0 %v1532
  %1592 = vmatpush.bf16.msra.mxu0 %v1530
  %1593 = vmatpush.bf16.msra.mxu0 %v1528
  %1594 = vmatpush.bf16.msra.mxu0 %v1526
  %1595 = vmatpush.bf16.msra.mxu0 %v1524
  %1596 = vmatmul.f32.gmra.mxu0 %v1385
  %v1597 = vpop.f32.mrf.mxu0
  %v1598 = vadd.f32 0.0, %v1597
  %1599 = vmatmul.f32.gmra.mxu0 %v1387
  %v1600 = vpop.f32.mrf.mxu0
  %v1601 = vadd.f32 0.0, %v1600
  %1602 = vmatmul.f32.gmra.mxu0 %v1389
  %v1603 = vpop.f32.mrf.mxu0
  %v1604 = vadd.f32 0.0, %v1603
  %1605 = vmatmul.f32.gmra.mxu0 %v1391
  %v1606 = vpop.f32.mrf.mxu0
  %v1607 = vadd.f32 0.0, %v1606
  %1608 = vdwg.mxu0
  %1609 = vmatpush.bf16.msra.mxu0 %v1554
  %1610 = vmatpush.bf16.msra.mxu0 %v1552
  %1611 = vmatpush.bf16.msra.mxu0 %v1550
  %1612 = vmatpush.bf16.msra.mxu0 %v1548
  %1613 = vmatpush.bf16.msra.mxu0 %v1546
  %1614 = vmatpush.bf16.msra.mxu0 %v1544
  %1615 = vmatpush.bf16.msra.mxu0 %v1542
  %1616 = vmatpush.bf16.msra.mxu0 %v1540
  %1617 = vmatmul.f32.gmra.mxu0 %v1386
  %v1618 = vpop.f32.mrf.mxu0
  %v1619 = vadd.f32 %v1598, %v1618
  %1620 = vmatmul.f32.gmra.mxu0 %v1388
  %v1621 = vpop.f32.mrf.mxu0
  %v1622 = vadd.f32 %v1601, %v1621
  %1623 = vmatmul.f32.gmra.mxu0 %v1390
  %v1624 = vpop.f32.mrf.mxu0
  %v1625 = vadd.f32 %v1604, %v1624
  %1626 = vmatmul.f32.gmra.mxu0 %v1392
  %v1627 = vpop.f32.mrf.mxu0
  %v1628 = vadd.f32 %v1607, %v1627
  %1629 = vdwg.mxu0
  %1630 = vmatpush.bf16.msra.mxu0 %v1539
  %1631 = vmatpush.bf16.msra.mxu0 %v1537
  %1632 = vmatpush.bf16.msra.mxu0 %v1535
  %1633 = vmatpush.bf16.msra.mxu0 %v1533
  %1634 = vmatpush.bf16.msra.mxu0 %v1531
  %1635 = vmatpush.bf16.msra.mxu0 %v1529
  %1636 = vmatpush.bf16.msra.mxu0 %v1527
  %1637 = vmatpush.bf16.msra.mxu0 %v1525
  %1638 = vmatmul.f32.gmra.mxu0 %v1385
  %v1639 = vpop.f32.mrf.mxu0
  %v1640 = vadd.f32 0.0, %v1639
  %1641 = vmatmul.f32.gmra.mxu0 %v1387
  %v1642 = vpop.f32.mrf.mxu0
  %v1643 = vadd.f32 0.0, %v1642
  %1644 = vmatmul.f32.gmra.mxu0 %v1389
  %v1645 = vpop.f32.mrf.mxu0
  %v1646 = vadd.f32 0.0, %v1645
  %1647 = vmatmul.f32.gmra.mxu0 %v1391
  %v1648 = vpop.f32.mrf.mxu0
  %v1649 = vadd.f32 0.0, %v1648
  %1650 = vdwg.mxu0
  %1651 = vmatpush.bf16.msra.mxu0 %v1555
  %1652 = vmatpush.bf16.msra.mxu0 %v1553
  %1653 = vmatpush.bf16.msra.mxu0 %v1551
  %1654 = vmatpush.bf16.msra.mxu0 %v1549
  %1655 = vmatpush.bf16.msra.mxu0 %v1547
  %1656 = vmatpush.bf16.msra.mxu0 %v1545
  %1657 = vmatpush.bf16.msra.mxu0 %v1543
  %1658 = vmatpush.bf16.msra.mxu0 %v1541
  %1659 = vmatmul.f32.gmra.mxu0 %v1386
  %v1660 = vpop.f32.mrf.mxu0
  %v1661 = vadd.f32 %v1640, %v1660
  %1662 = vmatmul.f32.gmra.mxu0 %v1388
  %v1663 = vpop.f32.mrf.mxu0
  %v1664 = vadd.f32 %v1643, %v1663
  %1665 = vmatmul.f32.gmra.mxu0 %v1390
  %v1666 = vpop.f32.mrf.mxu0
  %v1667 = vadd.f32 %v1646, %v1666
  %1668 = vmatmul.f32.gmra.mxu0 %v1392
  %v1669 = vpop.f32.mrf.mxu0
  %v1670 = vadd.f32 %v1649, %v1669
  %1671 = vdwg.mxu0
  %v1672 = vadd.f32 %v1374, %v1619
  %v1673 = vadd.f32 %v1375, %v1661
  %v1674 = vadd.f32 %v1376, %v1622
  %v1675 = vadd.f32 %v1377, %v1664
  %v1676 = vadd.f32 %v1378, %v1625
  %v1677 = vadd.f32 %v1379, %v1667
  %v1678 = vadd.f32 %v1380, %v1628
  %v1679 = vadd.f32 %v1381, %v1670
  %1680 = vst [vmem:[#allocation3] sm:$0xff] %v1672
  %1681 = vst [vmem:[#allocation3 + $0x8] sm:$0xff] %v1673
  %1682 = vst [vmem:[#allocation3 + $0x10] sm:$0xff] %v1674
  %1683 = vst [vmem:[#allocation3 + $0x18] sm:$0xff] %v1675
  %1684 = vst [vmem:[#allocation3 + $0x20] sm:$0xff] %v1676
  %1685 = vst [vmem:[#allocation3 + $0x28] sm:$0xff] %v1677
  %1686 = vst [vmem:[#allocation3 + $0x30] sm:$0xff] %v1678
  %1687 = vst [vmem:[#allocation3 + $0x38] sm:$0xff] %v1679
  %v1688 = vld [vmem:[#allocation3] sm:$0xff]
  %v1689 = vld [vmem:[#allocation3 + $0x8] sm:$0xff]
  %v1690 = vld [vmem:[#allocation3 + $0x10] sm:$0xff]
  %v1691 = vld [vmem:[#allocation3 + $0x18] sm:$0xff]
  %v1692 = vld [vmem:[#allocation3 + $0x20] sm:$0xff]
  %v1693 = vld [vmem:[#allocation3 + $0x28] sm:$0xff]
  %v1694 = vld [vmem:[#allocation3 + $0x30] sm:$0xff]
  %v1695 = vld [vmem:[#allocation3 + $0x38] sm:$0xff]
  %s1696 = smul.u32 8, 2
  %s1697 = smul.addr %s1696, 8
  %s1698 = scalar_lea.vmem [#allocation2], %s1697
  %v1699 = vld [vmem:[%s1698] sm:$0xff]
  %v1700 = vld [vmem:[%s1698 + $0x8] sm:$0xff]
  %v1701 = vld [vmem:[%s1698 + $0x10] sm:$0xff]
  %v1702 = vld [vmem:[%s1698 + $0x18] sm:$0xff]
  %v1703 = vld [vmem:[%s1698 + $0x20] sm:$0xff]
  %v1704 = vld [vmem:[%s1698 + $0x28] sm:$0xff]
  %v1705 = vld [vmem:[%s1698 + $0x30] sm:$0xff]
  %v1706 = vld [vmem:[%s1698 + $0x38] sm:$0xff]
  %s1707 = smul.u32 64, 2
  %s1708 = smul.addr %s1707, 4
  %s1709 = scalar_lea.vmem %s12, %s1708
  %v1710 = vld [vmem:[%s1709] sm:$0xff]
  %v1711 = vld [vmem:[%s1709 + $0x8] sm:$0xff]
  %v1712 = vld [vmem:[%s1709 + $0x10] sm:$0xff]
  %v1713 = vld [vmem:[%s1709 + $0x18] sm:$0xff]
  %v1714 = vld [vmem:[%s1709 + $0x20] sm:$0xff]
  %v1715 = vld [vmem:[%s1709 + $0x28] sm:$0xff]
  %v1716 = vld [vmem:[%s1709 + $0x30] sm:$0xff]
  %v1717 = vld [vmem:[%s1709 + $0x38] sm:$0xff]
  %v1718 = vld [vmem:[%s1709 + $0x40] sm:$0xff]
  %v1719 = vld [vmem:[%s1709 + $0x48] sm:$0xff]
  %v1720 = vld [vmem:[%s1709 + $0x50] sm:$0xff]
  %v1721 = vld [vmem:[%s1709 + $0x58] sm:$0xff]
  %v1722 = vld [vmem:[%s1709 + $0x60] sm:$0xff]
  %v1723 = vld [vmem:[%s1709 + $0x68] sm:$0xff]
  %v1724 = vld [vmem:[%s1709 + $0x70] sm:$0xff]
  %v1725 = vld [vmem:[%s1709 + $0x78] sm:$0xff]
  %v1726 = vld [vmem:[%s1709 + $0x80] sm:$0xff]
  %v1727 = vld [vmem:[%s1709 + $0x88] sm:$0xff]
  %v1728 = vld [vmem:[%s1709 + $0x90] sm:$0xff]
  %v1729 = vld [vmem:[%s1709 + $0x98] sm:$0xff]
  %v1730 = vld [vmem:[%s1709 + $0xa0] sm:$0xff]
  %v1731 = vld [vmem:[%s1709 + $0xa8] sm:$0xff]
  %v1732 = vld [vmem:[%s1709 + $0xb0] sm:$0xff]
  %v1733 = vld [vmem:[%s1709 + $0xb8] sm:$0xff]
  %v1734 = vld [vmem:[%s1709 + $0xc0] sm:$0xff]
  %v1735 = vld [vmem:[%s1709 + $0xc8] sm:$0xff]
  %v1736 = vld [vmem:[%s1709 + $0xd0] sm:$0xff]
  %v1737 = vld [vmem:[%s1709 + $0xd8] sm:$0xff]
  %v1738 = vld [vmem:[%s1709 + $0xe0] sm:$0xff]
  %v1739 = vld [vmem:[%s1709 + $0xe8] sm:$0xff]
  %v1740 = vld [vmem:[%s1709 + $0xf0] sm:$0xff]
  %v1741 = vld [vmem:[%s1709 + $0xf8] sm:$0xff]
  %v1774 = vunpack.c.l.b16 %v1710
  %v1775 = vunpack.c.h.b16 %v1710
  %v1776 = vunpack.c.l.b16 %v1711
  %v1777 = vunpack.c.h.b16 %v1711
  %v1778 = vunpack.c.l.b16 %v1712
  %v1779 = vunpack.c.h.b16 %v1712
  %v1780 = vunpack.c.l.b16 %v1713
  %v1781 = vunpack.c.h.b16 %v1713
  %v1782 = vunpack.c.l.b16 %v1714
  %v1783 = vunpack.c.h.b16 %v1714
  %v1784 = vunpack.c.l.b16 %v1715
  %v1785 = vunpack.c.h.b16 %v1715
  %v1786 = vunpack.c.l.b16 %v1716
  %v1787 = vunpack.c.h.b16 %v1716
  %v1788 = vunpack.c.l.b16 %v1717
  %v1789 = vunpack.c.h.b16 %v1717
  %v1790 = vunpack.c.l.b16 %v1718
  %v1791 = vunpack.c.h.b16 %v1718
  %v1792 = vunpack.c.l.b16 %v1719
  %v1793 = vunpack.c.h.b16 %v1719
  %v1794 = vunpack.c.l.b16 %v1720
  %v1795 = vunpack.c.h.b16 %v1720
  %v1796 = vunpack.c.l.b16 %v1721
  %v1797 = vunpack.c.h.b16 %v1721
  %v1798 = vunpack.c.l.b16 %v1722
  %v1799 = vunpack.c.h.b16 %v1722
  %v1800 = vunpack.c.l.b16 %v1723
  %v1801 = vunpack.c.h.b16 %v1723
  %v1802 = vunpack.c.l.b16 %v1724
  %v1803 = vunpack.c.h.b16 %v1724
  %v1804 = vunpack.c.l.b16 %v1725
  %v1805 = vunpack.c.h.b16 %v1725
  %v1806 = vunpack.c.l.b16 %v1726
  %v1807 = vunpack.c.h.b16 %v1726
  %v1808 = vunpack.c.l.b16 %v1727
  %v1809 = vunpack.c.h.b16 %v1727
  %v1810 = vunpack.c.l.b16 %v1728
  %v1811 = vunpack.c.h.b16 %v1728
  %v1812 = vunpack.c.l.b16 %v1729
  %v1813 = vunpack.c.h.b16 %v1729
  %v1814 = vunpack.c.l.b16 %v1730
  %v1815 = vunpack.c.h.b16 %v1730
  %v1816 = vunpack.c.l.b16 %v1731
  %v1817 = vunpack.c.h.b16 %v1731
  %v1818 = vunpack.c.l.b16 %v1732
  %v1819 = vunpack.c.h.b16 %v1732
  %v1820 = vunpack.c.l.b16 %v1733
  %v1821 = vunpack.c.h.b16 %v1733
  %v1822 = vunpack.c.l.b16 %v1734
  %v1823 = vunpack.c.h.b16 %v1734
  %v1824 = vunpack.c.l.b16 %v1735
  %v1825 = vunpack.c.h.b16 %v1735
  %v1826 = vunpack.c.l.b16 %v1736
  %v1827 = vunpack.c.h.b16 %v1736
  %v1828 = vunpack.c.l.b16 %v1737
  %v1829 = vunpack.c.h.b16 %v1737
  %v1830 = vunpack.c.l.b16 %v1738
  %v1831 = vunpack.c.h.b16 %v1738
  %v1832 = vunpack.c.l.b16 %v1739
  %v1833 = vunpack.c.h.b16 %v1739
  %v1834 = vunpack.c.l.b16 %v1740
  %v1835 = vunpack.c.h.b16 %v1740
  %v1836 = vunpack.c.l.b16 %v1741
  %v1837 = vunpack.c.h.b16 %v1741
  %v1838 = vpack.c.b16 %v1776, %v1774
  %v1839 = vpack.c.b16 %v1777, %v1775
  %v1840 = vpack.c.b16 %v1780, %v1778
  %v1841 = vpack.c.b16 %v1781, %v1779
  %v1842 = vpack.c.b16 %v1784, %v1782
  %v1843 = vpack.c.b16 %v1785, %v1783
  %v1844 = vpack.c.b16 %v1788, %v1786
  %v1845 = vpack.c.b16 %v1789, %v1787
  %v1846 = vpack.c.b16 %v1792, %v1790
  %v1847 = vpack.c.b16 %v1793, %v1791
  %v1848 = vpack.c.b16 %v1796, %v1794
  %v1849 = vpack.c.b16 %v1797, %v1795
  %v1850 = vpack.c.b16 %v1800, %v1798
  %v1851 = vpack.c.b16 %v1801, %v1799
  %v1852 = vpack.c.b16 %v1804, %v1802
  %v1853 = vpack.c.b16 %v1805, %v1803
  %v1854 = vpack.c.b16 %v1808, %v1806
  %v1855 = vpack.c.b16 %v1809, %v1807
  %v1856 = vpack.c.b16 %v1812, %v1810
  %v1857 = vpack.c.b16 %v1813, %v1811
  %v1858 = vpack.c.b16 %v1816, %v1814
  %v1859 = vpack.c.b16 %v1817, %v1815
  %v1860 = vpack.c.b16 %v1820, %v1818
  %v1861 = vpack.c.b16 %v1821, %v1819
  %v1862 = vpack.c.b16 %v1824, %v1822
  %v1863 = vpack.c.b16 %v1825, %v1823
  %v1864 = vpack.c.b16 %v1828, %v1826
  %v1865 = vpack.c.b16 %v1829, %v1827
  %v1866 = vpack.c.b16 %v1832, %v1830
  %v1867 = vpack.c.b16 %v1833, %v1831
  %v1868 = vpack.c.b16 %v1836, %v1834
  %v1869 = vpack.c.b16 %v1837, %v1835
  %1902 = vmatpush.bf16.msra.mxu0 %v1852
  %1903 = vmatpush.bf16.msra.mxu0 %v1850
  %1904 = vmatpush.bf16.msra.mxu0 %v1848
  %1905 = vmatpush.bf16.msra.mxu0 %v1846
  %1906 = vmatpush.bf16.msra.mxu0 %v1844
  %1907 = vmatpush.bf16.msra.mxu0 %v1842
  %1908 = vmatpush.bf16.msra.mxu0 %v1840
  %1909 = vmatpush.bf16.msra.mxu0 %v1838
  %1910 = vmatmul.f32.gmra.mxu0 %v1699
  %v1911 = vpop.f32.mrf.mxu0
  %v1912 = vadd.f32 0.0, %v1911
  %1913 = vmatmul.f32.gmra.mxu0 %v1701
  %v1914 = vpop.f32.mrf.mxu0
  %v1915 = vadd.f32 0.0, %v1914
  %1916 = vmatmul.f32.gmra.mxu0 %v1703
  %v1917 = vpop.f32.mrf.mxu0
  %v1918 = vadd.f32 0.0, %v1917
  %1919 = vmatmul.f32.gmra.mxu0 %v1705
  %v1920 = vpop.f32.mrf.mxu0
  %v1921 = vadd.f32 0.0, %v1920
  %1922 = vdwg.mxu0
  %1923 = vmatpush.bf16.msra.mxu0 %v1868
  %1924 = vmatpush.bf16.msra.mxu0 %v1866
  %1925 = vmatpush.bf16.msra.mxu0 %v1864
  %1926 = vmatpush.bf16.msra.mxu0 %v1862
  %1927 = vmatpush.bf16.msra.mxu0 %v1860
  %1928 = vmatpush.bf16.msra.mxu0 %v1858
  %1929 = vmatpush.bf16.msra.mxu0 %v1856
  %1930 = vmatpush.bf16.msra.mxu0 %v1854
  %1931 = vmatmul.f32.gmra.mxu0 %v1700
  %v1932 = vpop.f32.mrf.mxu0
  %v1933 = vadd.f32 %v1912, %v1932
  %1934 = vmatmul.f32.gmra.mxu0 %v1702
  %v1935 = vpop.f32.mrf.mxu0
  %v1936 = vadd.f32 %v1915, %v1935
  %1937 = vmatmul.f32.gmra.mxu0 %v1704
  %v1938 = vpop.f32.mrf.mxu0
  %v1939 = vadd.f32 %v1918, %v1938
  %1940 = vmatmul.f32.gmra.mxu0 %v1706
  %v1941 = vpop.f32.mrf.mxu0
  %v1942 = vadd.f32 %v1921, %v1941
  %1943 = vdwg.mxu0
  %1944 = vmatpush.bf16.msra.mxu0 %v1853
  %1945 = vmatpush.bf16.msra.mxu0 %v1851
  %1946 = vmatpush.bf16.msra.mxu0 %v1849
  %1947 = vmatpush.bf16.msra.mxu0 %v1847
  %1948 = vmatpush.bf16.msra.mxu0 %v1845
  %1949 = vmatpush.bf16.msra.mxu0 %v1843
  %1950 = vmatpush.bf16.msra.mxu0 %v1841
  %1951 = vmatpush.bf16.msra.mxu0 %v1839
  %1952 = vmatmul.f32.gmra.mxu0 %v1699
  %v1953 = vpop.f32.mrf.mxu0
  %v1954 = vadd.f32 0.0, %v1953
  %1955 = vmatmul.f32.gmra.mxu0 %v1701
  %v1956 = vpop.f32.mrf.mxu0
  %v1957 = vadd.f32 0.0, %v1956
  %1958 = vmatmul.f32.gmra.mxu0 %v1703
  %v1959 = vpop.f32.mrf.mxu0
  %v1960 = vadd.f32 0.0, %v1959
  %1961 = vmatmul.f32.gmra.mxu0 %v1705
  %v1962 = vpop.f32.mrf.mxu0
  %v1963 = vadd.f32 0.0, %v1962
  %1964 = vdwg.mxu0
  %1965 = vmatpush.bf16.msra.mxu0 %v1869
  %1966 = vmatpush.bf16.msra.mxu0 %v1867
  %1967 = vmatpush.bf16.msra.mxu0 %v1865
  %1968 = vmatpush.bf16.msra.mxu0 %v1863
  %1969 = vmatpush.bf16.msra.mxu0 %v1861
  %1970 = vmatpush.bf16.msra.mxu0 %v1859
  %1971 = vmatpush.bf16.msra.mxu0 %v1857
  %1972 = vmatpush.bf16.msra.mxu0 %v1855
  %1973 = vmatmul.f32.gmra.mxu0 %v1700
  %v1974 = vpop.f32.mrf.mxu0
  %v1975 = vadd.f32 %v1954, %v1974
  %1976 = vmatmul.f32.gmra.mxu0 %v1702
  %v1977 = vpop.f32.mrf.mxu0
  %v1978 = vadd.f32 %v1957, %v1977
  %1979 = vmatmul.f32.gmra.mxu0 %v1704
  %v1980 = vpop.f32.mrf.mxu0
  %v1981 = vadd.f32 %v1960, %v1980
  %1982 = vmatmul.f32.gmra.mxu0 %v1706
  %v1983 = vpop.f32.mrf.mxu0
  %v1984 = vadd.f32 %v1963, %v1983
  %1985 = vdwg.mxu0
  %v1986 = vadd.f32 %v1688, %v1933
  %v1987 = vadd.f32 %v1689, %v1975
  %v1988 = vadd.f32 %v1690, %v1936
  %v1989 = vadd.f32 %v1691, %v1978
  %v1990 = vadd.f32 %v1692, %v1939
  %v1991 = vadd.f32 %v1693, %v1981
  %v1992 = vadd.f32 %v1694, %v1942
  %v1993 = vadd.f32 %v1695, %v1984
  %1994 = vst [vmem:[#allocation3] sm:$0xff] %v1986
  %1995 = vst [vmem:[#allocation3 + $0x8] sm:$0xff] %v1987
  %1996 = vst [vmem:[#allocation3 + $0x10] sm:$0xff] %v1988
  %1997 = vst [vmem:[#allocation3 + $0x18] sm:$0xff] %v1989
  %1998 = vst [vmem:[#allocation3 + $0x20] sm:$0xff] %v1990
  %1999 = vst [vmem:[#allocation3 + $0x28] sm:$0xff] %v1991
  %2000 = vst [vmem:[#allocation3 + $0x30] sm:$0xff] %v1992
  %2001 = vst [vmem:[#allocation3 + $0x38] sm:$0xff] %v1993
  %v2002 = vld [vmem:[#allocation3] sm:$0xff]
  %v2003 = vld [vmem:[#allocation3 + $0x8] sm:$0xff]
  %v2004 = vld [vmem:[#allocation3 + $0x10] sm:$0xff]
  %v2005 = vld [vmem:[#allocation3 + $0x18] sm:$0xff]
  %v2006 = vld [vmem:[#allocation3 + $0x20] sm:$0xff]
  %v2007 = vld [vmem:[#allocation3 + $0x28] sm:$0xff]
  %v2008 = vld [vmem:[#allocation3 + $0x30] sm:$0xff]
  %v2009 = vld [vmem:[#allocation3 + $0x38] sm:$0xff]
  %s2010 = smul.u32 12, 2
  %s2011 = smul.addr %s2010, 8
  %s2012 = scalar_lea.vmem [#allocation2], %s2011
  %v2013 = vld [vmem:[%s2012] sm:$0xff]
  %v2014 = vld [vmem:[%s2012 + $0x8] sm:$0xff]
  %v2015 = vld [vmem:[%s2012 + $0x10] sm:$0xff]
  %v2016 = vld [vmem:[%s2012 + $0x18] sm:$0xff]
  %v2017 = vld [vmem:[%s2012 + $0x20] sm:$0xff]
  %v2018 = vld [vmem:[%s2012 + $0x28] sm:$0xff]
  %v2019 = vld [vmem:[%s2012 + $0x30] sm:$0xff]
  %v2020 = vld [vmem:[%s2012 + $0x38] sm:$0xff]
  %s2021 = smul.u32 96, 2
  %s2022 = smul.addr %s2021, 4
  %s2023 = scalar_lea.vmem %s12, %s2022
  %v2024 = vld [vmem:[%s2023] sm:$0xff]
  %v2025 = vld [vmem:[%s2023 + $0x8] sm:$0xff]
  %v2026 = vld [vmem:[%s2023 + $0x10] sm:$0xff]
  %v2027 = vld [vmem:[%s2023 + $0x18] sm:$0xff]
  %v2028 = vld [vmem:[%s2023 + $0x20] sm:$0xff]
  %v2029 = vld [vmem:[%s2023 + $0x28] sm:$0xff]
  %v2030 = vld [vmem:[%s2023 + $0x30] sm:$0xff]
  %v2031 = vld [vmem:[%s2023 + $0x38] sm:$0xff]
  %v2032 = vld [vmem:[%s2023 + $0x40] sm:$0xff]
  %v2033 = vld [vmem:[%s2023 + $0x48] sm:$0xff]
  %v2034 = vld [vmem:[%s2023 + $0x50] sm:$0xff]
  %v2035 = vld [vmem:[%s2023 + $0x58] sm:$0xff]
  %v2036 = vld [vmem:[%s2023 + $0x60] sm:$0xff]
  %v2037 = vld [vmem:[%s2023 + $0x68] sm:$0xff]
  %v2038 = vld [vmem:[%s2023 + $0x70] sm:$0xff]
  %v2039 = vld [vmem:[%s2023 + $0x78] sm:$0xff]
  %v2040 = vld [vmem:[%s2023 + $0x80] sm:$0xff]
  %v2041 = vld [vmem:[%s2023 + $0x88] sm:$0xff]
  %v2042 = vld [vmem:[%s2023 + $0x90] sm:$0xff]
  %v2043 = vld [vmem:[%s2023 + $0x98] sm:$0xff]
  %v2044 = vld [vmem:[%s2023 + $0xa0] sm:$0xff]
  %v2045 = vld [vmem:[%s2023 + $0xa8] sm:$0xff]
  %v2046 = vld [vmem:[%s2023 + $0xb0] sm:$0xff]
  %v2047 = vld [vmem:[%s2023 + $0xb8] sm:$0xff]
  %v2048 = vld [vmem:[%s2023 + $0xc0] sm:$0xff]
  %v2049 = vld [vmem:[%s2023 + $0xc8] sm:$0xff]
  %v2050 = vld [vmem:[%s2023 + $0xd0] sm:$0xff]
  %v2051 = vld [vmem:[%s2023 + $0xd8] sm:$0xff]
  %v2052 = vld [vmem:[%s2023 + $0xe0] sm:$0xff]
  %v2053 = vld [vmem:[%s2023 + $0xe8] sm:$0xff]
  %v2054 = vld [vmem:[%s2023 + $0xf0] sm:$0xff]
  %v2055 = vld [vmem:[%s2023 + $0xf8] sm:$0xff]
  %v2088 = vunpack.c.l.b16 %v2024
  %v2089 = vunpack.c.h.b16 %v2024
  %v2090 = vunpack.c.l.b16 %v2025
  %v2091 = vunpack.c.h.b16 %v2025
  %v2092 = vunpack.c.l.b16 %v2026
  %v2093 = vunpack.c.h.b16 %v2026
  %v2094 = vunpack.c.l.b16 %v2027
  %v2095 = vunpack.c.h.b16 %v2027
  %v2096 = vunpack.c.l.b16 %v2028
  %v2097 = vunpack.c.h.b16 %v2028
  %v2098 = vunpack.c.l.b16 %v2029
  %v2099 = vunpack.c.h.b16 %v2029
  %v2100 = vunpack.c.l.b16 %v2030
  %v2101 = vunpack.c.h.b16 %v2030
  %v2102 = vunpack.c.l.b16 %v2031
  %v2103 = vunpack.c.h.b16 %v2031
  %v2104 = vunpack.c.l.b16 %v2032
  %v2105 = vunpack.c.h.b16 %v2032
  %v2106 = vunpack.c.l.b16 %v2033
  %v2107 = vunpack.c.h.b16 %v2033
  %v2108 = vunpack.c.l.b16 %v2034
  %v2109 = vunpack.c.h.b16 %v2034
  %v2110 = vunpack.c.l.b16 %v2035
  %v2111 = vunpack.c.h.b16 %v2035
  %v2112 = vunpack.c.l.b16 %v2036
  %v2113 = vunpack.c.h.b16 %v2036
  %v2114 = vunpack.c.l.b16 %v2037
  %v2115 = vunpack.c.h.b16 %v2037
  %v2116 = vunpack.c.l.b16 %v2038
  %v2117 = vunpack.c.h.b16 %v2038
  %v2118 = vunpack.c.l.b16 %v2039
  %v2119 = vunpack.c.h.b16 %v2039
  %v2120 = vunpack.c.l.b16 %v2040
  %v2121 = vunpack.c.h.b16 %v2040
  %v2122 = vunpack.c.l.b16 %v2041
  %v2123 = vunpack.c.h.b16 %v2041
  %v2124 = vunpack.c.l.b16 %v2042
  %v2125 = vunpack.c.h.b16 %v2042
  %v2126 = vunpack.c.l.b16 %v2043
  %v2127 = vunpack.c.h.b16 %v2043
  %v2128 = vunpack.c.l.b16 %v2044
  %v2129 = vunpack.c.h.b16 %v2044
  %v2130 = vunpack.c.l.b16 %v2045
  %v2131 = vunpack.c.h.b16 %v2045
  %v2132 = vunpack.c.l.b16 %v2046
  %v2133 = vunpack.c.h.b16 %v2046
  %v2134 = vunpack.c.l.b16 %v2047
  %v2135 = vunpack.c.h.b16 %v2047
  %v2136 = vunpack.c.l.b16 %v2048
  %v2137 = vunpack.c.h.b16 %v2048
  %v2138 = vunpack.c.l.b16 %v2049
  %v2139 = vunpack.c.h.b16 %v2049
  %v2140 = vunpack.c.l.b16 %v2050
  %v2141 = vunpack.c.h.b16 %v2050
  %v2142 = vunpack.c.l.b16 %v2051
  %v2143 = vunpack.c.h.b16 %v2051
  %v2144 = vunpack.c.l.b16 %v2052
  %v2145 = vunpack.c.h.b16 %v2052
  %v2146 = vunpack.c.l.b16 %v2053
  %v2147 = vunpack.c.h.b16 %v2053
  %v2148 = vunpack.c.l.b16 %v2054
  %v2149 = vunpack.c.h.b16 %v2054
  %v2150 = vunpack.c.l.b16 %v2055
  %v2151 = vunpack.c.h.b16 %v2055
  %v2152 = vpack.c.b16 %v2090, %v2088
  %v2153 = vpack.c.b16 %v2091, %v2089
  %v2154 = vpack.c.b16 %v2094, %v2092
  %v2155 = vpack.c.b16 %v2095, %v2093
  %v2156 = vpack.c.b16 %v2098, %v2096
  %v2157 = vpack.c.b16 %v2099, %v2097
  %v2158 = vpack.c.b16 %v2102, %v2100
  %v2159 = vpack.c.b16 %v2103, %v2101
  %v2160 = vpack.c.b16 %v2106, %v2104
  %v2161 = vpack.c.b16 %v2107, %v2105
  %v2162 = vpack.c.b16 %v2110, %v2108
  %v2163 = vpack.c.b16 %v2111, %v2109
  %v2164 = vpack.c.b16 %v2114, %v2112
  %v2165 = vpack.c.b16 %v2115, %v2113
  %v2166 = vpack.c.b16 %v2118, %v2116
  %v2167 = vpack.c.b16 %v2119, %v2117
  %v2168 = vpack.c.b16 %v2122, %v2120
  %v2169 = vpack.c.b16 %v2123, %v2121
  %v2170 = vpack.c.b16 %v2126, %v2124
  %v2171 = vpack.c.b16 %v2127, %v2125
  %v2172 = vpack.c.b16 %v2130, %v2128
  %v2173 = vpack.c.b16 %v2131, %v2129
  %v2174 = vpack.c.b16 %v2134, %v2132
  %v2175 = vpack.c.b16 %v2135, %v2133
  %v2176 = vpack.c.b16 %v2138, %v2136
  %v2177 = vpack.c.b16 %v2139, %v2137
  %v2178 = vpack.c.b16 %v2142, %v2140
  %v2179 = vpack.c.b16 %v2143, %v2141
  %v2180 = vpack.c.b16 %v2146, %v2144
  %v2181 = vpack.c.b16 %v2147, %v2145
  %v2182 = vpack.c.b16 %v2150, %v2148
  %v2183 = vpack.c.b16 %v2151, %v2149
  %2216 = vmatpush.bf16.msra.mxu0 %v2166
  %2217 = vmatpush.bf16.msra.mxu0 %v2164
  %2218 = vmatpush.bf16.msra.mxu0 %v2162
  %2219 = vmatpush.bf16.msra.mxu0 %v2160
  %2220 = vmatpush.bf16.msra.mxu0 %v2158
  %2221 = vmatpush.bf16.msra.mxu0 %v2156
  %2222 = vmatpush.bf16.msra.mxu0 %v2154
  %2223 = vmatpush.bf16.msra.mxu0 %v2152
  %2224 = vmatmul.f32.gmra.mxu0 %v2013
  %v2225 = vpop.f32.mrf.mxu0
  %v2226 = vadd.f32 0.0, %v2225
  %2227 = vmatmul.f32.gmra.mxu0 %v2015
  %v2228 = vpop.f32.mrf.mxu0
  %v2229 = vadd.f32 0.0, %v2228
  %2230 = vmatmul.f32.gmra.mxu0 %v2017
  %v2231 = vpop.f32.mrf.mxu0
  %v2232 = vadd.f32 0.0, %v2231
  %2233 = vmatmul.f32.gmra.mxu0 %v2019
  %v2234 = vpop.f32.mrf.mxu0
  %v2235 = vadd.f32 0.0, %v2234
  %2236 = vdwg.mxu0
  %2237 = vmatpush.bf16.msra.mxu0 %v2182
  %2238 = vmatpush.bf16.msra.mxu0 %v2180
  %2239 = vmatpush.bf16.msra.mxu0 %v2178
  %2240 = vmatpush.bf16.msra.mxu0 %v2176
  %2241 = vmatpush.bf16.msra.mxu0 %v2174
  %2242 = vmatpush.bf16.msra.mxu0 %v2172
  %2243 = vmatpush.bf16.msra.mxu0 %v2170
  %2244 = vmatpush.bf16.msra.mxu0 %v2168
  %2245 = vmatmul.f32.gmra.mxu0 %v2014
  %v2246 = vpop.f32.mrf.mxu0
  %v2247 = vadd.f32 %v2226, %v2246
  %2248 = vmatmul.f32.gmra.mxu0 %v2016
  %v2249 = vpop.f32.mrf.mxu0
  %v2250 = vadd.f32 %v2229, %v2249
  %2251 = vmatmul.f32.gmra.mxu0 %v2018
  %v2252 = vpop.f32.mrf.mxu0
  %v2253 = vadd.f32 %v2232, %v2252
  %2254 = vmatmul.f32.gmra.mxu0 %v2020
  %v2255 = vpop.f32.mrf.mxu0
  %v2256 = vadd.f32 %v2235, %v2255
  %2257 = vdwg.mxu0
  %2258 = vmatpush.bf16.msra.mxu0 %v2167
  %2259 = vmatpush.bf16.msra.mxu0 %v2165
  %2260 = vmatpush.bf16.msra.mxu0 %v2163
  %2261 = vmatpush.bf16.msra.mxu0 %v2161
  %2262 = vmatpush.bf16.msra.mxu0 %v2159
  %2263 = vmatpush.bf16.msra.mxu0 %v2157
  %2264 = vmatpush.bf16.msra.mxu0 %v2155
  %2265 = vmatpush.bf16.msra.mxu0 %v2153
  %2266 = vmatmul.f32.gmra.mxu0 %v2013
  %v2267 = vpop.f32.mrf.mxu0
  %v2268 = vadd.f32 0.0, %v2267
  %2269 = vmatmul.f32.gmra.mxu0 %v2015
  %v2270 = vpop.f32.mrf.mxu0
  %v2271 = vadd.f32 0.0, %v2270
  %2272 = vmatmul.f32.gmra.mxu0 %v2017
  %v2273 = vpop.f32.mrf.mxu0
  %v2274 = vadd.f32 0.0, %v2273
  %2275 = vmatmul.f32.gmra.mxu0 %v2019
  %v2276 = vpop.f32.mrf.mxu0
  %v2277 = vadd.f32 0.0, %v2276
  %2278 = vdwg.mxu0
  %2279 = vmatpush.bf16.msra.mxu0 %v2183
  %2280 = vmatpush.bf16.msra.mxu0 %v2181
  %2281 = vmatpush.bf16.msra.mxu0 %v2179
  %2282 = vmatpush.bf16.msra.mxu0 %v2177
  %2283 = vmatpush.bf16.msra.mxu0 %v2175
  %2284 = vmatpush.bf16.msra.mxu0 %v2173
  %2285 = vmatpush.bf16.msra.mxu0 %v2171
  %2286 = vmatpush.bf16.msra.mxu0 %v2169
  %2287 = vmatmul.f32.gmra.mxu0 %v2014
  %v2288 = vpop.f32.mrf.mxu0
  %v2289 = vadd.f32 %v2268, %v2288
  %2290 = vmatmul.f32.gmra.mxu0 %v2016
  %v2291 = vpop.f32.mrf.mxu0
  %v2292 = vadd.f32 %v2271, %v2291
  %2293 = vmatmul.f32.gmra.mxu0 %v2018
  %v2294 = vpop.f32.mrf.mxu0
  %v2295 = vadd.f32 %v2274, %v2294
  %2296 = vmatmul.f32.gmra.mxu0 %v2020
  %v2297 = vpop.f32.mrf.mxu0
  %v2298 = vadd.f32 %v2277, %v2297
  %2299 = vdwg.mxu0
  %v2300 = vadd.f32 %v2002, %v2247
  %v2301 = vadd.f32 %v2003, %v2289
  %v2302 = vadd.f32 %v2004, %v2250
  %v2303 = vadd.f32 %v2005, %v2292
  %v2304 = vadd.f32 %v2006, %v2253
  %v2305 = vadd.f32 %v2007, %v2295
  %v2306 = vadd.f32 %v2008, %v2256
  %v2307 = vadd.f32 %v2009, %v2298
  %2308 = vst [vmem:[#allocation3] sm:$0xff] %v2300
  %2309 = vst [vmem:[#allocation3 + $0x8] sm:$0xff] %v2301
  %2310 = vst [vmem:[#allocation3 + $0x10] sm:$0xff] %v2302
  %2311 = vst [vmem:[#allocation3 + $0x18] sm:$0xff] %v2303
  %2312 = vst [vmem:[#allocation3 + $0x20] sm:$0xff] %v2304
  %2313 = vst [vmem:[#allocation3 + $0x28] sm:$0xff] %v2305
  %2314 = vst [vmem:[#allocation3 + $0x30] sm:$0xff] %v2306
  %2315 = vst [vmem:[#allocation3 + $0x38] sm:$0xff] %v2307
  %v2316 = vld [vmem:[#allocation3] sm:$0xff]
  %v2317 = vld [vmem:[#allocation3 + $0x8] sm:$0xff]
  %v2318 = vld [vmem:[#allocation3 + $0x10] sm:$0xff]
  %v2319 = vld [vmem:[#allocation3 + $0x18] sm:$0xff]
  %v2320 = vld [vmem:[#allocation3 + $0x20] sm:$0xff]
  %v2321 = vld [vmem:[#allocation3 + $0x28] sm:$0xff]
  %v2322 = vld [vmem:[#allocation3 + $0x30] sm:$0xff]
  %v2323 = vld [vmem:[#allocation3 + $0x38] sm:$0xff]
  %s2324 = smul.u32 16, 2
  %s2325 = smul.addr %s2324, 8
  %s2326 = scalar_lea.vmem [#allocation2], %s2325
  %v2327 = vld [vmem:[%s2326] sm:$0xff]
  %v2328 = vld [vmem:[%s2326 + $0x8] sm:$0xff]
  %v2329 = vld [vmem:[%s2326 + $0x10] sm:$0xff]
  %v2330 = vld [vmem:[%s2326 + $0x18] sm:$0xff]
  %v2331 = vld [vmem:[%s2326 + $0x20] sm:$0xff]
  %v2332 = vld [vmem:[%s2326 + $0x28] sm:$0xff]
  %v2333 = vld [vmem:[%s2326 + $0x30] sm:$0xff]
  %v2334 = vld [vmem:[%s2326 + $0x38] sm:$0xff]
  %s2335 = smul.u32 128, 2
  %s2336 = smul.addr %s2335, 4
  %s2337 = scalar_lea.vmem %s12, %s2336
  %v2338 = vld [vmem:[%s2337] sm:$0xff]
  %v2339 = vld [vmem:[%s2337 + $0x8] sm:$0xff]
  %v2340 = vld [vmem:[%s2337 + $0x10] sm:$0xff]
  %v2341 = vld [vmem:[%s2337 + $0x18] sm:$0xff]
  %v2342 = vld [vmem:[%s2337 + $0x20] sm:$0xff]
  %v2343 = vld [vmem:[%s2337 + $0x28] sm:$0xff]
  %v2344 = vld [vmem:[%s2337 + $0x30] sm:$0xff]
  %v2345 = vld [vmem:[%s2337 + $0x38] sm:$0xff]
  %v2346 = vld [vmem:[%s2337 + $0x40] sm:$0xff]
  %v2347 = vld [vmem:[%s2337 + $0x48] sm:$0xff]
  %v2348 = vld [vmem:[%s2337 + $0x50] sm:$0xff]
  %v2349 = vld [vmem:[%s2337 + $0x58] sm:$0xff]
  %v2350 = vld [vmem:[%s2337 + $0x60] sm:$0xff]
  %v2351 = vld [vmem:[%s2337 + $0x68] sm:$0xff]
  %v2352 = vld [vmem:[%s2337 + $0x70] sm:$0xff]
  %v2353 = vld [vmem:[%s2337 + $0x78] sm:$0xff]
  %v2354 = vld [vmem:[%s2337 + $0x80] sm:$0xff]
  %v2355 = vld [vmem:[%s2337 + $0x88] sm:$0xff]
  %v2356 = vld [vmem:[%s2337 + $0x90] sm:$0xff]
  %v2357 = vld [vmem:[%s2337 + $0x98] sm:$0xff]
  %v2358 = vld [vmem:[%s2337 + $0xa0] sm:$0xff]
  %v2359 = vld [vmem:[%s2337 + $0xa8] sm:$0xff]
  %v2360 = vld [vmem:[%s2337 + $0xb0] sm:$0xff]
  %v2361 = vld [vmem:[%s2337 + $0xb8] sm:$0xff]
  %v2362 = vld [vmem:[%s2337 + $0xc0] sm:$0xff]
  %v2363 = vld [vmem:[%s2337 + $0xc8] sm:$0xff]
  %v2364 = vld [vmem:[%s2337 + $0xd0] sm:$0xff]
  %v2365 = vld [vmem:[%s2337 + $0xd8] sm:$0xff]
  %v2366 = vld [vmem:[%s2337 + $0xe0] sm:$0xff]
  %v2367 = vld [vmem:[%s2337 + $0xe8] sm:$0xff]
  %v2368 = vld [vmem:[%s2337 + $0xf0] sm:$0xff]
  %v2369 = vld [vmem:[%s2337 + $0xf8] sm:$0xff]
  %v2402 = vunpack.c.l.b16 %v2338
  %v2403 = vunpack.c.h.b16 %v2338
  %v2404 = vunpack.c.l.b16 %v2339
  %v2405 = vunpack.c.h.b16 %v2339
  %v2406 = vunpack.c.l.b16 %v2340
  %v2407 = vunpack.c.h.b16 %v2340
  %v2408 = vunpack.c.l.b16 %v2341
  %v2409 = vunpack.c.h.b16 %v2341
  %v2410 = vunpack.c.l.b16 %v2342
  %v2411 = vunpack.c.h.b16 %v2342
  %v2412 = vunpack.c.l.b16 %v2343
  %v2413 = vunpack.c.h.b16 %v2343
  %v2414 = vunpack.c.l.b16 %v2344
  %v2415 = vunpack.c.h.b16 %v2344
  %v2416 = vunpack.c.l.b16 %v2345
  %v2417 = vunpack.c.h.b16 %v2345
  %v2418 = vunpack.c.l.b16 %v2346
  %v2419 = vunpack.c.h.b16 %v2346
  %v2420 = vunpack.c.l.b16 %v2347
  %v2421 = vunpack.c.h.b16 %v2347
  %v2422 = vunpack.c.l.b16 %v2348
  %v2423 = vunpack.c.h.b16 %v2348
  %v2424 = vunpack.c.l.b16 %v2349
  %v2425 = vunpack.c.h.b16 %v2349
  %v2426 = vunpack.c.l.b16 %v2350
  %v2427 = vunpack.c.h.b16 %v2350
  %v2428 = vunpack.c.l.b16 %v2351
  %v2429 = vunpack.c.h.b16 %v2351
  %v2430 = vunpack.c.l.b16 %v2352
  %v2431 = vunpack.c.h.b16 %v2352
  %v2432 = vunpack.c.l.b16 %v2353
  %v2433 = vunpack.c.h.b16 %v2353
  %v2434 = vunpack.c.l.b16 %v2354
  %v2435 = vunpack.c.h.b16 %v2354
  %v2436 = vunpack.c.l.b16 %v2355
  %v2437 = vunpack.c.h.b16 %v2355
  %v2438 = vunpack.c.l.b16 %v2356
  %v2439 = vunpack.c.h.b16 %v2356
  %v2440 = vunpack.c.l.b16 %v2357
  %v2441 = vunpack.c.h.b16 %v2357
  %v2442 = vunpack.c.l.b16 %v2358
  %v2443 = vunpack.c.h.b16 %v2358
  %v2444 = vunpack.c.l.b16 %v2359
  %v2445 = vunpack.c.h.b16 %v2359
  %v2446 = vunpack.c.l.b16 %v2360
  %v2447 = vunpack.c.h.b16 %v2360
  %v2448 = vunpack.c.l.b16 %v2361
  %v2449 = vunpack.c.h.b16 %v2361
  %v2450 = vunpack.c.l.b16 %v2362
  %v2451 = vunpack.c.h.b16 %v2362
  %v2452 = vunpack.c.l.b16 %v2363
  %v2453 = vunpack.c.h.b16 %v2363
  %v2454 = vunpack.c.l.b16 %v2364
  %v2455 = vunpack.c.h.b16 %v2364
  %v2456 = vunpack.c.l.b16 %v2365
  %v2457 = vunpack.c.h.b16 %v2365
  %v2458 = vunpack.c.l.b16 %v2366
  %v2459 = vunpack.c.h.b16 %v2366
  %v2460 = vunpack.c.l.b16 %v2367
  %v2461 = vunpack.c.h.b16 %v2367
  %v2462 = vunpack.c.l.b16 %v2368
  %v2463 = vunpack.c.h.b16 %v2368
  %v2464 = vunpack.c.l.b16 %v2369
  %v2465 = vunpack.c.h.b16 %v2369
  %v2466 = vpack.c.b16 %v2404, %v2402
  %v2467 = vpack.c.b16 %v2405, %v2403
  %v2468 = vpack.c.b16 %v2408, %v2406
  %v2469 = vpack.c.b16 %v2409, %v2407
  %v2470 = vpack.c.b16 %v2412, %v2410
  %v2471 = vpack.c.b16 %v2413, %v2411
  %v2472 = vpack.c.b16 %v2416, %v2414
  %v2473 = vpack.c.b16 %v2417, %v2415
  %v2474 = vpack.c.b16 %v2420, %v2418
  %v2475 = vpack.c.b16 %v2421, %v2419
  %v2476 = vpack.c.b16 %v2424, %v2422
  %v2477 = vpack.c.b16 %v2425, %v2423
  %v2478 = vpack.c.b16 %v2428, %v2426
  %v2479 = vpack.c.b16 %v2429, %v2427
  %v2480 = vpack.c.b16 %v2432, %v2430
  %v2481 = vpack.c.b16 %v2433, %v2431
  %v2482 = vpack.c.b16 %v2436, %v2434
  %v2483 = vpack.c.b16 %v2437, %v2435
  %v2484 = vpack.c.b16 %v2440, %v2438
  %v2485 = vpack.c.b16 %v2441, %v2439
  %v2486 = vpack.c.b16 %v2444, %v2442
  %v2487 = vpack.c.b16 %v2445, %v2443
  %v2488 = vpack.c.b16 %v2448, %v2446
  %v2489 = vpack.c.b16 %v2449, %v2447
  %v2490 = vpack.c.b16 %v2452, %v2450
  %v2491 = vpack.c.b16 %v2453, %v2451
  %v2492 = vpack.c.b16 %v2456, %v2454
  %v2493 = vpack.c.b16 %v2457, %v2455
  %v2494 = vpack.c.b16 %v2460, %v2458
  %v2495 = vpack.c.b16 %v2461, %v2459
  %v2496 = vpack.c.b16 %v2464, %v2462
  %v2497 = vpack.c.b16 %v2465, %v2463
  %2530 = vmatpush.bf16.msra.mxu0 %v2480
  %2531 = vmatpush.bf16.msra.mxu0 %v2478
  %2532 = vmatpush.bf16.msra.mxu0 %v2476
  %2533 = vmatpush.bf16.msra.mxu0 %v2474
  %2534 = vmatpush.bf16.msra.mxu0 %v2472
  %2535 = vmatpush.bf16.msra.mxu0 %v2470
  %2536 = vmatpush.bf16.msra.mxu0 %v2468
  %2537 = vmatpush.bf16.msra.mxu0 %v2466
  %2538 = vmatmul.f32.gmra.mxu0 %v2327
  %v2539 = vpop.f32.mrf.mxu0
  %v2540 = vadd.f32 0.0, %v2539
  %2541 = vmatmul.f32.gmra.mxu0 %v2329
  %v2542 = vpop.f32.mrf.mxu0
  %v2543 = vadd.f32 0.0, %v2542
  %2544 = vmatmul.f32.gmra.mxu0 %v2331
  %v2545 = vpop.f32.mrf.mxu0
  %v2546 = vadd.f32 0.0, %v2545
  %2547 = vmatmul.f32.gmra.mxu0 %v2333
  %v2548 = vpop.f32.mrf.mxu0
  %v2549 = vadd.f32 0.0, %v2548
  %2550 = vdwg.mxu0
  %2551 = vmatpush.bf16.msra.mxu0 %v2496
  %2552 = vmatpush.bf16.msra.mxu0 %v2494
  %2553 = vmatpush.bf16.msra.mxu0 %v2492
  %2554 = vmatpush.bf16.msra.mxu0 %v2490
  %2555 = vmatpush.bf16.msra.mxu0 %v2488
  %2556 = vmatpush.bf16.msra.mxu0 %v2486
  %2557 = vmatpush.bf16.msra.mxu0 %v2484
  %2558 = vmatpush.bf16.msra.mxu0 %v2482
  %2559 = vmatmul.f32.gmra.mxu0 %v2328
  %v2560 = vpop.f32.mrf.mxu0
  %v2561 = vadd.f32 %v2540, %v2560
  %2562 = vmatmul.f32.gmra.mxu0 %v2330
  %v2563 = vpop.f32.mrf.mxu0
  %v2564 = vadd.f32 %v2543, %v2563
  %2565 = vmatmul.f32.gmra.mxu0 %v2332
  %v2566 = vpop.f32.mrf.mxu0
  %v2567 = vadd.f32 %v2546, %v2566
  %2568 = vmatmul.f32.gmra.mxu0 %v2334
  %v2569 = vpop.f32.mrf.mxu0
  %v2570 = vadd.f32 %v2549, %v2569
  %2571 = vdwg.mxu0
  %2572 = vmatpush.bf16.msra.mxu0 %v2481
  %2573 = vmatpush.bf16.msra.mxu0 %v2479
  %2574 = vmatpush.bf16.msra.mxu0 %v2477
  %2575 = vmatpush.bf16.msra.mxu0 %v2475
  %2576 = vmatpush.bf16.msra.mxu0 %v2473
  %2577 = vmatpush.bf16.msra.mxu0 %v2471
  %2578 = vmatpush.bf16.msra.mxu0 %v2469
  %2579 = vmatpush.bf16.msra.mxu0 %v2467
  %2580 = vmatmul.f32.gmra.mxu0 %v2327
  %v2581 = vpop.f32.mrf.mxu0
  %v2582 = vadd.f32 0.0, %v2581
  %2583 = vmatmul.f32.gmra.mxu0 %v2329
  %v2584 = vpop.f32.mrf.mxu0
  %v2585 = vadd.f32 0.0, %v2584
  %2586 = vmatmul.f32.gmra.mxu0 %v2331
  %v2587 = vpop.f32.mrf.mxu0
  %v2588 = vadd.f32 0.0, %v2587
  %2589 = vmatmul.f32.gmra.mxu0 %v2333
  %v2590 = vpop.f32.mrf.mxu0
  %v2591 = vadd.f32 0.0, %v2590
  %2592 = vdwg.mxu0
  %2593 = vmatpush.bf16.msra.mxu0 %v2497
  %2594 = vmatpush.bf16.msra.mxu0 %v2495
  %2595 = vmatpush.bf16.msra.mxu0 %v2493
  %2596 = vmatpush.bf16.msra.mxu0 %v2491
  %2597 = vmatpush.bf16.msra.mxu0 %v2489
  %2598 = vmatpush.bf16.msra.mxu0 %v2487
  %2599 = vmatpush.bf16.msra.mxu0 %v2485
  %2600 = vmatpush.bf16.msra.mxu0 %v2483
  %2601 = vmatmul.f32.gmra.mxu0 %v2328
  %v2602 = vpop.f32.mrf.mxu0
  %v2603 = vadd.f32 %v2582, %v2602
  %2604 = vmatmul.f32.gmra.mxu0 %v2330
  %v2605 = vpop.f32.mrf.mxu0
  %v2606 = vadd.f32 %v2585, %v2605
  %2607 = vmatmul.f32.gmra.mxu0 %v2332
  %v2608 = vpop.f32.mrf.mxu0
  %v2609 = vadd.f32 %v2588, %v2608
  %2610 = vmatmul.f32.gmra.mxu0 %v2334
  %v2611 = vpop.f32.mrf.mxu0
  %v2612 = vadd.f32 %v2591, %v2611
  %2613 = vdwg.mxu0
  %v2614 = vadd.f32 %v2316, %v2561
  %v2615 = vadd.f32 %v2317, %v2603
  %v2616 = vadd.f32 %v2318, %v2564
  %v2617 = vadd.f32 %v2319, %v2606
  %v2618 = vadd.f32 %v2320, %v2567
  %v2619 = vadd.f32 %v2321, %v2609
  %v2620 = vadd.f32 %v2322, %v2570
  %v2621 = vadd.f32 %v2323, %v2612
  %2622 = vst [vmem:[#allocation3] sm:$0xff] %v2614
  %2623 = vst [vmem:[#allocation3 + $0x8] sm:$0xff] %v2615
  %2624 = vst [vmem:[#allocation3 + $0x10] sm:$0xff] %v2616
  %2625 = vst [vmem:[#allocation3 + $0x18] sm:$0xff] %v2617
  %2626 = vst [vmem:[#allocation3 + $0x20] sm:$0xff] %v2618
  %2627 = vst [vmem:[#allocation3 + $0x28] sm:$0xff] %v2619
  %2628 = vst [vmem:[#allocation3 + $0x30] sm:$0xff] %v2620
  %2629 = vst [vmem:[#allocation3 + $0x38] sm:$0xff] %v2621
  %v2630 = vld [vmem:[#allocation3] sm:$0xff]
  %v2631 = vld [vmem:[#allocation3 + $0x8] sm:$0xff]
  %v2632 = vld [vmem:[#allocation3 + $0x10] sm:$0xff]
  %v2633 = vld [vmem:[#allocation3 + $0x18] sm:$0xff]
  %v2634 = vld [vmem:[#allocation3 + $0x20] sm:$0xff]
  %v2635 = vld [vmem:[#allocation3 + $0x28] sm:$0xff]
  %v2636 = vld [vmem:[#allocation3 + $0x30] sm:$0xff]
  %v2637 = vld [vmem:[#allocation3 + $0x38] sm:$0xff]
  %s2638 = smul.u32 20, 2
  %s2639 = smul.addr %s2638, 8
  %s2640 = scalar_lea.vmem [#allocation2], %s2639
  %v2641 = vld [vmem:[%s2640] sm:$0xff]
  %v2642 = vld [vmem:[%s2640 + $0x8] sm:$0xff]
  %v2643 = vld [vmem:[%s2640 + $0x10] sm:$0xff]
  %v2644 = vld [vmem:[%s2640 + $0x18] sm:$0xff]
  %v2645 = vld [vmem:[%s2640 + $0x20] sm:$0xff]
  %v2646 = vld [vmem:[%s2640 + $0x28] sm:$0xff]
  %v2647 = vld [vmem:[%s2640 + $0x30] sm:$0xff]
  %v2648 = vld [vmem:[%s2640 + $0x38] sm:$0xff]
  %s2649 = smul.u32 160, 2
  %s2650 = smul.addr %s2649, 4
  %s2651 = scalar_lea.vmem %s12, %s2650
  %v2652 = vld [vmem:[%s2651] sm:$0xff]
  %v2653 = vld [vmem:[%s2651 + $0x8] sm:$0xff]
  %v2654 = vld [vmem:[%s2651 + $0x10] sm:$0xff]
  %v2655 = vld [vmem:[%s2651 + $0x18] sm:$0xff]
  %v2656 = vld [vmem:[%s2651 + $0x20] sm:$0xff]
  %v2657 = vld [vmem:[%s2651 + $0x28] sm:$0xff]
  %v2658 = vld [vmem:[%s2651 + $0x30] sm:$0xff]
  %v2659 = vld [vmem:[%s2651 + $0x38] sm:$0xff]
  %v2660 = vld [vmem:[%s2651 + $0x40] sm:$0xff]
  %v2661 = vld [vmem:[%s2651 + $0x48] sm:$0xff]
  %v2662 = vld [vmem:[%s2651 + $0x50] sm:$0xff]
  %v2663 = vld [vmem:[%s2651 + $0x58] sm:$0xff]
  %v2664 = vld [vmem:[%s2651 + $0x60] sm:$0xff]
  %v2665 = vld [vmem:[%s2651 + $0x68] sm:$0xff]
  %v2666 = vld [vmem:[%s2651 + $0x70] sm:$0xff]
  %v2667 = vld [vmem:[%s2651 + $0x78] sm:$0xff]
  %v2668 = vld [vmem:[%s2651 + $0x80] sm:$0xff]
  %v2669 = vld [vmem:[%s2651 + $0x88] sm:$0xff]
  %v2670 = vld [vmem:[%s2651 + $0x90] sm:$0xff]
  %v2671 = vld [vmem:[%s2651 + $0x98] sm:$0xff]
  %v2672 = vld [vmem:[%s2651 + $0xa0] sm:$0xff]
  %v2673 = vld [vmem:[%s2651 + $0xa8] sm:$0xff]
  %v2674 = vld [vmem:[%s2651 + $0xb0] sm:$0xff]
  %v2675 = vld [vmem:[%s2651 + $0xb8] sm:$0xff]
  %v2676 = vld [vmem:[%s2651 + $0xc0] sm:$0xff]
  %v2677 = vld [vmem:[%s2651 + $0xc8] sm:$0xff]
  %v2678 = vld [vmem:[%s2651 + $0xd0] sm:$0xff]
  %v2679 = vld [vmem:[%s2651 + $0xd8] sm:$0xff]
  %v2680 = vld [vmem:[%s2651 + $0xe0] sm:$0xff]
  %v2681 = vld [vmem:[%s2651 + $0xe8] sm:$0xff]
  %v2682 = vld [vmem:[%s2651 + $0xf0] sm:$0xff]
  %v2683 = vld [vmem:[%s2651 + $0xf8] sm:$0xff]
  %v2716 = vunpack.c.l.b16 %v2652
  %v2717 = vunpack.c.h.b16 %v2652
  %v2718 = vunpack.c.l.b16 %v2653
  %v2719 = vunpack.c.h.b16 %v2653
  %v2720 = vunpack.c.l.b16 %v2654
  %v2721 = vunpack.c.h.b16 %v2654
  %v2722 = vunpack.c.l.b16 %v2655
  %v2723 = vunpack.c.h.b16 %v2655
  %v2724 = vunpack.c.l.b16 %v2656
  %v2725 = vunpack.c.h.b16 %v2656
  %v2726 = vunpack.c.l.b16 %v2657
  %v2727 = vunpack.c.h.b16 %v2657
  %v2728 = vunpack.c.l.b16 %v2658
  %v2729 = vunpack.c.h.b16 %v2658
  %v2730 = vunpack.c.l.b16 %v2659
  %v2731 = vunpack.c.h.b16 %v2659
  %v2732 = vunpack.c.l.b16 %v2660
  %v2733 = vunpack.c.h.b16 %v2660
  %v2734 = vunpack.c.l.b16 %v2661
  %v2735 = vunpack.c.h.b16 %v2661
  %v2736 = vunpack.c.l.b16 %v2662
  %v2737 = vunpack.c.h.b16 %v2662
  %v2738 = vunpack.c.l.b16 %v2663
  %v2739 = vunpack.c.h.b16 %v2663
  %v2740 = vunpack.c.l.b16 %v2664
  %v2741 = vunpack.c.h.b16 %v2664
  %v2742 = vunpack.c.l.b16 %v2665
  %v2743 = vunpack.c.h.b16 %v2665
  %v2744 = vunpack.c.l.b16 %v2666
  %v2745 = vunpack.c.h.b16 %v2666
  %v2746 = vunpack.c.l.b16 %v2667
  %v2747 = vunpack.c.h.b16 %v2667
  %v2748 = vunpack.c.l.b16 %v2668
  %v2749 = vunpack.c.h.b16 %v2668
  %v2750 = vunpack.c.l.b16 %v2669
  %v2751 = vunpack.c.h.b16 %v2669
  %v2752 = vunpack.c.l.b16 %v2670
  %v2753 = vunpack.c.h.b16 %v2670
  %v2754 = vunpack.c.l.b16 %v2671
  %v2755 = vunpack.c.h.b16 %v2671
  %v2756 = vunpack.c.l.b16 %v2672
  %v2757 = vunpack.c.h.b16 %v2672
  %v2758 = vunpack.c.l.b16 %v2673
  %v2759 = vunpack.c.h.b16 %v2673
  %v2760 = vunpack.c.l.b16 %v2674
  %v2761 = vunpack.c.h.b16 %v2674
  %v2762 = vunpack.c.l.b16 %v2675
  %v2763 = vunpack.c.h.b16 %v2675
  %v2764 = vunpack.c.l.b16 %v2676
  %v2765 = vunpack.c.h.b16 %v2676
  %v2766 = vunpack.c.l.b16 %v2677
  %v2767 = vunpack.c.h.b16 %v2677
  %v2768 = vunpack.c.l.b16 %v2678
  %v2769 = vunpack.c.h.b16 %v2678
  %v2770 = vunpack.c.l.b16 %v2679
  %v2771 = vunpack.c.h.b16 %v2679
  %v2772 = vunpack.c.l.b16 %v2680
  %v2773 = vunpack.c.h.b16 %v2680
  %v2774 = vunpack.c.l.b16 %v2681
  %v2775 = vunpack.c.h.b16 %v2681
  %v2776 = vunpack.c.l.b16 %v2682
  %v2777 = vunpack.c.h.b16 %v2682
  %v2778 = vunpack.c.l.b16 %v2683
  %v2779 = vunpack.c.h.b16 %v2683
  %v2780 = vpack.c.b16 %v2718, %v2716
  %v2781 = vpack.c.b16 %v2719, %v2717
  %v2782 = vpack.c.b16 %v2722, %v2720
  %v2783 = vpack.c.b16 %v2723, %v2721
  %v2784 = vpack.c.b16 %v2726, %v2724
  %v2785 = vpack.c.b16 %v2727, %v2725
  %v2786 = vpack.c.b16 %v2730, %v2728
  %v2787 = vpack.c.b16 %v2731, %v2729
  %v2788 = vpack.c.b16 %v2734, %v2732
  %v2789 = vpack.c.b16 %v2735, %v2733
  %v2790 = vpack.c.b16 %v2738, %v2736
  %v2791 = vpack.c.b16 %v2739, %v2737
  %v2792 = vpack.c.b16 %v2742, %v2740
  %v2793 = vpack.c.b16 %v2743, %v2741
  %v2794 = vpack.c.b16 %v2746, %v2744
  %v2795 = vpack.c.b16 %v2747, %v2745
  %v2796 = vpack.c.b16 %v2750, %v2748
  %v2797 = vpack.c.b16 %v2751, %v2749
  %v2798 = vpack.c.b16 %v2754, %v2752
  %v2799 = vpack.c.b16 %v2755, %v2753
  %v2800 = vpack.c.b16 %v2758, %v2756
  %v2801 = vpack.c.b16 %v2759, %v2757
  %v2802 = vpack.c.b16 %v2762, %v2760
  %v2803 = vpack.c.b16 %v2763, %v2761
  %v2804 = vpack.c.b16 %v2766, %v2764
  %v2805 = vpack.c.b16 %v2767, %v2765
  %v2806 = vpack.c.b16 %v2770, %v2768
  %v2807 = vpack.c.b16 %v2771, %v2769
  %v2808 = vpack.c.b16 %v2774, %v2772
  %v2809 = vpack.c.b16 %v2775, %v2773
  %v2810 = vpack.c.b16 %v2778, %v2776
  %v2811 = vpack.c.b16 %v2779, %v2777
  %2844 = vmatpush.bf16.msra.mxu0 %v2794
  %2845 = vmatpush.bf16.msra.mxu0 %v2792
  %2846 = vmatpush.bf16.msra.mxu0 %v2790
  %2847 = vmatpush.bf16.msra.mxu0 %v2788
  %2848 = vmatpush.bf16.msra.mxu0 %v2786
  %2849 = vmatpush.bf16.msra.mxu0 %v2784
  %2850 = vmatpush.bf16.msra.mxu0 %v2782
  %2851 = vmatpush.bf16.msra.mxu0 %v2780
  %2852 = vmatmul.f32.gmra.mxu0 %v2641
  %v2853 = vpop.f32.mrf.mxu0
  %v2854 = vadd.f32 0.0, %v2853
  %2855 = vmatmul.f32.gmra.mxu0 %v2643
  %v2856 = vpop.f32.mrf.mxu0
  %v2857 = vadd.f32 0.0, %v2856
  %2858 = vmatmul.f32.gmra.mxu0 %v2645
  %v2859 = vpop.f32.mrf.mxu0
  %v2860 = vadd.f32 0.0, %v2859
  %2861 = vmatmul.f32.gmra.mxu0 %v2647
  %v2862 = vpop.f32.mrf.mxu0
  %v2863 = vadd.f32 0.0, %v2862
  %2864 = vdwg.mxu0
  %2865 = vmatpush.bf16.msra.mxu0 %v2810
  %2866 = vmatpush.bf16.msra.mxu0 %v2808
  %2867 = vmatpush.bf16.msra.mxu0 %v2806
  %2868 = vmatpush.bf16.msra.mxu0 %v2804
  %2869 = vmatpush.bf16.msra.mxu0 %v2802
  %2870 = vmatpush.bf16.msra.mxu0 %v2800
  %2871 = vmatpush.bf16.msra.mxu0 %v2798
  %2872 = vmatpush.bf16.msra.mxu0 %v2796
  %2873 = vmatmul.f32.gmra.mxu0 %v2642
  %v2874 = vpop.f32.mrf.mxu0
  %v2875 = vadd.f32 %v2854, %v2874
  %2876 = vmatmul.f32.gmra.mxu0 %v2644
  %v2877 = vpop.f32.mrf.mxu0
  %v2878 = vadd.f32 %v2857, %v2877
  %2879 = vmatmul.f32.gmra.mxu0 %v2646
  %v2880 = vpop.f32.mrf.mxu0
  %v2881 = vadd.f32 %v2860, %v2880
  %2882 = vmatmul.f32.gmra.mxu0 %v2648
  %v2883 = vpop.f32.mrf.mxu0
  %v2884 = vadd.f32 %v2863, %v2883
  %2885 = vdwg.mxu0
  %2886 = vmatpush.bf16.msra.mxu0 %v2795
  %2887 = vmatpush.bf16.msra.mxu0 %v2793
  %2888 = vmatpush.bf16.msra.mxu0 %v2791
  %2889 = vmatpush.bf16.msra.mxu0 %v2789
  %2890 = vmatpush.bf16.msra.mxu0 %v2787
  %2891 = vmatpush.bf16.msra.mxu0 %v2785
  %2892 = vmatpush.bf16.msra.mxu0 %v2783
  %2893 = vmatpush.bf16.msra.mxu0 %v2781
  %2894 = vmatmul.f32.gmra.mxu0 %v2641
  %v2895 = vpop.f32.mrf.mxu0
  %v2896 = vadd.f32 0.0, %v2895
  %2897 = vmatmul.f32.gmra.mxu0 %v2643
  %v2898 = vpop.f32.mrf.mxu0
  %v2899 = vadd.f32 0.0, %v2898
  %2900 = vmatmul.f32.gmra.mxu0 %v2645
  %v2901 = vpop.f32.mrf.mxu0
  %v2902 = vadd.f32 0.0, %v2901
  %2903 = vmatmul.f32.gmra.mxu0 %v2647
  %v2904 = vpop.f32.mrf.mxu0
  %v2905 = vadd.f32 0.0, %v2904
  %2906 = vdwg.mxu0
  %2907 = vmatpush.bf16.msra.mxu0 %v2811
  %2908 = vmatpush.bf16.msra.mxu0 %v2809
  %2909 = vmatpush.bf16.msra.mxu0 %v2807
  %2910 = vmatpush.bf16.msra.mxu0 %v2805
  %2911 = vmatpush.bf16.msra.mxu0 %v2803
  %2912 = vmatpush.bf16.msra.mxu0 %v2801
  %2913 = vmatpush.bf16.msra.mxu0 %v2799
  %2914 = vmatpush.bf16.msra.mxu0 %v2797
  %2915 = vmatmul.f32.gmra.mxu0 %v2642
  %v2916 = vpop.f32.mrf.mxu0
  %v2917 = vadd.f32 %v2896, %v2916
  %2918 = vmatmul.f32.gmra.mxu0 %v2644
  %v2919 = vpop.f32.mrf.mxu0
  %v2920 = vadd.f32 %v2899, %v2919
  %2921 = vmatmul.f32.gmra.mxu0 %v2646
  %v2922 = vpop.f32.mrf.mxu0
  %v2923 = vadd.f32 %v2902, %v2922
  %2924 = vmatmul.f32.gmra.mxu0 %v2648
  %v2925 = vpop.f32.mrf.mxu0
  %v2926 = vadd.f32 %v2905, %v2925
  %2927 = vdwg.mxu0
  %v2928 = vadd.f32 %v2630, %v2875
  %v2929 = vadd.f32 %v2631, %v2917
  %v2930 = vadd.f32 %v2632, %v2878
  %v2931 = vadd.f32 %v2633, %v2920
  %v2932 = vadd.f32 %v2634, %v2881
  %v2933 = vadd.f32 %v2635, %v2923
  %v2934 = vadd.f32 %v2636, %v2884
  %v2935 = vadd.f32 %v2637, %v2926
  %2936 = vst [vmem:[#allocation3] sm:$0xff] %v2928
  %2937 = vst [vmem:[#allocation3 + $0x8] sm:$0xff] %v2929
  %2938 = vst [vmem:[#allocation3 + $0x10] sm:$0xff] %v2930
  %2939 = vst [vmem:[#allocation3 + $0x18] sm:$0xff] %v2931
  %2940 = vst [vmem:[#allocation3 + $0x20] sm:$0xff] %v2932
  %2941 = vst [vmem:[#allocation3 + $0x28] sm:$0xff] %v2933
  %2942 = vst [vmem:[#allocation3 + $0x30] sm:$0xff] %v2934
  %2943 = vst [vmem:[#allocation3 + $0x38] sm:$0xff] %v2935
  %v2944 = vld [vmem:[#allocation3] sm:$0xff]
  %v2945 = vld [vmem:[#allocation3 + $0x8] sm:$0xff]
  %v2946 = vld [vmem:[#allocation3 + $0x10] sm:$0xff]
  %v2947 = vld [vmem:[#allocation3 + $0x18] sm:$0xff]
  %v2948 = vld [vmem:[#allocation3 + $0x20] sm:$0xff]
  %v2949 = vld [vmem:[#allocation3 + $0x28] sm:$0xff]
  %v2950 = vld [vmem:[#allocation3 + $0x30] sm:$0xff]
  %v2951 = vld [vmem:[#allocation3 + $0x38] sm:$0xff]
  %s2952 = smul.u32 24, 2
  %s2953 = smul.addr %s2952, 8
  %s2954 = scalar_lea.vmem [#allocation2], %s2953
  %v2955 = vld [vmem:[%s2954] sm:$0xff]
  %v2956 = vld [vmem:[%s2954 + $0x8] sm:$0xff]
  %v2957 = vld [vmem:[%s2954 + $0x10] sm:$0xff]
  %v2958 = vld [vmem:[%s2954 + $0x18] sm:$0xff]
  %v2959 = vld [vmem:[%s2954 + $0x20] sm:$0xff]
  %v2960 = vld [vmem:[%s2954 + $0x28] sm:$0xff]
  %v2961 = vld [vmem:[%s2954 + $0x30] sm:$0xff]
  %v2962 = vld [vmem:[%s2954 + $0x38] sm:$0xff]
  %s2963 = smul.u32 192, 2
  %s2964 = smul.addr %s2963, 4
  %s2965 = scalar_lea.vmem %s12, %s2964
  %v2966 = vld [vmem:[%s2965] sm:$0xff]
  %v2967 = vld [vmem:[%s2965 + $0x8] sm:$0xff]
  %v2968 = vld [vmem:[%s2965 + $0x10] sm:$0xff]
  %v2969 = vld [vmem:[%s2965 + $0x18] sm:$0xff]
  %v2970 = vld [vmem:[%s2965 + $0x20] sm:$0xff]
  %v2971 = vld [vmem:[%s2965 + $0x28] sm:$0xff]
  %v2972 = vld [vmem:[%s2965 + $0x30] sm:$0xff]
  %v2973 = vld [vmem:[%s2965 + $0x38] sm:$0xff]
  %v2974 = vld [vmem:[%s2965 + $0x40] sm:$0xff]
  %v2975 = vld [vmem:[%s2965 + $0x48] sm:$0xff]
  %v2976 = vld [vmem:[%s2965 + $0x50] sm:$0xff]
  %v2977 = vld [vmem:[%s2965 + $0x58] sm:$0xff]
  %v2978 = vld [vmem:[%s2965 + $0x60] sm:$0xff]
  %v2979 = vld [vmem:[%s2965 + $0x68] sm:$0xff]
  %v2980 = vld [vmem:[%s2965 + $0x70] sm:$0xff]
  %v2981 = vld [vmem:[%s2965 + $0x78] sm:$0xff]
  %v2982 = vld [vmem:[%s2965 + $0x80] sm:$0xff]
  %v2983 = vld [vmem:[%s2965 + $0x88] sm:$0xff]
  %v2984 = vld [vmem:[%s2965 + $0x90] sm:$0xff]
  %v2985 = vld [vmem:[%s2965 + $0x98] sm:$0xff]
  %v2986 = vld [vmem:[%s2965 + $0xa0] sm:$0xff]
  %v2987 = vld [vmem:[%s2965 + $0xa8] sm:$0xff]
  %v2988 = vld [vmem:[%s2965 + $0xb0] sm:$0xff]
  %v2989 = vld [vmem:[%s2965 + $0xb8] sm:$0xff]
  %v2990 = vld [vmem:[%s2965 + $0xc0] sm:$0xff]
  %v2991 = vld [vmem:[%s2965 + $0xc8] sm:$0xff]
  %v2992 = vld [vmem:[%s2965 + $0xd0] sm:$0xff]
  %v2993 = vld [vmem:[%s2965 + $0xd8] sm:$0xff]
  %v2994 = vld [vmem:[%s2965 + $0xe0] sm:$0xff]
  %v2995 = vld [vmem:[%s2965 + $0xe8] sm:$0xff]
  %v2996 = vld [vmem:[%s2965 + $0xf0] sm:$0xff]
  %v2997 = vld [vmem:[%s2965 + $0xf8] sm:$0xff]
  %v3030 = vunpack.c.l.b16 %v2966
  %v3031 = vunpack.c.h.b16 %v2966
  %v3032 = vunpack.c.l.b16 %v2967
  %v3033 = vunpack.c.h.b16 %v2967
  %v3034 = vunpack.c.l.b16 %v2968
  %v3035 = vunpack.c.h.b16 %v2968
  %v3036 = vunpack.c.l.b16 %v2969
  %v3037 = vunpack.c.h.b16 %v2969
  %v3038 = vunpack.c.l.b16 %v2970
  %v3039 = vunpack.c.h.b16 %v2970
  %v3040 = vunpack.c.l.b16 %v2971
  %v3041 = vunpack.c.h.b16 %v2971
  %v3042 = vunpack.c.l.b16 %v2972
  %v3043 = vunpack.c.h.b16 %v2972
  %v3044 = vunpack.c.l.b16 %v2973
  %v3045 = vunpack.c.h.b16 %v2973
  %v3046 = vunpack.c.l.b16 %v2974
  %v3047 = vunpack.c.h.b16 %v2974
  %v3048 = vunpack.c.l.b16 %v2975
  %v3049 = vunpack.c.h.b16 %v2975
  %v3050 = vunpack.c.l.b16 %v2976
  %v3051 = vunpack.c.h.b16 %v2976
  %v3052 = vunpack.c.l.b16 %v2977
  %v3053 = vunpack.c.h.b16 %v2977
  %v3054 = vunpack.c.l.b16 %v2978
  %v3055 = vunpack.c.h.b16 %v2978
  %v3056 = vunpack.c.l.b16 %v2979
  %v3057 = vunpack.c.h.b16 %v2979
  %v3058 = vunpack.c.l.b16 %v2980
  %v3059 = vunpack.c.h.b16 %v2980
  %v3060 = vunpack.c.l.b16 %v2981
  %v3061 = vunpack.c.h.b16 %v2981
  %v3062 = vunpack.c.l.b16 %v2982
  %v3063 = vunpack.c.h.b16 %v2982
  %v3064 = vunpack.c.l.b16 %v2983
  %v3065 = vunpack.c.h.b16 %v2983
  %v3066 = vunpack.c.l.b16 %v2984
  %v3067 = vunpack.c.h.b16 %v2984
  %v3068 = vunpack.c.l.b16 %v2985
  %v3069 = vunpack.c.h.b16 %v2985
  %v3070 = vunpack.c.l.b16 %v2986
  %v3071 = vunpack.c.h.b16 %v2986
  %v3072 = vunpack.c.l.b16 %v2987
  %v3073 = vunpack.c.h.b16 %v2987
  %v3074 = vunpack.c.l.b16 %v2988
  %v3075 = vunpack.c.h.b16 %v2988
  %v3076 = vunpack.c.l.b16 %v2989
  %v3077 = vunpack.c.h.b16 %v2989
  %v3078 = vunpack.c.l.b16 %v2990
  %v3079 = vunpack.c.h.b16 %v2990
  %v3080 = vunpack.c.l.b16 %v2991
  %v3081 = vunpack.c.h.b16 %v2991
  %v3082 = vunpack.c.l.b16 %v2992
  %v3083 = vunpack.c.h.b16 %v2992
  %v3084 = vunpack.c.l.b16 %v2993
  %v3085 = vunpack.c.h.b16 %v2993
  %v3086 = vunpack.c.l.b16 %v2994
  %v3087 = vunpack.c.h.b16 %v2994
  %v3088 = vunpack.c.l.b16 %v2995
  %v3089 = vunpack.c.h.b16 %v2995
  %v3090 = vunpack.c.l.b16 %v2996
  %v3091 = vunpack.c.h.b16 %v2996
  %v3092 = vunpack.c.l.b16 %v2997
  %v3093 = vunpack.c.h.b16 %v2997
  %v3094 = vpack.c.b16 %v3032, %v3030
  %v3095 = vpack.c.b16 %v3033, %v3031
  %v3096 = vpack.c.b16 %v3036, %v3034
  %v3097 = vpack.c.b16 %v3037, %v3035
  %v3098 = vpack.c.b16 %v3040, %v3038
  %v3099 = vpack.c.b16 %v3041, %v3039
  %v3100 = vpack.c.b16 %v3044, %v3042
  %v3101 = vpack.c.b16 %v3045, %v3043
  %v3102 = vpack.c.b16 %v3048, %v3046
  %v3103 = vpack.c.b16 %v3049, %v3047
  %v3104 = vpack.c.b16 %v3052, %v3050
  %v3105 = vpack.c.b16 %v3053, %v3051
  %v3106 = vpack.c.b16 %v3056, %v3054
  %v3107 = vpack.c.b16 %v3057, %v3055
  %v3108 = vpack.c.b16 %v3060, %v3058
  %v3109 = vpack.c.b16 %v3061, %v3059
  %v3110 = vpack.c.b16 %v3064, %v3062
  %v3111 = vpack.c.b16 %v3065, %v3063
  %v3112 = vpack.c.b16 %v3068, %v3066
  %v3113 = vpack.c.b16 %v3069, %v3067
  %v3114 = vpack.c.b16 %v3072, %v3070
  %v3115 = vpack.c.b16 %v3073, %v3071
  %v3116 = vpack.c.b16 %v3076, %v3074
  %v3117 = vpack.c.b16 %v3077, %v3075
  %v3118 = vpack.c.b16 %v3080, %v3078
  %v3119 = vpack.c.b16 %v3081, %v3079
  %v3120 = vpack.c.b16 %v3084, %v3082
  %v3121 = vpack.c.b16 %v3085, %v3083
  %v3122 = vpack.c.b16 %v3088, %v3086
  %v3123 = vpack.c.b16 %v3089, %v3087
  %v3124 = vpack.c.b16 %v3092, %v3090
  %v3125 = vpack.c.b16 %v3093, %v3091
  %3158 = vmatpush.bf16.msra.mxu0 %v3108
  %3159 = vmatpush.bf16.msra.mxu0 %v3106
  %3160 = vmatpush.bf16.msra.mxu0 %v3104
  %3161 = vmatpush.bf16.msra.mxu0 %v3102
  %3162 = vmatpush.bf16.msra.mxu0 %v3100
  %3163 = vmatpush.bf16.msra.mxu0 %v3098
  %3164 = vmatpush.bf16.msra.mxu0 %v3096
  %3165 = vmatpush.bf16.msra.mxu0 %v3094
  %3166 = vmatmul.f32.gmra.mxu0 %v2955
  %v3167 = vpop.f32.mrf.mxu0
  %v3168 = vadd.f32 0.0, %v3167
  %3169 = vmatmul.f32.gmra.mxu0 %v2957
  %v3170 = vpop.f32.mrf.mxu0
  %v3171 = vadd.f32 0.0, %v3170
  %3172 = vmatmul.f32.gmra.mxu0 %v2959
  %v3173 = vpop.f32.mrf.mxu0
  %v3174 = vadd.f32 0.0, %v3173
  %3175 = vmatmul.f32.gmra.mxu0 %v2961
  %v3176 = vpop.f32.mrf.mxu0
  %v3177 = vadd.f32 0.0, %v3176
  %3178 = vdwg.mxu0
  %3179 = vmatpush.bf16.msra.mxu0 %v3124
  %3180 = vmatpush.bf16.msra.mxu0 %v3122
  %3181 = vmatpush.bf16.msra.mxu0 %v3120
  %3182 = vmatpush.bf16.msra.mxu0 %v3118
  %3183 = vmatpush.bf16.msra.mxu0 %v3116
  %3184 = vmatpush.bf16.msra.mxu0 %v3114
  %3185 = vmatpush.bf16.msra.mxu0 %v3112
  %3186 = vmatpush.bf16.msra.mxu0 %v3110
  %3187 = vmatmul.f32.gmra.mxu0 %v2956
  %v3188 = vpop.f32.mrf.mxu0
  %v3189 = vadd.f32 %v3168, %v3188
  %3190 = vmatmul.f32.gmra.mxu0 %v2958
  %v3191 = vpop.f32.mrf.mxu0
  %v3192 = vadd.f32 %v3171, %v3191
  %3193 = vmatmul.f32.gmra.mxu0 %v2960
  %v3194 = vpop.f32.mrf.mxu0
  %v3195 = vadd.f32 %v3174, %v3194
  %3196 = vmatmul.f32.gmra.mxu0 %v2962
  %v3197 = vpop.f32.mrf.mxu0
  %v3198 = vadd.f32 %v3177, %v3197
  %3199 = vdwg.mxu0
  %3200 = vmatpush.bf16.msra.mxu0 %v3109
  %3201 = vmatpush.bf16.msra.mxu0 %v3107
  %3202 = vmatpush.bf16.msra.mxu0 %v3105
  %3203 = vmatpush.bf16.msra.mxu0 %v3103
  %3204 = vmatpush.bf16.msra.mxu0 %v3101
  %3205 = vmatpush.bf16.msra.mxu0 %v3099
  %3206 = vmatpush.bf16.msra.mxu0 %v3097
  %3207 = vmatpush.bf16.msra.mxu0 %v3095
  %3208 = vmatmul.f32.gmra.mxu0 %v2955
  %v3209 = vpop.f32.mrf.mxu0
  %v3210 = vadd.f32 0.0, %v3209
  %3211 = vmatmul.f32.gmra.mxu0 %v2957
  %v3212 = vpop.f32.mrf.mxu0
  %v3213 = vadd.f32 0.0, %v3212
  %3214 = vmatmul.f32.gmra.mxu0 %v2959
  %v3215 = vpop.f32.mrf.mxu0
  %v3216 = vadd.f32 0.0, %v3215
  %3217 = vmatmul.f32.gmra.mxu0 %v2961
  %v3218 = vpop.f32.mrf.mxu0
  %v3219 = vadd.f32 0.0, %v3218
  %3220 = vdwg.mxu0
  %3221 = vmatpush.bf16.msra.mxu0 %v3125
  %3222 = vmatpush.bf16.msra.mxu0 %v3123
  %3223 = vmatpush.bf16.msra.mxu0 %v3121
  %3224 = vmatpush.bf16.msra.mxu0 %v3119
  %3225 = vmatpush.bf16.msra.mxu0 %v3117
  %3226 = vmatpush.bf16.msra.mxu0 %v3115
  %3227 = vmatpush.bf16.msra.mxu0 %v3113
  %3228 = vmatpush.bf16.msra.mxu0 %v3111
  %3229 = vmatmul.f32.gmra.mxu0 %v2956
  %v3230 = vpop.f32.mrf.mxu0
  %v3231 = vadd.f32 %v3210, %v3230
  %3232 = vmatmul.f32.gmra.mxu0 %v2958
  %v3233 = vpop.f32.mrf.mxu0
  %v3234 = vadd.f32 %v3213, %v3233
  %3235 = vmatmul.f32.gmra.mxu0 %v2960
  %v3236 = vpop.f32.mrf.mxu0
  %v3237 = vadd.f32 %v3216, %v3236
  %3238 = vmatmul.f32.gmra.mxu0 %v2962
  %v3239 = vpop.f32.mrf.mxu0
  %v3240 = vadd.f32 %v3219, %v3239
  %3241 = vdwg.mxu0
  %v3242 = vadd.f32 %v2944, %v3189
  %v3243 = vadd.f32 %v2945, %v3231
  %v3244 = vadd.f32 %v2946, %v3192
  %v3245 = vadd.f32 %v2947, %v3234
  %v3246 = vadd.f32 %v2948, %v3195
  %v3247 = vadd.f32 %v2949, %v3237
  %v3248 = vadd.f32 %v2950, %v3198
  %v3249 = vadd.f32 %v2951, %v3240
  %3250 = vst [vmem:[#allocation3] sm:$0xff] %v3242
  %3251 = vst [vmem:[#allocation3 + $0x8] sm:$0xff] %v3243
  %3252 = vst [vmem:[#allocation3 + $0x10] sm:$0xff] %v3244
  %3253 = vst [vmem:[#allocation3 + $0x18] sm:$0xff] %v3245
  %3254 = vst [vmem:[#allocation3 + $0x20] sm:$0xff] %v3246
  %3255 = vst [vmem:[#allocation3 + $0x28] sm:$0xff] %v3247
  %3256 = vst [vmem:[#allocation3 + $0x30] sm:$0xff] %v3248
  %3257 = vst [vmem:[#allocation3 + $0x38] sm:$0xff] %v3249
  %v3258 = vld [vmem:[#allocation3] sm:$0xff]
  %v3259 = vld [vmem:[#allocation3 + $0x8] sm:$0xff]
  %v3260 = vld [vmem:[#allocation3 + $0x10] sm:$0xff]
  %v3261 = vld [vmem:[#allocation3 + $0x18] sm:$0xff]
  %v3262 = vld [vmem:[#allocation3 + $0x20] sm:$0xff]
  %v3263 = vld [vmem:[#allocation3 + $0x28] sm:$0xff]
  %v3264 = vld [vmem:[#allocation3 + $0x30] sm:$0xff]
  %v3265 = vld [vmem:[#allocation3 + $0x38] sm:$0xff]
  %s3266 = smul.u32 28, 2
  %s3267 = smul.addr %s3266, 8
  %s3268 = scalar_lea.vmem [#allocation2], %s3267
  %v3269 = vld [vmem:[%s3268] sm:$0xff]
  %v3270 = vld [vmem:[%s3268 + $0x8] sm:$0xff]
  %v3271 = vld [vmem:[%s3268 + $0x10] sm:$0xff]
  %v3272 = vld [vmem:[%s3268 + $0x18] sm:$0xff]
  %v3273 = vld [vmem:[%s3268 + $0x20] sm:$0xff]
  %v3274 = vld [vmem:[%s3268 + $0x28] sm:$0xff]
  %v3275 = vld [vmem:[%s3268 + $0x30] sm:$0xff]
  %v3276 = vld [vmem:[%s3268 + $0x38] sm:$0xff]
  %s3277 = smul.u32 224, 2
  %s3278 = smul.addr %s3277, 4
  %s3279 = scalar_lea.vmem %s12, %s3278
  %v3280 = vld [vmem:[%s3279] sm:$0xff]
  %v3281 = vld [vmem:[%s3279 + $0x8] sm:$0xff]
  %v3282 = vld [vmem:[%s3279 + $0x10] sm:$0xff]
  %v3283 = vld [vmem:[%s3279 + $0x18] sm:$0xff]
  %v3284 = vld [vmem:[%s3279 + $0x20] sm:$0xff]
  %v3285 = vld [vmem:[%s3279 + $0x28] sm:$0xff]
  %v3286 = vld [vmem:[%s3279 + $0x30] sm:$0xff]
  %v3287 = vld [vmem:[%s3279 + $0x38] sm:$0xff]
  %v3288 = vld [vmem:[%s3279 + $0x40] sm:$0xff]
  %v3289 = vld [vmem:[%s3279 + $0x48] sm:$0xff]
  %v3290 = vld [vmem:[%s3279 + $0x50] sm:$0xff]
  %v3291 = vld [vmem:[%s3279 + $0x58] sm:$0xff]
  %v3292 = vld [vmem:[%s3279 + $0x60] sm:$0xff]
  %v3293 = vld [vmem:[%s3279 + $0x68] sm:$0xff]
  %v3294 = vld [vmem:[%s3279 + $0x70] sm:$0xff]
  %v3295 = vld [vmem:[%s3279 + $0x78] sm:$0xff]
  %v3296 = vld [vmem:[%s3279 + $0x80] sm:$0xff]
  %v3297 = vld [vmem:[%s3279 + $0x88] sm:$0xff]
  %v3298 = vld [vmem:[%s3279 + $0x90] sm:$0xff]
  %v3299 = vld [vmem:[%s3279 + $0x98] sm:$0xff]
  %v3300 = vld [vmem:[%s3279 + $0xa0] sm:$0xff]
  %v3301 = vld [vmem:[%s3279 + $0xa8] sm:$0xff]
  %v3302 = vld [vmem:[%s3279 + $0xb0] sm:$0xff]
  %v3303 = vld [vmem:[%s3279 + $0xb8] sm:$0xff]
  %v3304 = vld [vmem:[%s3279 + $0xc0] sm:$0xff]
  %v3305 = vld [vmem:[%s3279 + $0xc8] sm:$0xff]
  %v3306 = vld [vmem:[%s3279 + $0xd0] sm:$0xff]
  %v3307 = vld [vmem:[%s3279 + $0xd8] sm:$0xff]
  %v3308 = vld [vmem:[%s3279 + $0xe0] sm:$0xff]
  %v3309 = vld [vmem:[%s3279 + $0xe8] sm:$0xff]
  %v3310 = vld [vmem:[%s3279 + $0xf0] sm:$0xff]
  %v3311 = vld [vmem:[%s3279 + $0xf8] sm:$0xff]
  %v3344 = vunpack.c.l.b16 %v3280
  %v3345 = vunpack.c.h.b16 %v3280
  %v3346 = vunpack.c.l.b16 %v3281
  %v3347 = vunpack.c.h.b16 %v3281
  %v3348 = vunpack.c.l.b16 %v3282
  %v3349 = vunpack.c.h.b16 %v3282
  %v3350 = vunpack.c.l.b16 %v3283
  %v3351 = vunpack.c.h.b16 %v3283
  %v3352 = vunpack.c.l.b16 %v3284
  %v3353 = vunpack.c.h.b16 %v3284
  %v3354 = vunpack.c.l.b16 %v3285
  %v3355 = vunpack.c.h.b16 %v3285
  %v3356 = vunpack.c.l.b16 %v3286
  %v3357 = vunpack.c.h.b16 %v3286
  %v3358 = vunpack.c.l.b16 %v3287
  %v3359 = vunpack.c.h.b16 %v3287
  %v3360 = vunpack.c.l.b16 %v3288
  %v3361 = vunpack.c.h.b16 %v3288
  %v3362 = vunpack.c.l.b16 %v3289
  %v3363 = vunpack.c.h.b16 %v3289
  %v3364 = vunpack.c.l.b16 %v3290
  %v3365 = vunpack.c.h.b16 %v3290
  %v3366 = vunpack.c.l.b16 %v3291
  %v3367 = vunpack.c.h.b16 %v3291
  %v3368 = vunpack.c.l.b16 %v3292
  %v3369 = vunpack.c.h.b16 %v3292
  %v3370 = vunpack.c.l.b16 %v3293
  %v3371 = vunpack.c.h.b16 %v3293
  %v3372 = vunpack.c.l.b16 %v3294
  %v3373 = vunpack.c.h.b16 %v3294
  %v3374 = vunpack.c.l.b16 %v3295
  %v3375 = vunpack.c.h.b16 %v3295
  %v3376 = vunpack.c.l.b16 %v3296
  %v3377 = vunpack.c.h.b16 %v3296
  %v3378 = vunpack.c.l.b16 %v3297
  %v3379 = vunpack.c.h.b16 %v3297
  %v3380 = vunpack.c.l.b16 %v3298
  %v3381 = vunpack.c.h.b16 %v3298
  %v3382 = vunpack.c.l.b16 %v3299
  %v3383 = vunpack.c.h.b16 %v3299
  %v3384 = vunpack.c.l.b16 %v3300
  %v3385 = vunpack.c.h.b16 %v3300
  %v3386 = vunpack.c.l.b16 %v3301
  %v3387 = vunpack.c.h.b16 %v3301
  %v3388 = vunpack.c.l.b16 %v3302
  %v3389 = vunpack.c.h.b16 %v3302
  %v3390 = vunpack.c.l.b16 %v3303
  %v3391 = vunpack.c.h.b16 %v3303
  %v3392 = vunpack.c.l.b16 %v3304
  %v3393 = vunpack.c.h.b16 %v3304
  %v3394 = vunpack.c.l.b16 %v3305
  %v3395 = vunpack.c.h.b16 %v3305
  %v3396 = vunpack.c.l.b16 %v3306
  %v3397 = vunpack.c.h.b16 %v3306
  %v3398 = vunpack.c.l.b16 %v3307
  %v3399 = vunpack.c.h.b16 %v3307
  %v3400 = vunpack.c.l.b16 %v3308
  %v3401 = vunpack.c.h.b16 %v3308
  %v3402 = vunpack.c.l.b16 %v3309
  %v3403 = vunpack.c.h.b16 %v3309
  %v3404 = vunpack.c.l.b16 %v3310
  %v3405 = vunpack.c.h.b16 %v3310
  %v3406 = vunpack.c.l.b16 %v3311
  %v3407 = vunpack.c.h.b16 %v3311
  %v3408 = vpack.c.b16 %v3346, %v3344
  %v3409 = vpack.c.b16 %v3347, %v3345
  %v3410 = vpack.c.b16 %v3350, %v3348
  %v3411 = vpack.c.b16 %v3351, %v3349
  %v3412 = vpack.c.b16 %v3354, %v3352
  %v3413 = vpack.c.b16 %v3355, %v3353
  %v3414 = vpack.c.b16 %v3358, %v3356
  %v3415 = vpack.c.b16 %v3359, %v3357
  %v3416 = vpack.c.b16 %v3362, %v3360
  %v3417 = vpack.c.b16 %v3363, %v3361
  %v3418 = vpack.c.b16 %v3366, %v3364
  %v3419 = vpack.c.b16 %v3367, %v3365
  %v3420 = vpack.c.b16 %v3370, %v3368
  %v3421 = vpack.c.b16 %v3371, %v3369
  %v3422 = vpack.c.b16 %v3374, %v3372
  %v3423 = vpack.c.b16 %v3375, %v3373
  %v3424 = vpack.c.b16 %v3378, %v3376
  %v3425 = vpack.c.b16 %v3379, %v3377
  %v3426 = vpack.c.b16 %v3382, %v3380
  %v3427 = vpack.c.b16 %v3383, %v3381
  %v3428 = vpack.c.b16 %v3386, %v3384
  %v3429 = vpack.c.b16 %v3387, %v3385
  %v3430 = vpack.c.b16 %v3390, %v3388
  %v3431 = vpack.c.b16 %v3391, %v3389
  %v3432 = vpack.c.b16 %v3394, %v3392
  %v3433 = vpack.c.b16 %v3395, %v3393
  %v3434 = vpack.c.b16 %v3398, %v3396
  %v3435 = vpack.c.b16 %v3399, %v3397
  %v3436 = vpack.c.b16 %v3402, %v3400
  %v3437 = vpack.c.b16 %v3403, %v3401
  %v3438 = vpack.c.b16 %v3406, %v3404
  %v3439 = vpack.c.b16 %v3407, %v3405
  %3472 = vmatpush.bf16.msra.mxu0 %v3422
  %3473 = vmatpush.bf16.msra.mxu0 %v3420
  %3474 = vmatpush.bf16.msra.mxu0 %v3418
  %3475 = vmatpush.bf16.msra.mxu0 %v3416
  %3476 = vmatpush.bf16.msra.mxu0 %v3414
  %3477 = vmatpush.bf16.msra.mxu0 %v3412
  %3478 = vmatpush.bf16.msra.mxu0 %v3410
  %3479 = vmatpush.bf16.msra.mxu0 %v3408
  %3480 = vmatmul.f32.gmra.mxu0 %v3269
  %v3481 = vpop.f32.mrf.mxu0
  %v3482 = vadd.f32 0.0, %v3481
  %3483 = vmatmul.f32.gmra.mxu0 %v3271
  %v3484 = vpop.f32.mrf.mxu0
  %v3485 = vadd.f32 0.0, %v3484
  %3486 = vmatmul.f32.gmra.mxu0 %v3273
  %v3487 = vpop.f32.mrf.mxu0
  %v3488 = vadd.f32 0.0, %v3487
  %3489 = vmatmul.f32.gmra.mxu0 %v3275
  %v3490 = vpop.f32.mrf.mxu0
  %v3491 = vadd.f32 0.0, %v3490
  %3492 = vdwg.mxu0
  %3493 = vmatpush.bf16.msra.mxu0 %v3438
  %3494 = vmatpush.bf16.msra.mxu0 %v3436
  %3495 = vmatpush.bf16.msra.mxu0 %v3434
  %3496 = vmatpush.bf16.msra.mxu0 %v3432
  %3497 = vmatpush.bf16.msra.mxu0 %v3430
  %3498 = vmatpush.bf16.msra.mxu0 %v3428
  %3499 = vmatpush.bf16.msra.mxu0 %v3426
  %3500 = vmatpush.bf16.msra.mxu0 %v3424
  %3501 = vmatmul.f32.gmra.mxu0 %v3270
  %v3502 = vpop.f32.mrf.mxu0
  %v3503 = vadd.f32 %v3482, %v3502
  %3504 = vmatmul.f32.gmra.mxu0 %v3272
  %v3505 = vpop.f32.mrf.mxu0
  %v3506 = vadd.f32 %v3485, %v3505
  %3507 = vmatmul.f32.gmra.mxu0 %v3274
  %v3508 = vpop.f32.mrf.mxu0
  %v3509 = vadd.f32 %v3488, %v3508
  %3510 = vmatmul.f32.gmra.mxu0 %v3276
  %v3511 = vpop.f32.mrf.mxu0
  %v3512 = vadd.f32 %v3491, %v3511
  %3513 = vdwg.mxu0
  %3514 = vmatpush.bf16.msra.mxu0 %v3423
  %3515 = vmatpush.bf16.msra.mxu0 %v3421
  %3516 = vmatpush.bf16.msra.mxu0 %v3419
  %3517 = vmatpush.bf16.msra.mxu0 %v3417
  %3518 = vmatpush.bf16.msra.mxu0 %v3415
  %3519 = vmatpush.bf16.msra.mxu0 %v3413
  %3520 = vmatpush.bf16.msra.mxu0 %v3411
  %3521 = vmatpush.bf16.msra.mxu0 %v3409
  %3522 = vmatmul.f32.gmra.mxu0 %v3269
  %v3523 = vpop.f32.mrf.mxu0
  %v3524 = vadd.f32 0.0, %v3523
  %3525 = vmatmul.f32.gmra.mxu0 %v3271
  %v3526 = vpop.f32.mrf.mxu0
  %v3527 = vadd.f32 0.0, %v3526
  %3528 = vmatmul.f32.gmra.mxu0 %v3273
  %v3529 = vpop.f32.mrf.mxu0
  %v3530 = vadd.f32 0.0, %v3529
  %3531 = vmatmul.f32.gmra.mxu0 %v3275
  %v3532 = vpop.f32.mrf.mxu0
  %v3533 = vadd.f32 0.0, %v3532
  %3534 = vdwg.mxu0
  %3535 = vmatpush.bf16.msra.mxu0 %v3439
  %3536 = vmatpush.bf16.msra.mxu0 %v3437
  %3537 = vmatpush.bf16.msra.mxu0 %v3435
  %3538 = vmatpush.bf16.msra.mxu0 %v3433
  %3539 = vmatpush.bf16.msra.mxu0 %v3431
  %3540 = vmatpush.bf16.msra.mxu0 %v3429
  %3541 = vmatpush.bf16.msra.mxu0 %v3427
  %3542 = vmatpush.bf16.msra.mxu0 %v3425
  %3543 = vmatmul.f32.gmra.mxu0 %v3270
  %v3544 = vpop.f32.mrf.mxu0
  %v3545 = vadd.f32 %v3524, %v3544
  %3546 = vmatmul.f32.gmra.mxu0 %v3272
  %v3547 = vpop.f32.mrf.mxu0
  %v3548 = vadd.f32 %v3527, %v3547
  %3549 = vmatmul.f32.gmra.mxu0 %v3274
  %v3550 = vpop.f32.mrf.mxu0
  %v3551 = vadd.f32 %v3530, %v3550
  %3552 = vmatmul.f32.gmra.mxu0 %v3276
  %v3553 = vpop.f32.mrf.mxu0
  %v3554 = vadd.f32 %v3533, %v3553
  %3555 = vdwg.mxu0
  %v3556 = vadd.f32 %v3258, %v3503
  %v3557 = vadd.f32 %v3259, %v3545
  %v3558 = vadd.f32 %v3260, %v3506
  %v3559 = vadd.f32 %v3261, %v3548
  %v3560 = vadd.f32 %v3262, %v3509
  %v3561 = vadd.f32 %v3263, %v3551
  %v3562 = vadd.f32 %v3264, %v3512
  %v3563 = vadd.f32 %v3265, %v3554
  %3564 = vst [vmem:[#allocation3] sm:$0xff] %v3556
  %3565 = vst [vmem:[#allocation3 + $0x8] sm:$0xff] %v3557
  %3566 = vst [vmem:[#allocation3 + $0x10] sm:$0xff] %v3558
  %3567 = vst [vmem:[#allocation3 + $0x18] sm:$0xff] %v3559
  %3568 = vst [vmem:[#allocation3 + $0x20] sm:$0xff] %v3560
  %3569 = vst [vmem:[#allocation3 + $0x28] sm:$0xff] %v3561
  %3570 = vst [vmem:[#allocation3 + $0x30] sm:$0xff] %v3562
  %3571 = vst [vmem:[#allocation3 + $0x38] sm:$0xff] %v3563
  %v3572 = vld [vmem:[#allocation3] sm:$0xff]
  %v3573 = vld [vmem:[#allocation3 + $0x8] sm:$0xff]
  %v3574 = vld [vmem:[#allocation3 + $0x10] sm:$0xff]
  %v3575 = vld [vmem:[#allocation3 + $0x18] sm:$0xff]
  %v3576 = vld [vmem:[#allocation3 + $0x20] sm:$0xff]
  %v3577 = vld [vmem:[#allocation3 + $0x28] sm:$0xff]
  %v3578 = vld [vmem:[#allocation3 + $0x30] sm:$0xff]
  %v3579 = vld [vmem:[#allocation3 + $0x38] sm:$0xff]
  %s3580 = smul.u32 32, 2
  %s3581 = smul.addr %s3580, 8
  %s3582 = scalar_lea.vmem [#allocation2], %s3581
  %v3583 = vld [vmem:[%s3582] sm:$0xff]
  %v3584 = vld [vmem:[%s3582 + $0x8] sm:$0xff]
  %v3585 = vld [vmem:[%s3582 + $0x10] sm:$0xff]
  %v3586 = vld [vmem:[%s3582 + $0x18] sm:$0xff]
  %v3587 = vld [vmem:[%s3582 + $0x20] sm:$0xff]
  %v3588 = vld [vmem:[%s3582 + $0x28] sm:$0xff]
  %v3589 = vld [vmem:[%s3582 + $0x30] sm:$0xff]
  %v3590 = vld [vmem:[%s3582 + $0x38] sm:$0xff]
  %s3591 = smul.u32 256, 2
  %s3592 = smul.addr %s3591, 4
  %s3593 = scalar_lea.vmem %s12, %s3592
  %v3594 = vld [vmem:[%s3593] sm:$0xff]
  %v3595 = vld [vmem:[%s3593 + $0x8] sm:$0xff]
  %v3596 = vld [vmem:[%s3593 + $0x10] sm:$0xff]
  %v3597 = vld [vmem:[%s3593 + $0x18] sm:$0xff]
  %v3598 = vld [vmem:[%s3593 + $0x20] sm:$0xff]
  %v3599 = vld [vmem:[%s3593 + $0x28] sm:$0xff]
  %v3600 = vld [vmem:[%s3593 + $0x30] sm:$0xff]
  %v3601 = vld [vmem:[%s3593 + $0x38] sm:$0xff]
  %v3602 = vld [vmem:[%s3593 + $0x40] sm:$0xff]
  %v3603 = vld [vmem:[%s3593 + $0x48] sm:$0xff]
  %v3604 = vld [vmem:[%s3593 + $0x50] sm:$0xff]
  %v3605 = vld [vmem:[%s3593 + $0x58] sm:$0xff]
  %v3606 = vld [vmem:[%s3593 + $0x60] sm:$0xff]
  %v3607 = vld [vmem:[%s3593 + $0x68] sm:$0xff]
  %v3608 = vld [vmem:[%s3593 + $0x70] sm:$0xff]
  %v3609 = vld [vmem:[%s3593 + $0x78] sm:$0xff]
  %v3610 = vld [vmem:[%s3593 + $0x80] sm:$0xff]
  %v3611 = vld [vmem:[%s3593 + $0x88] sm:$0xff]
  %v3612 = vld [vmem:[%s3593 + $0x90] sm:$0xff]
  %v3613 = vld [vmem:[%s3593 + $0x98] sm:$0xff]
  %v3614 = vld [vmem:[%s3593 + $0xa0] sm:$0xff]
  %v3615 = vld [vmem:[%s3593 + $0xa8] sm:$0xff]
  %v3616 = vld [vmem:[%s3593 + $0xb0] sm:$0xff]
  %v3617 = vld [vmem:[%s3593 + $0xb8] sm:$0xff]
  %v3618 = vld [vmem:[%s3593 + $0xc0] sm:$0xff]
  %v3619 = vld [vmem:[%s3593 + $0xc8] sm:$0xff]
  %v3620 = vld [vmem:[%s3593 + $0xd0] sm:$0xff]
  %v3621 = vld [vmem:[%s3593 + $0xd8] sm:$0xff]
  %v3622 = vld [vmem:[%s3593 + $0xe0] sm:$0xff]
  %v3623 = vld [vmem:[%s3593 + $0xe8] sm:$0xff]
  %v3624 = vld [vmem:[%s3593 + $0xf0] sm:$0xff]
  %v3625 = vld [vmem:[%s3593 + $0xf8] sm:$0xff]
  %v3658 = vunpack.c.l.b16 %v3594
  %v3659 = vunpack.c.h.b16 %v3594
  %v3660 = vunpack.c.l.b16 %v3595
  %v3661 = vunpack.c.h.b16 %v3595
  %v3662 = vunpack.c.l.b16 %v3596
  %v3663 = vunpack.c.h.b16 %v3596
  %v3664 = vunpack.c.l.b16 %v3597
  %v3665 = vunpack.c.h.b16 %v3597
  %v3666 = vunpack.c.l.b16 %v3598
  %v3667 = vunpack.c.h.b16 %v3598
  %v3668 = vunpack.c.l.b16 %v3599
  %v3669 = vunpack.c.h.b16 %v3599
  %v3670 = vunpack.c.l.b16 %v3600
  %v3671 = vunpack.c.h.b16 %v3600
  %v3672 = vunpack.c.l.b16 %v3601
  %v3673 = vunpack.c.h.b16 %v3601
  %v3674 = vunpack.c.l.b16 %v3602
  %v3675 = vunpack.c.h.b16 %v3602
  %v3676 = vunpack.c.l.b16 %v3603
  %v3677 = vunpack.c.h.b16 %v3603
  %v3678 = vunpack.c.l.b16 %v3604
  %v3679 = vunpack.c.h.b16 %v3604
  %v3680 = vunpack.c.l.b16 %v3605
  %v3681 = vunpack.c.h.b16 %v3605
  %v3682 = vunpack.c.l.b16 %v3606
  %v3683 = vunpack.c.h.b16 %v3606
  %v3684 = vunpack.c.l.b16 %v3607
  %v3685 = vunpack.c.h.b16 %v3607
  %v3686 = vunpack.c.l.b16 %v3608
  %v3687 = vunpack.c.h.b16 %v3608
  %v3688 = vunpack.c.l.b16 %v3609
  %v3689 = vunpack.c.h.b16 %v3609
  %v3690 = vunpack.c.l.b16 %v3610
  %v3691 = vunpack.c.h.b16 %v3610
  %v3692 = vunpack.c.l.b16 %v3611
  %v3693 = vunpack.c.h.b16 %v3611
  %v3694 = vunpack.c.l.b16 %v3612
  %v3695 = vunpack.c.h.b16 %v3612
  %v3696 = vunpack.c.l.b16 %v3613
  %v3697 = vunpack.c.h.b16 %v3613
  %v3698 = vunpack.c.l.b16 %v3614
  %v3699 = vunpack.c.h.b16 %v3614
  %v3700 = vunpack.c.l.b16 %v3615
  %v3701 = vunpack.c.h.b16 %v3615
  %v3702 = vunpack.c.l.b16 %v3616
  %v3703 = vunpack.c.h.b16 %v3616
  %v3704 = vunpack.c.l.b16 %v3617
  %v3705 = vunpack.c.h.b16 %v3617
  %v3706 = vunpack.c.l.b16 %v3618
  %v3707 = vunpack.c.h.b16 %v3618
  %v3708 = vunpack.c.l.b16 %v3619
  %v3709 = vunpack.c.h.b16 %v3619
  %v3710 = vunpack.c.l.b16 %v3620
  %v3711 = vunpack.c.h.b16 %v3620
  %v3712 = vunpack.c.l.b16 %v3621
  %v3713 = vunpack.c.h.b16 %v3621
  %v3714 = vunpack.c.l.b16 %v3622
  %v3715 = vunpack.c.h.b16 %v3622
  %v3716 = vunpack.c.l.b16 %v3623
  %v3717 = vunpack.c.h.b16 %v3623
  %v3718 = vunpack.c.l.b16 %v3624
  %v3719 = vunpack.c.h.b16 %v3624
  %v3720 = vunpack.c.l.b16 %v3625
  %v3721 = vunpack.c.h.b16 %v3625
  %v3722 = vpack.c.b16 %v3660, %v3658
  %v3723 = vpack.c.b16 %v3661, %v3659
  %v3724 = vpack.c.b16 %v3664, %v3662
  %v3725 = vpack.c.b16 %v3665, %v3663
  %v3726 = vpack.c.b16 %v3668, %v3666
  %v3727 = vpack.c.b16 %v3669, %v3667
  %v3728 = vpack.c.b16 %v3672, %v3670
  %v3729 = vpack.c.b16 %v3673, %v3671
  %v3730 = vpack.c.b16 %v3676, %v3674
  %v3731 = vpack.c.b16 %v3677, %v3675
  %v3732 = vpack.c.b16 %v3680, %v3678
  %v3733 = vpack.c.b16 %v3681, %v3679
  %v3734 = vpack.c.b16 %v3684, %v3682
  %v3735 = vpack.c.b16 %v3685, %v3683
  %v3736 = vpack.c.b16 %v3688, %v3686
  %v3737 = vpack.c.b16 %v3689, %v3687
  %v3738 = vpack.c.b16 %v3692, %v3690
  %v3739 = vpack.c.b16 %v3693, %v3691
  %v3740 = vpack.c.b16 %v3696, %v3694
  %v3741 = vpack.c.b16 %v3697, %v3695
  %v3742 = vpack.c.b16 %v3700, %v3698
  %v3743 = vpack.c.b16 %v3701, %v3699
  %v3744 = vpack.c.b16 %v3704, %v3702
  %v3745 = vpack.c.b16 %v3705, %v3703
  %v3746 = vpack.c.b16 %v3708, %v3706
  %v3747 = vpack.c.b16 %v3709, %v3707
  %v3748 = vpack.c.b16 %v3712, %v3710
  %v3749 = vpack.c.b16 %v3713, %v3711
  %v3750 = vpack.c.b16 %v3716, %v3714
  %v3751 = vpack.c.b16 %v3717, %v3715
  %v3752 = vpack.c.b16 %v3720, %v3718
  %v3753 = vpack.c.b16 %v3721, %v3719
  %3786 = vmatpush.bf16.msra.mxu0 %v3736
  %3787 = vmatpush.bf16.msra.mxu0 %v3734
  %3788 = vmatpush.bf16.msra.mxu0 %v3732
  %3789 = vmatpush.bf16.msra.mxu0 %v3730
  %3790 = vmatpush.bf16.msra.mxu0 %v3728
  %3791 = vmatpush.bf16.msra.mxu0 %v3726
  %3792 = vmatpush.bf16.msra.mxu0 %v3724
  %3793 = vmatpush.bf16.msra.mxu0 %v3722
  %3794 = vmatmul.f32.gmra.mxu0 %v3583
  %v3795 = vpop.f32.mrf.mxu0
  %v3796 = vadd.f32 0.0, %v3795
  %3797 = vmatmul.f32.gmra.mxu0 %v3585
  %v3798 = vpop.f32.mrf.mxu0
  %v3799 = vadd.f32 0.0, %v3798
  %3800 = vmatmul.f32.gmra.mxu0 %v3587
  %v3801 = vpop.f32.mrf.mxu0
  %v3802 = vadd.f32 0.0, %v3801
  %3803 = vmatmul.f32.gmra.mxu0 %v3589
  %v3804 = vpop.f32.mrf.mxu0
  %v3805 = vadd.f32 0.0, %v3804
  %3806 = vdwg.mxu0
  %3807 = vmatpush.bf16.msra.mxu0 %v3752
  %3808 = vmatpush.bf16.msra.mxu0 %v3750
  %3809 = vmatpush.bf16.msra.mxu0 %v3748
  %3810 = vmatpush.bf16.msra.mxu0 %v3746
  %3811 = vmatpush.bf16.msra.mxu0 %v3744
  %3812 = vmatpush.bf16.msra.mxu0 %v3742
  %3813 = vmatpush.bf16.msra.mxu0 %v3740
  %3814 = vmatpush.bf16.msra.mxu0 %v3738
  %3815 = vmatmul.f32.gmra.mxu0 %v3584
  %v3816 = vpop.f32.mrf.mxu0
  %v3817 = vadd.f32 %v3796, %v3816
  %3818 = vmatmul.f32.gmra.mxu0 %v3586
  %v3819 = vpop.f32.mrf.mxu0
  %v3820 = vadd.f32 %v3799, %v3819
  %3821 = vmatmul.f32.gmra.mxu0 %v3588
  %v3822 = vpop.f32.mrf.mxu0
  %v3823 = vadd.f32 %v3802, %v3822
  %3824 = vmatmul.f32.gmra.mxu0 %v3590
  %v3825 = vpop.f32.mrf.mxu0
  %v3826 = vadd.f32 %v3805, %v3825
  %3827 = vdwg.mxu0
  %3828 = vmatpush.bf16.msra.mxu0 %v3737
  %3829 = vmatpush.bf16.msra.mxu0 %v3735
  %3830 = vmatpush.bf16.msra.mxu0 %v3733
  %3831 = vmatpush.bf16.msra.mxu0 %v3731
  %3832 = vmatpush.bf16.msra.mxu0 %v3729
  %3833 = vmatpush.bf16.msra.mxu0 %v3727
  %3834 = vmatpush.bf16.msra.mxu0 %v3725
  %3835 = vmatpush.bf16.msra.mxu0 %v3723
  %3836 = vmatmul.f32.gmra.mxu0 %v3583
  %v3837 = vpop.f32.mrf.mxu0
  %v3838 = vadd.f32 0.0, %v3837
  %3839 = vmatmul.f32.gmra.mxu0 %v3585
  %v3840 = vpop.f32.mrf.mxu0
  %v3841 = vadd.f32 0.0, %v3840
  %3842 = vmatmul.f32.gmra.mxu0 %v3587
  %v3843 = vpop.f32.mrf.mxu0
  %v3844 = vadd.f32 0.0, %v3843
  %3845 = vmatmul.f32.gmra.mxu0 %v3589
  %v3846 = vpop.f32.mrf.mxu0
  %v3847 = vadd.f32 0.0, %v3846
  %3848 = vdwg.mxu0
  %3849 = vmatpush.bf16.msra.mxu0 %v3753
  %3850 = vmatpush.bf16.msra.mxu0 %v3751
  %3851 = vmatpush.bf16.msra.mxu0 %v3749
  %3852 = vmatpush.bf16.msra.mxu0 %v3747
  %3853 = vmatpush.bf16.msra.mxu0 %v3745
  %3854 = vmatpush.bf16.msra.mxu0 %v3743
  %3855 = vmatpush.bf16.msra.mxu0 %v3741
  %3856 = vmatpush.bf16.msra.mxu0 %v3739
  %3857 = vmatmul.f32.gmra.mxu0 %v3584
  %v3858 = vpop.f32.mrf.mxu0
  %v3859 = vadd.f32 %v3838, %v3858
  %3860 = vmatmul.f32.gmra.mxu0 %v3586
  %v3861 = vpop.f32.mrf.mxu0
  %v3862 = vadd.f32 %v3841, %v3861
  %3863 = vmatmul.f32.gmra.mxu0 %v3588
  %v3864 = vpop.f32.mrf.mxu0
  %v3865 = vadd.f32 %v3844, %v3864
  %3866 = vmatmul.f32.gmra.mxu0 %v3590
  %v3867 = vpop.f32.mrf.mxu0
  %v3868 = vadd.f32 %v3847, %v3867
  %3869 = vdwg.mxu0
  %v3870 = vadd.f32 %v3572, %v3817
  %v3871 = vadd.f32 %v3573, %v3859
  %v3872 = vadd.f32 %v3574, %v3820
  %v3873 = vadd.f32 %v3575, %v3862
  %v3874 = vadd.f32 %v3576, %v3823
  %v3875 = vadd.f32 %v3577, %v3865
  %v3876 = vadd.f32 %v3578, %v3826
  %v3877 = vadd.f32 %v3579, %v3868
  %3878 = vst [vmem:[#allocation3] sm:$0xff] %v3870
  %3879 = vst [vmem:[#allocation3 + $0x8] sm:$0xff] %v3871
  %3880 = vst [vmem:[#allocation3 + $0x10] sm:$0xff] %v3872
  %3881 = vst [vmem:[#allocation3 + $0x18] sm:$0xff] %v3873
  %3882 = vst [vmem:[#allocation3 + $0x20] sm:$0xff] %v3874
  %3883 = vst [vmem:[#allocation3 + $0x28] sm:$0xff] %v3875
  %3884 = vst [vmem:[#allocation3 + $0x30] sm:$0xff] %v3876
  %3885 = vst [vmem:[#allocation3 + $0x38] sm:$0xff] %v3877
  %v3886 = vld [vmem:[#allocation3] sm:$0xff]
  %v3887 = vld [vmem:[#allocation3 + $0x8] sm:$0xff]
  %v3888 = vld [vmem:[#allocation3 + $0x10] sm:$0xff]
  %v3889 = vld [vmem:[#allocation3 + $0x18] sm:$0xff]
  %v3890 = vld [vmem:[#allocation3 + $0x20] sm:$0xff]
  %v3891 = vld [vmem:[#allocation3 + $0x28] sm:$0xff]
  %v3892 = vld [vmem:[#allocation3 + $0x30] sm:$0xff]
  %v3893 = vld [vmem:[#allocation3 + $0x38] sm:$0xff]
  %v3894 = vld [vmem:[%s13] sm:$0x3]
  %v3896 = vperm.slane %v3894, 0
  %v3897 = vperm.slane %v3894, 1
  %v3900 = vadd.f32 %v3886, %v3896
  %v3901 = vadd.f32 %v3887, %v3897
  %v3902 = vadd.f32 %v3888, %v3896
  %v3903 = vadd.f32 %v3889, %v3897
  %v3904 = vadd.f32 %v3890, %v3896
  %v3905 = vadd.f32 %v3891, %v3897
  %v3906 = vadd.f32 %v3892, %v3896
  %v3907 = vadd.f32 %v3893, %v3897
  %v3908 = vmax.f32 %v3900, 0.0
  %v3909 = vmax.f32 %v3901, 0.0
  %v3910 = vmax.f32 %v3902, 0.0
  %v3911 = vmax.f32 %v3903, 0.0
  %v3912 = vmax.f32 %v3904, 0.0
  %v3913 = vmax.f32 %v3905, 0.0
  %v3914 = vmax.f32 %v3906, 0.0
  %v3915 = vmax.f32 %v3907, 0.0
  %v3916 = vld [vmem:[%s2] sm:$0x3]
  %3921 = vrot.lane.b32.xlu0 %v563, 120
  %v3922 = vpop.permute.xlu0 %3921
  %3923 = vrot.lane.b32.xlu0 %v566, 120
  %v3924 = vpop.permute.xlu0 %3923
  %3925 = vrot.lane.b32.xlu0 %v569, 120
  %v3926 = vpop.permute.xlu0 %3925
  %3927 = vrot.lane.b32.xlu0 %v572, 120
  %v3928 = vpop.permute.xlu0 %3927
  %v3934 = vsel %vm498, %v3916, 0
  %3936 = vmatpush.msra.mxu0 0.0
  %3937 = vmatpush.msra.mxu0 0.0
  %3938 = vmatpush.msra.mxu0 0.0
  %3939 = vmatpush.msra.mxu0 0.0
  %3940 = vmatpush.msra.mxu0 0.0
  %3941 = vmatpush.msra.mxu0 0.0
  %3942 = vmatpush.msra.mxu0 0.0
  %3943 = vmatpush.msra.mxu0 0.0
  %3944 = vmatpush.msra.mxu0 0.0
  %3945 = vmatpush.msra.mxu0 0.0
  %3946 = vmatpush.msra.mxu0 0.0
  %3947 = vmatpush.msra.mxu0 0.0
  %3948 = vmatpush.msra.mxu0 %v3914
  %3949 = vmatpush.msra.mxu0 %v3912
  %3950 = vmatpush.msra.mxu0 %v3910
  %3951 = vmatpush.msra.mxu0 %v3908
  %3952 = vmatmul.f32.gmra.mxu0 %v3934
  %v3953 = vpop.f32.mrf.mxu0
  %v3954 = vadd.f32 0.0, %v3953
  %3955 = vdwg.mxu0
  %3956 = vmatpush.msra.mxu0 0.0
  %3957 = vmatpush.msra.mxu0 0.0
  %3958 = vmatpush.msra.mxu0 0.0
  %3959 = vmatpush.msra.mxu0 0.0
  %3960 = vmatpush.msra.mxu0 0.0
  %3961 = vmatpush.msra.mxu0 0.0
  %3962 = vmatpush.msra.mxu0 0.0
  %3963 = vmatpush.msra.mxu0 0.0
  %3964 = vmatpush.msra.mxu0 0.0
  %3965 = vmatpush.msra.mxu0 0.0
  %3966 = vmatpush.msra.mxu0 0.0
  %3967 = vmatpush.msra.mxu0 0.0
  %3968 = vmatpush.msra.mxu0 %v3915
  %3969 = vmatpush.msra.mxu0 %v3913
  %3970 = vmatpush.msra.mxu0 %v3911
  %3971 = vmatpush.msra.mxu0 %v3909
  %3972 = vmatmul.f32.gmra.mxu0 %v3934
  %v3973 = vpop.f32.mrf.mxu0
  %v3974 = vadd.f32 0.0, %v3973
  %3975 = vdwg.mxu0
  %3976 = vmatpush.msra.mxu0 0.0
  %3977 = vmatpush.msra.mxu0 0.0
  %3978 = vmatpush.msra.mxu0 0.0
  %3979 = vmatpush.msra.mxu0 0.0
  %3980 = vmatpush.msra.mxu0 0.0
  %3981 = vmatpush.msra.mxu0 0.0
  %3982 = vmatpush.msra.mxu0 0.0
  %3983 = vmatpush.msra.mxu0 0.0
  %3984 = vmatpush.msra.mxu0 0.0
  %3985 = vmatpush.msra.mxu0 0.0
  %3986 = vmatpush.msra.mxu0 0.0
  %3987 = vmatpush.msra.mxu0 0.0
  %3988 = vmatpush.msra.mxu0 %v3928
  %3989 = vmatpush.msra.mxu0 %v3926
  %3990 = vmatpush.msra.mxu0 %v3924
  %3991 = vmatpush.msra.mxu0 %v3922
  %3992 = vmatmul.f32.gmra.mxu0 %v3934
  %v3993 = vpop.f32.mrf.mxu0
  %v3994 = vadd.f32 0.0, %v3993
  %3995 = vdwg.mxu0
  %v3996 = vld [vmem:[%s14] sm:$0xf]
  %v3997 = vld [vmem:[%s14 + $0x4] sm:$0xf]
  %v3998 = vld [vmem:[%s14 + $0x8] sm:$0xf]
  %v3999 = vld [vmem:[%s14 + $0xc] sm:$0xf]
  %v4000 = vld [vmem:[%s14 + $0x10] sm:$0xf]
  %v4001 = vld [vmem:[%s14 + $0x14] sm:$0xf]
  %v4002 = vld [vmem:[%s14 + $0x18] sm:$0xf]
  %v4003 = vld [vmem:[%s14 + $0x1c] sm:$0xf]
  %v4004 = vld [vmem:[%s14 + $0x20] sm:$0xf]
  %v4005 = vld [vmem:[%s14 + $0x24] sm:$0xf]
  %v4006 = vld [vmem:[%s14 + $0x28] sm:$0xf]
  %v4007 = vld [vmem:[%s14 + $0x2c] sm:$0xf]
  %v4008 = vld [vmem:[%s14 + $0x30] sm:$0xf]
  %v4009 = vld [vmem:[%s14 + $0x34] sm:$0xf]
  %v4010 = vld [vmem:[%s14 + $0x38] sm:$0xf]
  %v4011 = vld [vmem:[%s14 + $0x3c] sm:$0xf]
  %v4012 = vld [vmem:[%s14 + $0x40] sm:$0xf]
  %v4013 = vld [vmem:[%s14 + $0x44] sm:$0xf]
  %v4014 = vld [vmem:[%s14 + $0x48] sm:$0xf]
  %v4015 = vld [vmem:[%s14 + $0x4c] sm:$0xf]
  %v4016 = vld [vmem:[%s14 + $0x50] sm:$0xf]
  %v4017 = vld [vmem:[%s14 + $0x54] sm:$0xf]
  %v4018 = vld [vmem:[%s14 + $0x58] sm:$0xf]
  %v4019 = vld [vmem:[%s14 + $0x5c] sm:$0xf]
  %v4020 = vld [vmem:[%s14 + $0x60] sm:$0xf]
  %v4021 = vld [vmem:[%s14 + $0x64] sm:$0xf]
  %v4022 = vld [vmem:[%s14 + $0x68] sm:$0xf]
  %v4023 = vld [vmem:[%s14 + $0x6c] sm:$0xf]
  %v4024 = vld [vmem:[%s14 + $0x70] sm:$0xf]
  %v4025 = vld [vmem:[%s14 + $0x74] sm:$0xf]
  %v4026 = vld [vmem:[%s14 + $0x78] sm:$0xf]
  %v4027 = vld [vmem:[%s14 + $0x7c] sm:$0xf]
  %v4028 = vld [vmem:[%s14 + $0x80] sm:$0x1]
  %v4029 = vld [vmem:[%s15] sm:$0x1]
  %v4031 = vperm.slane %v4029, 0
  %v4066 = vunpack.c.l.b16 %v3996
  %v4067 = vunpack.c.l.b16 %v3997
  %v4068 = vunpack.c.l.b16 %v3998
  %v4069 = vunpack.c.l.b16 %v3999
  %v4070 = vunpack.c.l.b16 %v4000
  %v4071 = vunpack.c.l.b16 %v4001
  %v4072 = vunpack.c.l.b16 %v4002
  %v4073 = vunpack.c.l.b16 %v4003
  %v4074 = vunpack.c.l.b16 %v4004
  %v4075 = vunpack.c.l.b16 %v4005
  %v4076 = vunpack.c.l.b16 %v4006
  %v4077 = vunpack.c.l.b16 %v4007
  %v4078 = vunpack.c.l.b16 %v4008
  %v4079 = vunpack.c.l.b16 %v4009
  %v4080 = vunpack.c.l.b16 %v4010
  %v4081 = vunpack.c.l.b16 %v4011
  %v4082 = vunpack.c.l.b16 %v4012
  %v4083 = vunpack.c.l.b16 %v4013
  %v4084 = vunpack.c.l.b16 %v4014
  %v4085 = vunpack.c.l.b16 %v4015
  %v4086 = vunpack.c.l.b16 %v4016
  %v4087 = vunpack.c.l.b16 %v4017
  %v4088 = vunpack.c.l.b16 %v4018
  %v4089 = vunpack.c.l.b16 %v4019
  %v4090 = vunpack.c.l.b16 %v4020
  %v4091 = vunpack.c.l.b16 %v4021
  %v4092 = vunpack.c.l.b16 %v4022
  %v4093 = vunpack.c.l.b16 %v4023
  %v4094 = vunpack.c.l.b16 %v4024
  %v4095 = vunpack.c.l.b16 %v4025
  %v4096 = vunpack.c.l.b16 %v4026
  %v4097 = vunpack.c.l.b16 %v4027
  %v4098 = vunpack.c.l.b16 %v4028
  %v4099 = vpack.c.b16 %v4067, %v4066
  %v4100 = vpack.c.b16 %v4069, %v4068
  %v4101 = vpack.c.b16 %v4071, %v4070
  %v4102 = vpack.c.b16 %v4073, %v4072
  %v4103 = vpack.c.b16 %v4075, %v4074
  %v4104 = vpack.c.b16 %v4077, %v4076
  %v4105 = vpack.c.b16 %v4079, %v4078
  %v4106 = vpack.c.b16 %v4081, %v4080
  %v4107 = vpack.c.b16 %v4083, %v4082
  %v4108 = vpack.c.b16 %v4085, %v4084
  %v4109 = vpack.c.b16 %v4087, %v4086
  %v4110 = vpack.c.b16 %v4089, %v4088
  %v4111 = vpack.c.b16 %v4091, %v4090
  %v4112 = vpack.c.b16 %v4093, %v4092
  %v4113 = vpack.c.b16 %v4095, %v4094
  %v4114 = vpack.c.b16 %v4097, %v4096
  %v4115 = vpack.c.b16 %v4098, %v4098
  %vm4132 = vcmask 15360
  %v4134 = vsel %vm4132, %v3994, 0
  %vm4136 = vcmask 1040384
  %v4138 = vsel %vm4136, %v4115, 0
  %4140 = vmatpush.bf16.msra.mxu0 %v4106
  %4141 = vmatpush.bf16.msra.mxu0 %v4105
  %4142 = vmatpush.bf16.msra.mxu0 %v4104
  %4143 = vmatpush.bf16.msra.mxu0 %v4103
  %4144 = vmatpush.bf16.msra.mxu0 %v4102
  %4145 = vmatpush.bf16.msra.mxu0 %v4101
  %4146 = vmatpush.bf16.msra.mxu0 %v4100
  %4147 = vmatpush.bf16.msra.mxu0 %v4099
  %4148 = vmatmul.f32.gmra.mxu0 %v3954
  %v4149 = vpop.f32.mrf.mxu0
  %v4150 = vadd.f32 %v4031, %v4149
  %4151 = vdwg.mxu0
  %4152 = vmatpush.bf16.msra.mxu0 %v4114
  %4153 = vmatpush.bf16.msra.mxu0 %v4113
  %4154 = vmatpush.bf16.msra.mxu0 %v4112
  %4155 = vmatpush.bf16.msra.mxu0 %v4111
  %4156 = vmatpush.bf16.msra.mxu0 %v4110
  %4157 = vmatpush.bf16.msra.mxu0 %v4109
  %4158 = vmatpush.bf16.msra.mxu0 %v4108
  %4159 = vmatpush.bf16.msra.mxu0 %v4107
  %4160 = vmatmul.f32.gmra.mxu0 %v3974
  %v4161 = vpop.f32.mrf.mxu0
  %v4162 = vadd.f32 %v4150, %v4161
  %4163 = vdwg.mxu0
  %4164 = vmatpush.bf16.msra.mxu0 0
  %4165 = vmatpush.bf16.msra.mxu0 0
  %4166 = vmatpush.bf16.msra.mxu0 0
  %4167 = vmatpush.bf16.msra.mxu0 0
  %4168 = vmatpush.bf16.msra.mxu0 0
  %4169 = vmatpush.bf16.msra.mxu0 0
  %4170 = vmatpush.bf16.msra.mxu0 0
  %4171 = vmatpush.bf16.msra.mxu0 %v4138
  %4172 = vmatmul.f32.gmra.mxu0 %v4134
  %v4173 = vpop.f32.mrf.mxu0
  %v4174 = vadd.f32 %v4162, %v4173
  %4175 = vdwg.mxu0
  %v4176 = vlaneseq
  %v4177 = vand.u32 %v4176, 127
  %vm4178 = vcmp.ge.s32.totalorder %v4177, 12
  %vm4179 = vcmp.lt.s32.totalorder %v4177, 14
  %vm4180 = vmand %vm4178, %vm4179
  %v4181 = vmax.f32 %v4174, 0.0
  %v4182 = vand.u32 2147483647, %v4174
  %v4183 = vsub.f32 0.0, %v4182
  %v4184 = vmul.f32 %v4183, 1.442695
  %v4185 = vpow.pop %v4184
  %v4186 = vadd.f32 %v4185, 1.0
  %v4187 = vlog2.pop %v4186
  %v4188 = vmul.f32 %v4187, 0.6931472
  %v4189 = vmul.f32 -0.5, %v4185
  %v4190 = vadd.f32 %v4189, 1.0
  %v4191 = vmul.f32 %v4190, %v4185
  %v4192 = vand.u32 2147483647, %v4185
  %vm4193 = vcmp.lt.f32.partialorder %v4192, 0.0004427343
  %v4194 = vsel %vm4193, %v4191, %v4188
  %v4195 = vadd.f32 %v4181, %v4194
  %v4196 = vsel %vm4180, 1, 0
  %vm4197 = vcmp.eq.s32.totalorder %v4196, 1
  %v4198 = vsel %vm4197, %v4195, %v4174
  %4199 = vst [vmem:[%s18] sm:$0x3] %v4198
  // Predicated region
  $region66: #{motion_net_forward.1} parent=0 // pred_check
    _
  $region67: #{motion_net_forward.1} parent=0 // pred_check_branch
    %4201 = sbr.rel (0) target = $region69
  $region68: #{motion_net_forward.1} parent=0 // pred_region
    _
  $region69: #{motion_net_forward.1} parent=0 // pred_fallthru
    _
  // Predicated region
  $region70: #{motion_net_forward.1} parent=0 // pred_check
    _
  $region71: #{motion_net_forward.1} parent=0 // pred_check_branch
    %4203 = sbr.rel (0) target = $region73
  $region72: #{motion_net_forward.1} parent=0 // pred_region
    _
  $region73: #{motion_net_forward.1} parent=0 // pred_fallthru
    _
  // Predicated region
  $region74: #{motion_net_forward.1} parent=0 // pred_check
    _
  $region75: #{motion_net_forward.1} parent=0 // pred_check_branch
    %4205 = sbr.rel (0) target = $region77
  $region76: #{motion_net_forward.1} parent=0 // pred_region
    _
  $region77: #{motion_net_forward.1} parent=0 // pred_fallthru
    _
  // Predicated region
  $region78: #{motion_net_forward.1} parent=0 // pred_check
    _
  $region79: #{motion_net_forward.1} parent=0 // pred_check_branch
    %4207 = sbr.rel (0) target = $region81
  $region80: #{motion_net_forward.1} parent=0 // pred_region
    _
  $region81: #{motion_net_forward.1} parent=0 // pred_fallthru
    _
  // Predicated region
  $region82: #{motion_net_forward.1} parent=0 // pred_check
    _
  $region83: #{motion_net_forward.1} parent=0 // pred_check_branch
    %4209 = sbr.rel (0) target = $region85
  $region84: #{motion_net_forward.1} parent=0 // pred_region
    _
  $region85: #{motion_net_forward.1} parent=0 // pred_fallthru
    _
  // Predicated region
  $region86: #{motion_net_forward.1} parent=0 // pred_check
    _
  $region87: #{motion_net_forward.1} parent=0 // pred_check_branch
    %4211 = sbr.rel (0) target = $region89
  $region88: #{motion_net_forward.1} parent=0 // pred_region
    _
  $region89: #{motion_net_forward.1} parent=0 // pred_fallthru
    _

</llo_original>
